<compile_context>
chip_gen: v6e
topology: v6e:2x2x1
jax: 0.10.0
libtpu: 0.0.40
codegen_flags: <defaults>
</compile_context>

<pallas_src>
import functools

import jax
import jax.numpy as jnp
from jax.experimental import pallas as pl
from jax.experimental.pallas import tpu as pltpu

HW = 7 * 7  # forward() hard-codes a 7x7 feature map


def encoder_head_kernel(x_ref, w_ref, b_ref, o_ref, acc_ref, *, tk):
    # x_ref:   (TB, TK)     feature tile (backbone dtype, e.g. bf16)
    # w_ref:   (K, E_pad)   folded fc weight, whole-array VMEM resident
    # b_ref:   (1, E_pad)   fc bias (f32), VMEM resident
    # o_ref:   (TB, E_pad)  output tile (f32)
    # acc_ref: (TB, E_pad)  f32 accumulator scratch (persists across the K axis)
    k = pl.program_id(1)

    @pl.when(k == 0)
    def _init():
        acc_ref[...] = jnp.zeros_like(acc_ref)

    off = k * tk
    if tk % 128 == 0:
        off = pl.multiple_of(off, 128)
    w_tile = w_ref[pl.ds(off, tk), :]
    acc_ref[...] += jnp.dot(x_ref[...], w_tile, preferred_element_type=jnp.float32)

    @pl.when(k == pl.num_programs(1) - 1)
    def _finalize():
        # Pool is folded into the matmul (weight rows repeated 49x), so divide
        # the f32 accumulator by 49, add bias, then L2-normalize.
        out = acc_ref[...] * (1.0 / HW) + b_ref[...]
        # F.normalize(p=2, dim=-1, eps=1e-12) == x / max(||x||, 1e-12)
        ss = jnp.sum(out * out, axis=-1, keepdims=True)
        o_ref[...] = out * jax.lax.rsqrt(jnp.maximum(ss, 1e-24))


def fold_fc_params(w_fc, b_fc, *, weight_dtype=jnp.bfloat16):
    """Fold the 7x7 average pool into the fc weight.  Call ONCE at weight-load
    time (hoisted out of the per-forward path): each fc.weight row is repeated
    49x (matching the NCHW flattening order) and the output dim is padded to a
    lane-dense multiple of 128 with zero columns / zero bias, so the in-kernel
    L2 norm and the stores stay exact / unmasked."""
    C, E = w_fc.shape
    e_pad = max(128, ((E + 127) // 128) * 128)
    w_big = jnp.repeat(w_fc, HW, axis=0)                    # (C*49, E)
    w_big = jnp.pad(w_big, ((0, 0), (0, e_pad - E)))        # (C*49, E_pad)
    w_big = w_big.astype(weight_dtype)                      # bf16 on the MXU
    b_pad = jnp.pad(b_fc.astype(jnp.float32), (0, e_pad - E)).reshape(1, e_pad)
    return w_big, b_pad


def encoder_resnet_forward(feat_nchw, w_folded, b_folded, *, embed_dim,
                           batch_tile=256, k_channel_tile=128):
    """feat_nchw: (B, cnn_dim, 7, 7) backbone output (any dtype, e.g. bf16).
    w_folded, b_folded: outputs of fold_fc_params() (precomputed once).
    Returns {'embedding': (B, embed_dim)} with L2-normalized rows (float32)."""
    Bn, C, H, W = feat_nchw.shape
    assert H * W == HW, "EncoderResNet.forward assumes a 7x7 feature map"
    K = C * HW
    Kw, E_pad = w_folded.shape
    assert Kw == K and E_pad % 128 == 0 and embed_dim <= E_pad

    # Free flatten of the contiguous NCHW map: x_flat[b, c*49 + hw] = feat[b,c,h,w]
    x_flat = feat_nchw.reshape(Bn, K)

    # ---- batch tiling: >=2 tiles when possible (keeps both v7x TCs busy) ----
    if Bn > batch_tile:
        TB = batch_tile
    elif Bn % 2 == 0 and Bn // 2 >= 8:
        TB = Bn // 2
    else:
        TB = Bn
    B_pad = ((Bn + TB - 1) // TB) * TB
    if B_pad != Bn:  # zero-pad ragged batches; padded rows are sliced off below
        x_flat = jnp.pad(x_flat, ((0, B_pad - Bn), (0, 0)))
    nb = B_pad // TB

    # ---- K (reduction) tiling: TK = 49 * 128 channels' worth of columns ----
    if C % k_channel_tile == 0:
        TK = HW * k_channel_tile
    else:
        TK = K  # small / odd channel counts: single K tile (TK == full dim)
    nk = K // TK

    # ---- explicit VMEM budget: 2x feature buffers + resident weight + bias
    #      + accumulator + 2x output buffers, ~25% headroom ----
    feat_bytes = 2 * TB * TK * x_flat.dtype.itemsize
    w_bytes = K * E_pad * w_folded.dtype.itemsize
    misc_bytes = E_pad * 4 + TB * E_pad * 4 + 2 * TB * E_pad * 4
    vmem_limit = int((feat_bytes + w_bytes + misc_bytes) * 1.25) + (2 << 20)
    vmem_limit = min(max(vmem_limit, 32 << 20), 64 << 20)  # v7x physical VMEM = 64 MiB

    kernel = functools.partial(encoder_head_kernel, tk=TK)

    out = pl.pallas_call(
        kernel,
        out_shape=jax.ShapeDtypeStruct((B_pad, E_pad), jnp.float32),
        grid_spec=pltpu.PrefetchScalarGridSpec(
            num_scalar_prefetch=0,
            grid=(nb, nk),
            in_specs=[
                # features: (TB, TK) tiles, pipelined/double-buffered
                pl.BlockSpec((TB, TK), lambda i, k: (i, k)),
                # folded fc weight: single-buffered whole-array VMEM resident,
                # DMA'd once per kernel call and sliced in-kernel with pl.ds
                pl.BlockSpec(memory_space=pltpu.MemorySpace.VMEM),
                # fc bias: tiny, VMEM resident
                pl.BlockSpec(memory_space=pltpu.MemorySpace.VMEM),
            ],
            out_specs=pl.BlockSpec((TB, E_pad), lambda i, k: (i, 0)),
            scratch_shapes=[pltpu.VMEM((TB, E_pad), jnp.float32)],
        ),
        compiler_params=pltpu.CompilerParams(
            # batch axis shards across v7x's two TensorCores; K accumulates
            dimension_semantics=("parallel", "arbitrary"),
            vmem_limit_bytes=vmem_limit,
        ),
    )(x_flat, w_folded, b_folded)

    # TODO(synk): the [:Bn, :embed_dim] slice is one extra (minor) HBM pass over
    # the output; keep the padded E_pad columns downstream if acceptable.
    return {"embedding": out[:Bn, :embed_dim]}


if __name__ == "__main__":
    B = 2           # batch
    CNN_DIM = 256   # self.cnn.fc.in_features (small synthetic value)
    EMBED_DIM = 64  # embed_dim

    key = jax.random.PRNGKey(0)
    k_feat, k_w = jax.random.split(key)

    # Synthetic backbone output (bf16, same role as self.cnn(images).view(-1, cnn_dim, 7, 7))
    feat = jax.random.normal(k_feat, (B, CNN_DIM, 7, 7), dtype=jnp.float32)
    feat = feat.astype(jnp.bfloat16)

    # init_weights(): xavier_uniform_ on fc.weight, zeros on fc.bias
    bound = jnp.sqrt(6.0 / (CNN_DIM + EMBED_DIM))
    w_fc = jax.random.uniform(
        k_w, (CNN_DIM, EMBED_DIM), dtype=jnp.float32, minval=-bound, maxval=bound
    )
    b_fc = jnp.zeros((EMBED_DIM,), dtype=jnp.float32)

    # Hoisted out of the per-call path: fold the pool into the weight once.
    w_folded, b_folded = fold_fc_params(w_fc, b_fc)

    out = encoder_resnet_forward(feat, w_folded, b_folded, embed_dim=EMBED_DIM)
    emb = jax.block_until_ready(out["embedding"])

    # sanity: shape, unit-norm rows, and agreement with a pure-JAX reference
    assert emb.shape == (B, EMBED_DIM)
    norms = jnp.sqrt(jnp.sum(emb * emb, axis=-1))
    assert bool(jnp.all(jnp.abs(norms - 1.0) < 1e-3))

    pooled_ref = jnp.mean(feat.astype(jnp.float32).reshape(B, CNN_DIM, HW), axis=-1)
    out_ref = pooled_ref @ w_fc + b_fc
    emb_ref = out_ref / jnp.maximum(
        jnp.sqrt(jnp.sum(out_ref * out_ref, axis=-1, keepdims=True)), 1e-12
    )
    assert bool(jnp.all(jnp.abs(emb - emb_ref) < 5e-2))  # bf16 inputs -> loose tol

    print("KERNEL_OK")
</pallas_src>

<mosaic_0001>
module attributes {stable_mosaic.version = 11 : i64} {
  func.func @encoder_head_kernel(%arg0: i32, %arg1: i32, %arg2: memref<2x6272xbf16, #tpu.memory_space<vmem>>, %arg3: memref<12544x128xbf16, #tpu.memory_space<vmem>>, %arg4: memref<1x128xf32, #tpu.memory_space<vmem>>, %arg5: memref<2x128xf32, #tpu.memory_space<vmem>>, %arg6: memref<2x128xf32, #tpu.memory_space<vmem>>) attributes {dimension_semantics = [#tpu.dimension_semantics<parallel>, #tpu.dimension_semantics<arbitrary>], iteration_bounds = array<i64: 1, 2>, scalar_prefetch = 0 : i64, scratch_operands = 1 : i64, tpu.core_type = #tpu.core_type<tc>, window_params = [{transform_indices = @transform_0, window_bounds = array<i64: 2, 6272>}, {pipeline_mode = #tpu.pipeline_mode<synchronous>, transform_indices = @transform_1, window_bounds = array<i64: 12544, 128>}, {pipeline_mode = #tpu.pipeline_mode<synchronous>, transform_indices = @transform_2, window_bounds = array<i64: 1, 128>}, {transform_indices = @transform_3, window_bounds = array<i64: 2, 128>}]} {
    %c0_i32 = arith.constant 0 : i32
    %0 = arith.cmpi eq, %arg1, %c0_i32 : i32
    %1 = arith.extui %0 : i1 to i32
    %c0_i32_0 = arith.constant 0 : i32
    %2 = arith.cmpi ne, %1, %c0_i32_0 : i32
    scf.if %2 {
      %cst_8 = arith.constant 0.000000e+00 : f32
      %15 = vector.broadcast %cst_8 : f32 to vector<2x128xf32>
      %c0_9 = arith.constant 0 : index
      %c0_10 = arith.constant 0 : index
      %16 = vector.load %arg6[%c0_9, %c0_10] : memref<2x128xf32, #tpu.memory_space<vmem>>, vector<2x128xf32>
      tpu.vector_store %arg6[%c0_9, %c0_10], %15 {strides = array<i32>} : memref<2x128xf32, #tpu.memory_space<vmem>>, vector<2x128xf32>,
    } else {
    }
    %c6272_i32 = arith.constant 6272 : i32
    %3 = arith.muli %arg1, %c6272_i32 : i32
    %4 = tpu.assume_multiple %3, 128 : i32
    %5 = arith.index_cast %4 : i32 to index
    %c0 = arith.constant 0 : index
    %6 = vector.load %arg3[%5, %c0] : memref<12544x128xbf16, #tpu.memory_space<vmem>>, vector<6272x128xbf16>
    %c0_1 = arith.constant 0 : index
    %c0_2 = arith.constant 0 : index
    %7 = vector.load %arg6[%c0_1, %c0_2] : memref<2x128xf32, #tpu.memory_space<vmem>>, vector<2x128xf32>
    %c0_3 = arith.constant 0 : index
    %c0_4 = arith.constant 0 : index
    %8 = vector.load %arg2[%c0_3, %c0_4] : memref<2x6272xbf16, #tpu.memory_space<vmem>>, vector<2x6272xbf16>
    %cst = arith.constant dense<0.000000e+00> : vector<2x128xf32>
    %9 = tpu.matmul %8, %6, %cst {dimension_numbers = #tpu.dot_dimension_numbers<[1], [0], [0], [1], [0, 0, 1, 1], [], []>} : vector<2x6272xbf16>, vector<6272x128xbf16>, vector<2x128xf32> -> vector<2x128xf32>
    %10 = arith.addf %7, %9 : vector<2x128xf32>
    %c0_5 = arith.constant 0 : index
    %c0_6 = arith.constant 0 : index
    %11 = vector.load %arg6[%c0_5, %c0_6] : memref<2x128xf32, #tpu.memory_space<vmem>>, vector<2x128xf32>
    tpu.vector_store %arg6[%c0_5, %c0_6], %10 {strides = array<i32>} : memref<2x128xf32, #tpu.memory_space<vmem>>, vector<2x128xf32>,
    %c1_i32 = arith.constant 1 : i32
    %12 = arith.cmpi eq, %arg1, %c1_i32 : i32
    %13 = arith.extui %12 : i1 to i32
    %c0_i32_7 = arith.constant 0 : i32
    %14 = arith.cmpi ne, %13, %c0_i32_7 : i32
    scf.if %14 {
      %c0_8 = arith.constant 0 : index
      %c0_9 = arith.constant 0 : index
      %15 = vector.load %arg6[%c0_8, %c0_9] : memref<2x128xf32, #tpu.memory_space<vmem>>, vector<2x128xf32>
      %cst_10 = arith.constant 0.0204081628 : f32
      %16 = vector.broadcast %cst_10 : f32 to vector<2x128xf32>
      %17 = arith.mulf %15, %16 : vector<2x128xf32>
      %c0_11 = arith.constant 0 : index
      %c0_12 = arith.constant 0 : index
      %18 = vector.load %arg4[%c0_11, %c0_12] : memref<1x128xf32, #tpu.memory_space<vmem>>, vector<1x128xf32>
      %19 = vector.broadcast %18 : vector<1x128xf32> to vector<2x128xf32>
      %20 = arith.addf %17, %19 : vector<2x128xf32>
      %21 = arith.mulf %20, %20 : vector<2x128xf32>
      %cst_13 = arith.constant dense<0.000000e+00> : vector<2xf32>
      %22 = vector.multi_reduction <add>, %21, %cst_13 [1] : vector<2x128xf32> to vector<2xf32>
      %23 = vector.shape_cast %22 : vector<2xf32> to vector<2x1xf32>
      %cst_14 = arith.constant 1.000000e-24 : f32
      %24 = vector.broadcast %cst_14 : f32 to vector<2x1xf32>
      %25 = arith.maximumf %23, %24 : vector<2x1xf32>
      %26 = math.rsqrt %25 : vector<2x1xf32>
      %27 = vector.broadcast %26 : vector<2x1xf32> to vector<2x128xf32>
      %28 = arith.mulf %20, %27 : vector<2x128xf32>
      %c0_15 = arith.constant 0 : index
      %c0_16 = arith.constant 0 : index
      %29 = vector.load %arg5[%c0_15, %c0_16] : memref<2x128xf32, #tpu.memory_space<vmem>>, vector<2x128xf32>
      tpu.vector_store %arg5[%c0_15, %c0_16], %28 {strides = array<i32>} : memref<2x128xf32, #tpu.memory_space<vmem>>, vector<2x128xf32>,
    } else {
    }
    return
  }
  func.func @transform_0(%arg0: i32, %arg1: i32) -> (i32, i32) {
    %c0_i32 = arith.constant 0 : i32
    return %arg0, %arg1 : i32, i32
  }
  func.func @transform_1(%arg0: i32, %arg1: i32) -> (i32, i32) {
    %c0_i32 = arith.constant 0 : i32
    %c0_i32_0 = arith.constant 0 : i32
    %c0_i32_1 = arith.constant 0 : i32
    return %c0_i32, %c0_i32_0 : i32, i32
  }
  func.func @transform_2(%arg0: i32, %arg1: i32) -> (i32, i32) {
    %c0_i32 = arith.constant 0 : i32
    %c0_i32_0 = arith.constant 0 : i32
    %c0_i32_1 = arith.constant 0 : i32
    return %c0_i32, %c0_i32_0 : i32, i32
  }
  func.func @transform_3(%arg0: i32, %arg1: i32) -> (i32, i32) {
    %c0_i32 = arith.constant 0 : i32
    %c0_i32_0 = arith.constant 0 : i32
    return %arg0, %c0_i32 : i32, i32
  }
}

</mosaic_0001>

<llo_original>
// kernel: tpu_custom_call.1
$region0: #{tpu_custom_call.1}
  #allocation0 [shape = 'u32[]', space=smem, size = 0x4, offset = 0x4, fixed_abs, tag = 'smem constant byte address 0x4 - core index']
  #allocation1 [shape = 'u32[144,128]{1,0:T(1,128)}', space=vmem, size = 0x12000, scoped, tag = 'internal scratch']
  #allocation2 [shape = 'f32[2,128]{1,0:T(2,128)}', space=vmem, size = 0x400, scoped, tag = 'scratch operand']
  %s0 = inlined_call_operand.hbm [shape: bf16[2,12544], index: 0, kind: input, shape index: {}]
  %s1 = inlined_call_operand.hbm [shape: bf16[12544,128], index: 1, kind: input, shape index: {}]
  %s2 = inlined_call_operand.hbm [shape: f32[1,128], index: 2, kind: input, shape index: {}]
  %s3 = inlined_call_operand.hbm [shape: f32[2,128], index: 3, kind: output, shape index: {}]
  %s4 = sld [smem:[#allocation0]]
  $region65: #{tpu_custom_call.1} parent=0
    _
  %s6 = ssub.s32 1, %s4
  %s7 = scalar_select 0, %s6, %s4
  $region1: #{tpu_custom_call.1} parent=0
    #allocation3 [shape = 'u8[50176]{0}', space=vmem, size = 0xc400, scoped, tag = 'input window, operand 0']
    #allocation4 [shape = 's32[2]{0}', space=sflag, size = 0x8, scoped, tag = 'scoped memory for tpu_custom_call.1']
    #allocation5 [shape = 's32[2]{0}', space=sflag, size = 0x8, scoped, tag = 'scoped memory for tpu_custom_call.1']
    #allocation6 [shape = 'u8[3211264]{0}', space=vmem, size = 0x310000, scoped, tag = 'input window, operand 1, single buffered']
    #allocation7 [shape = 's32[1]{0}', space=sflag, size = 0x4, scoped, tag = 'scoped memory for tpu_custom_call.1']
    #allocation8 [shape = 'u8[512]{0}', space=vmem, size = 0x400, scoped, tag = 'input window, operand 2, single buffered']
    #allocation9 [shape = 'u8[1024]{0}', space=vmem, size = 0x400, scoped, tag = 'output window, operand 0, single buffered']
    %8 = vsyncpa [#allocation4], 0
    %s9 = scalar_lea.sflag [#allocation4], 1
    %10 = vsyncpa %s9, 0
    %11 = vsyncpa [#allocation7], 0
    %12 = vsyncpa [#allocation5], 0
    loop: start=0, step=1, limit=4
    $region2: #{tpu_custom_call.1} parent=1 // loop_pre_header
      _
    $region3: #{tpu_custom_call.1} parent=1 // loop_header
      %s14 = sphi 0, %s18
      %p15 = scmp.ge.s32.totalorder %s14, 4
      %s21 = sphi 0, %s33
      %s22 = sphi 0, %s29
      %s23 = sphi 0, %s21
      %s24 = sphi 0, %s22
      %s25 = sphi 0, %s23
      %s26 = sphi 0, %s24
      %s38 = sphi 0, %s40
      %s41 = sphi 0, %s38
      %s42 = sphi 0, %s41
      %s58 = sphi 0, %s42
      %s62 = sphi 0, %s62
      %s64 = sphi 0, %s62
      %s65 = sphi 0, %s64
      %s79 = sphi 0, %s65
      %s83 = sphi 0, %s83
      %s85 = sphi 0, %s83
      %s86 = sphi 0, %s85
      %s100 = sphi 0, %s86
      %s106 = sphi 0, %s108
      %s109 = sphi 0, %s106
      %s110 = sphi 0, %s109
      %s126 = sphi 0, %s110
    $region4: #{tpu_custom_call.1} parent=1 // loop_header_branch
      %17 = sbr.rel (%p15) target = $region8
    $region5: #{tpu_custom_call.1} parent=1 // loop_body
      %s19 = ssub.s32 %s14, 1
      %s20 = ssub.s32 %s14, 2
      %s27 = sadd.s32 1, %s22
      %p28 = scmp.ge.s32.totalorder %s27, 2
      %s29 = scalar_select %p28, 0, %s27
      %s30 = sadd.s32 1, %s21
      %s31 = scalar_select %p28, %s30, %s21
      %p32 = scmp.ge.s32.totalorder %s31, 1
      %s33 = scalar_select %p32, 0, %s31
      %s34 = ssub.s32 %s21, %s33
      %s35 = ssub.s32 %s22, %s29
      %s36 = sor.u32 %s34, %s35
      %p37 = scmp.eq.s32.totalorder %s36, 0
      %s39 = sadd.s32 %s38, 1
      %s40 = scalar_select %p37, %s38, %s39
      %p43 = pneg %p37
      %p44 = scmp.eq.s32.totalorder %s14, 1
      %p45 = por %p43, %p44
      %p46 = scmp.ne.s32.totalorder %s38, %s41
      %p47 = scmp.eq.s32.totalorder %s14, 0
      %p48 = por %p46, %p47
      %p49 = scmp.ne.s32.totalorder %s38, %s41
      %p50 = scmp.eq.s32.totalorder %s19, 1
      %p51 = por %p49, %p50
      %p52 = scmp.ne.s32.totalorder %s41, %s42
      %p53 = scmp.eq.s32.totalorder %s19, 0
      %p54 = por %p52, %p53
      %p55 = scmp.ne.s32.totalorder %s41, %s42
      %p56 = scmp.eq.s32.totalorder %s20, 1
      %p57 = por %p55, %p56
      %p59 = scmp.ne.s32.totalorder %s42, %s58
      %p60 = scmp.eq.s32.totalorder %s20, 0
      %p61 = por %p59, %p60
      %s63 = sadd.s32 %s62, 1
      %p66 = scmp.eq.s32.totalorder %s14, 1
      %p67 = scmp.ne.s32.totalorder %s62, %s64
      %p68 = scmp.eq.s32.totalorder %s14, 0
      %p69 = por %p67, %p68
      %p70 = scmp.ne.s32.totalorder %s62, %s64
      %p71 = scmp.eq.s32.totalorder %s19, 1
      %p72 = por %p70, %p71
      %p73 = scmp.ne.s32.totalorder %s64, %s65
      %p74 = scmp.eq.s32.totalorder %s19, 0
      %p75 = por %p73, %p74
      %p76 = scmp.ne.s32.totalorder %s64, %s65
      %p77 = scmp.eq.s32.totalorder %s20, 1
      %p78 = por %p76, %p77
      %p80 = scmp.ne.s32.totalorder %s65, %s79
      %p81 = scmp.eq.s32.totalorder %s20, 0
      %p82 = por %p80, %p81
      %s84 = sadd.s32 %s83, 1
      %p87 = scmp.eq.s32.totalorder %s14, 1
      %p88 = scmp.ne.s32.totalorder %s83, %s85
      %p89 = scmp.eq.s32.totalorder %s14, 0
      %p90 = por %p88, %p89
      %p91 = scmp.ne.s32.totalorder %s83, %s85
      %p92 = scmp.eq.s32.totalorder %s19, 1
      %p93 = por %p91, %p92
      %p94 = scmp.ne.s32.totalorder %s85, %s86
      %p95 = scmp.eq.s32.totalorder %s19, 0
      %p96 = por %p94, %p95
      %p97 = scmp.ne.s32.totalorder %s85, %s86
      %p98 = scmp.eq.s32.totalorder %s20, 1
      %p99 = por %p97, %p98
      %p101 = scmp.ne.s32.totalorder %s86, %s100
      %p102 = scmp.eq.s32.totalorder %s20, 0
      %p103 = por %p101, %p102
      %s104 = ssub.s32 %s21, %s33
      %p105 = scmp.eq.s32.totalorder %s104, 0
      %s107 = sadd.s32 %s106, 1
      %s108 = scalar_select %p105, %s106, %s107
      %p111 = pneg %p105
      %p112 = scmp.eq.s32.totalorder %s14, 1
      %p113 = por %p111, %p112
      %p114 = scmp.ne.s32.totalorder %s106, %s109
      %p115 = scmp.eq.s32.totalorder %s14, 0
      %p116 = por %p114, %p115
      %p117 = scmp.ne.s32.totalorder %s106, %s109
      %p118 = scmp.eq.s32.totalorder %s19, 1
      %p119 = por %p117, %p118
      %p120 = scmp.ne.s32.totalorder %s109, %s110
      %p121 = scmp.eq.s32.totalorder %s19, 0
      %p122 = por %p120, %p121
      %p123 = scmp.ne.s32.totalorder %s109, %s110
      %p124 = scmp.eq.s32.totalorder %s20, 1
      %p125 = por %p123, %p124
      %p127 = scmp.ne.s32.totalorder %s110, %s126
      %p128 = scmp.eq.s32.totalorder %s20, 0
      %p129 = por %p127, %p128
      %p130 = scmp.le.s32.totalorder 1, %s14
      %p131 = scmp.lt.s32.totalorder %s14, 3
      %p132 = pnand %p130, %p131
      %p133 = pneg %p132
      // Predicated region
      $region9: #{tpu_custom_call.1} parent=5 // pred_check
        _
      $region10: #{tpu_custom_call.1} parent=5 // pred_check_branch
        %135 = sbr.rel (%p132) target = $region12
      $region11: #{tpu_custom_call.1} parent=5 // pred_region
        %s136 = ssub.s32 %s14, 1
        // Predicated region
        $region13: #{tpu_custom_call.1} parent=11 // pred_check
          %p137 = pneg %p75
        $region14: #{tpu_custom_call.1} parent=11 // pred_check_branch
          %139 = sbr.rel (%p137) target = $region16
        $region15: #{tpu_custom_call.1} parent=11 // pred_region
          %s141 = ssub.s32 100352, 100352
          %142 = vsyncadd [#allocation7], %s141
          %s143 = sshll.u32 [#allocation6], 4
          %s144 = int_to_ptr.vmem [resolvable:$true] %s143
          %149 = dma.hbm_to_vmem [thread:$0]  %s1, 100352, %s144, [#allocation7], 64, 64, 4
        $region16: #{tpu_custom_call.1} parent=11 // pred_fallthru
          _
        // Predicated region
        $region17: #{tpu_custom_call.1} parent=11 // pred_check
          %p150 = pneg %p96
        $region18: #{tpu_custom_call.1} parent=11 // pred_check_branch
          %152 = sbr.rel (%p150) target = $region20
        $region19: #{tpu_custom_call.1} parent=11 // pred_region
          %s154 = ssub.s32 16, 16
          %155 = vsyncadd [#allocation7], %s154
          %s157 = sshll.u32 [#allocation8], 4
          %s158 = int_to_ptr.vmem [resolvable:$true] %s157
          %160 = dma.hbm_to_vmem [thread:$0]  %s2, 16, %s158, [#allocation7]
        $region20: #{tpu_custom_call.1} parent=11 // pred_fallthru
          _
      $region12: #{tpu_custom_call.1} parent=5 // pred_fallthru
        _
      %p161 = scmp.lt.s32.totalorder %s14, 2
      // Predicated region
      $region21: #{tpu_custom_call.1} parent=5 // pred_check
        %p162 = pneg %p161
      $region22: #{tpu_custom_call.1} parent=5 // pred_check_branch
        %164 = sbr.rel (%p162) target = $region24
      $region23: #{tpu_custom_call.1} parent=5 // pred_region
        // Predicated region
        $region25: #{tpu_custom_call.1} parent=23 // pred_check
          %p165 = pneg %p48
        $region26: #{tpu_custom_call.1} parent=23 // pred_check_branch
          %167 = sbr.rel (%p165) target = $region28
        $region27: #{tpu_custom_call.1} parent=23 // pred_region
          %s168 = sand.u32 %s38, 1
          %s169 = scalar_lea.sflag [#allocation4], %s168
          %s170 = sand.u32 %s38, 1
          %s171 = smul.addr %s170, 49
          %s172 = scalar_lea.vmem [#allocation3], %s171
          %s173 = smul.u32 49, %s22
          %s175 = ssub.s32 784, 784
          %176 = vsyncadd %s169, %s175
          %s177 = smul.addr %s21, 98
          %s178 = sadd.s32 %s173, %s177
          %s179 = smul.addr %s178, 16
          %s180 = scalar_lea.hbm %s0, %s179
          %s182 = sshll.u32 %s172, 4
          %s183 = int_to_ptr.vmem [resolvable:$true] %s182
          %185 = dma.hbm_to_vmem [thread:$0]  %s180, 784, %s183, %s169
        $region28: #{tpu_custom_call.1} parent=23 // pred_fallthru
          _
      $region24: #{tpu_custom_call.1} parent=5 // pred_fallthru
        _
      %p186 = scmp.le.s32.totalorder 1, %s14
      %p187 = scmp.lt.s32.totalorder %s14, 3
      %p188 = pnand %p186, %p187
      %p189 = pneg %p188
      // Predicated region
      $region29: #{tpu_custom_call.1} parent=5 // pred_check
        _
      $region30: #{tpu_custom_call.1} parent=5 // pred_check_branch
        %191 = sbr.rel (%p188) target = $region32
      $region31: #{tpu_custom_call.1} parent=5 // pred_region
        %s192 = ssub.s32 %s14, 1
        %s193 = sand.u32 %s41, 1
        %s194 = scalar_lea.sflag [#allocation4], %s193
        %s195 = sand.u32 %s41, 1
        %s196 = smul.addr %s195, 49
        %s197 = scalar_lea.vmem [#allocation3], %s196
        // Predicated region
        $region33: #{tpu_custom_call.1} parent=31 // pred_check
          %p198 = pneg %p54
        $region34: #{tpu_custom_call.1} parent=31 // pred_check_branch
          %200 = sbr.rel (%p198) target = $region36
        $region35: #{tpu_custom_call.1} parent=31 // pred_region
          %201 = dma.done %s194, 784
        $region36: #{tpu_custom_call.1} parent=31 // pred_fallthru
          _
        // Predicated region
        $region37: #{tpu_custom_call.1} parent=31 // pred_check
          %p202 = pneg %p75
        $region38: #{tpu_custom_call.1} parent=31 // pred_check_branch
          %204 = sbr.rel (%p202) target = $region40
        $region39: #{tpu_custom_call.1} parent=31 // pred_region
          %205 = dma.done [#allocation7], 100352
        $region40: #{tpu_custom_call.1} parent=31 // pred_fallthru
          _
        // Predicated region
        $region41: #{tpu_custom_call.1} parent=31 // pred_check
          %p206 = pneg %p96
        $region42: #{tpu_custom_call.1} parent=31 // pred_check_branch
          %208 = sbr.rel (%p206) target = $region44
        $region43: #{tpu_custom_call.1} parent=31 // pred_region
          %209 = dma.done [#allocation7], 16
        $region44: #{tpu_custom_call.1} parent=31 // pred_fallthru
          _
        %s210 = sand.u32 %s41, 1
        %s211 = scalar_lea.sflag [#allocation4], %s210
        %s212 = sand.u32 %s41, 1
        %s213 = smul.addr %s212, 49
        %s214 = scalar_lea.vmem [#allocation3], %s213
        %p215 = pneg %p54
        %p216 = pneg %p51
        %p217 = pneg %p75
        %p218 = pneg %p72
        %p219 = pneg %p96
        %p220 = pneg %p93
        %p221 = pneg %p122
        %p222 = pneg %p119
        %s223 = smul.u32 49, %s24
        %p225 = scmp.eq.s32.totalorder %s24, 0
        // Predicated region
        $region45: #{tpu_custom_call.1} parent=31 // pred_check
          %p226 = pneg %p225
        $region46: #{tpu_custom_call.1} parent=31 // pred_check_branch
          %228 = sbr.rel (%p226) target = $region48
        $region47: #{tpu_custom_call.1} parent=31 // pred_region
          %229 = vst [vmem:[#allocation2] sm:$0x3] 0.0
        $region48: #{tpu_custom_call.1} parent=31 // pred_fallthru
          _
        %s230 = smul.u32 %s24, 6272
        %s231 = sshra.s32 %s230, 3
        %s232 = sand.u32 %s230, 7
        %s233 = smul.addr %s231, 4
        %s234 = scalar_lea.vmem [#allocation6], %s233
        %v235 = vld [vmem:[%s234] sm:$0xf]
        %v236 = vld [vmem:[%s234 + $0x4] sm:$0xf]
        %v237 = vld [vmem:[%s234 + $0x8] sm:$0xf]
        %v238 = vld [vmem:[%s234 + $0xc] sm:$0xf]
        %v239 = vld [vmem:[%s234 + $0x10] sm:$0xf]
        %v240 = vld [vmem:[%s234 + $0x14] sm:$0xf]
        %v241 = vld [vmem:[%s234 + $0x18] sm:$0xf]
        %v242 = vld [vmem:[%s234 + $0x1c] sm:$0xf]
        %v243 = vld [vmem:[%s234 + $0x20] sm:$0xf]
        %v244 = vld [vmem:[%s234 + $0x24] sm:$0xf]
        %v245 = vld [vmem:[%s234 + $0x28] sm:$0xf]
        %v246 = vld [vmem:[%s234 + $0x2c] sm:$0xf]
        %v247 = vld [vmem:[%s234 + $0x30] sm:$0xf]
        %v248 = vld [vmem:[%s234 + $0x34] sm:$0xf]
        %v249 = vld [vmem:[%s234 + $0x38] sm:$0xf]
        %v250 = vld [vmem:[%s234 + $0x3c] sm:$0xf]
        %v251 = vld [vmem:[%s234 + $0x40] sm:$0xf]
        %v252 = vld [vmem:[%s234 + $0x44] sm:$0xf]
        %v253 = vld [vmem:[%s234 + $0x48] sm:$0xf]
        %v254 = vld [vmem:[%s234 + $0x4c] sm:$0xf]
        %v255 = vld [vmem:[%s234 + $0x50] sm:$0xf]
        %v256 = vld [vmem:[%s234 + $0x54] sm:$0xf]
        %v257 = vld [vmem:[%s234 + $0x58] sm:$0xf]
        %v258 = vld [vmem:[%s234 + $0x5c] sm:$0xf]
        %v259 = vld [vmem:[%s234 + $0x60] sm:$0xf]
        %v260 = vld [vmem:[%s234 + $0x64] sm:$0xf]
        %v261 = vld [vmem:[%s234 + $0x68] sm:$0xf]
        %v262 = vld [vmem:[%s234 + $0x6c] sm:$0xf]
        %v263 = vld [vmem:[%s234 + $0x70] sm:$0xf]
        %v264 = vld [vmem:[%s234 + $0x74] sm:$0xf]
        %v265 = vld [vmem:[%s234 + $0x78] sm:$0xf]
        %v266 = vld [vmem:[%s234 + $0x7c] sm:$0xf]
        %v267 = vld [vmem:[%s234 + $0x80] sm:$0xf]
        %v268 = vld [vmem:[%s234 + $0x84] sm:$0xf]
        %v269 = vld [vmem:[%s234 + $0x88] sm:$0xf]
        %v270 = vld [vmem:[%s234 + $0x8c] sm:$0xf]
        %v271 = vld [vmem:[%s234 + $0x90] sm:$0xf]
        %v272 = vld [vmem:[%s234 + $0x94] sm:$0xf]
        %v273 = vld [vmem:[%s234 + $0x98] sm:$0xf]
        %v274 = vld [vmem:[%s234 + $0x9c] sm:$0xf]
        %v275 = vld [vmem:[%s234 + $0xa0] sm:$0xf]
        %v276 = vld [vmem:[%s234 + $0xa4] sm:$0xf]
        %v277 = vld [vmem:[%s234 + $0xa8] sm:$0xf]
        %v278 = vld [vmem:[%s234 + $0xac] sm:$0xf]
        %v279 = vld [vmem:[%s234 + $0xb0] sm:$0xf]
        %v280 = vld [vmem:[%s234 + $0xb4] sm:$0xf]
        %v281 = vld [vmem:[%s234 + $0xb8] sm:$0xf]
        %v282 = vld [vmem:[%s234 + $0xbc] sm:$0xf]
        %v283 = vld [vmem:[%s234 + $0xc0] sm:$0xf]
        %v284 = vld [vmem:[%s234 + $0xc4] sm:$0xf]
        %v285 = vld [vmem:[%s234 + $0xc8] sm:$0xf]
        %v286 = vld [vmem:[%s234 + $0xcc] sm:$0xf]
        %v287 = vld [vmem:[%s234 + $0xd0] sm:$0xf]
        %v288 = vld [vmem:[%s234 + $0xd4] sm:$0xf]
        %v289 = vld [vmem:[%s234 + $0xd8] sm:$0xf]
        %v290 = vld [vmem:[%s234 + $0xdc] sm:$0xf]
        %v291 = vld [vmem:[%s234 + $0xe0] sm:$0xf]
        %v292 = vld [vmem:[%s234 + $0xe4] sm:$0xf]
        %v293 = vld [vmem:[%s234 + $0xe8] sm:$0xf]
        %v294 = vld [vmem:[%s234 + $0xec] sm:$0xf]
        %v295 = vld [vmem:[%s234 + $0xf0] sm:$0xf]
        %v296 = vld [vmem:[%s234 + $0xf4] sm:$0xf]
        %v297 = vld [vmem:[%s234 + $0xf8] sm:$0xf]
        %v298 = vld [vmem:[%s234 + $0xfc] sm:$0xf]
        %v299 = vld [vmem:[%s234 + $0x100] sm:$0xf]
        %v300 = vld [vmem:[%s234 + $0x104] sm:$0xf]
        %v301 = vld [vmem:[%s234 + $0x108] sm:$0xf]
        %v302 = vld [vmem:[%s234 + $0x10c] sm:$0xf]
        %v303 = vld [vmem:[%s234 + $0x110] sm:$0xf]
        %v304 = vld [vmem:[%s234 + $0x114] sm:$0xf]
        %v305 = vld [vmem:[%s234 + $0x118] sm:$0xf]
        %v306 = vld [vmem:[%s234 + $0x11c] sm:$0xf]
        %v307 = vld [vmem:[%s234 + $0x120] sm:$0xf]
        %v308 = vld [vmem:[%s234 + $0x124] sm:$0xf]
        %v309 = vld [vmem:[%s234 + $0x128] sm:$0xf]
        %v310 = vld [vmem:[%s234 + $0x12c] sm:$0xf]
        %v311 = vld [vmem:[%s234 + $0x130] sm:$0xf]
        %v312 = vld [vmem:[%s234 + $0x134] sm:$0xf]
        %v313 = vld [vmem:[%s234 + $0x138] sm:$0xf]
        %v314 = vld [vmem:[%s234 + $0x13c] sm:$0xf]
        %v315 = vld [vmem:[%s234 + $0x140] sm:$0xf]
        %v316 = vld [vmem:[%s234 + $0x144] sm:$0xf]
        %v317 = vld [vmem:[%s234 + $0x148] sm:$0xf]
        %v318 = vld [vmem:[%s234 + $0x14c] sm:$0xf]
        %v319 = vld [vmem:[%s234 + $0x150] sm:$0xf]
        %v320 = vld [vmem:[%s234 + $0x154] sm:$0xf]
        %v321 = vld [vmem:[%s234 + $0x158] sm:$0xf]
        %v322 = vld [vmem:[%s234 + $0x15c] sm:$0xf]
        %v323 = vld [vmem:[%s234 + $0x160] sm:$0xf]
        %v324 = vld [vmem:[%s234 + $0x164] sm:$0xf]
        %v325 = vld [vmem:[%s234 + $0x168] sm:$0xf]
        %v326 = vld [vmem:[%s234 + $0x16c] sm:$0xf]
        %v327 = vld [vmem:[%s234 + $0x170] sm:$0xf]
        %v328 = vld [vmem:[%s234 + $0x174] sm:$0xf]
        %v329 = vld [vmem:[%s234 + $0x178] sm:$0xf]
        %v330 = vld [vmem:[%s234 + $0x17c] sm:$0xf]
        %v331 = vld [vmem:[%s234 + $0x180] sm:$0xf]
        %v332 = vld [vmem:[%s234 + $0x184] sm:$0xf]
        %v333 = vld [vmem:[%s234 + $0x188] sm:$0xf]
        %v334 = vld [vmem:[%s234 + $0x18c] sm:$0xf]
        %v335 = vld [vmem:[%s234 + $0x190] sm:$0xf]
        %v336 = vld [vmem:[%s234 + $0x194] sm:$0xf]
        %v337 = vld [vmem:[%s234 + $0x198] sm:$0xf]
        %v338 = vld [vmem:[%s234 + $0x19c] sm:$0xf]
        %v339 = vld [vmem:[%s234 + $0x1a0] sm:$0xf]
        %v340 = vld [vmem:[%s234 + $0x1a4] sm:$0xf]
        %v341 = vld [vmem:[%s234 + $0x1a8] sm:$0xf]
        %v342 = vld [vmem:[%s234 + $0x1ac] sm:$0xf]
        %v343 = vld [vmem:[%s234 + $0x1b0] sm:$0xf]
        %v344 = vld [vmem:[%s234 + $0x1b4] sm:$0xf]
        %v345 = vld [vmem:[%s234 + $0x1b8] sm:$0xf]
        %v346 = vld [vmem:[%s234 + $0x1bc] sm:$0xf]
        %v347 = vld [vmem:[%s234 + $0x1c0] sm:$0xf]
        %v348 = vld [vmem:[%s234 + $0x1c4] sm:$0xf]
        %v349 = vld [vmem:[%s234 + $0x1c8] sm:$0xf]
        %v350 = vld [vmem:[%s234 + $0x1cc] sm:$0xf]
        %v351 = vld [vmem:[%s234 + $0x1d0] sm:$0xf]
        %v352 = vld [vmem:[%s234 + $0x1d4] sm:$0xf]
        %v353 = vld [vmem:[%s234 + $0x1d8] sm:$0xf]
        %v354 = vld [vmem:[%s234 + $0x1dc] sm:$0xf]
        %v355 = vld [vmem:[%s234 + $0x1e0] sm:$0xf]
        %v356 = vld [vmem:[%s234 + $0x1e4] sm:$0xf]
        %v357 = vld [vmem:[%s234 + $0x1e8] sm:$0xf]
        %v358 = vld [vmem:[%s234 + $0x1ec] sm:$0xf]
        %v359 = vld [vmem:[%s234 + $0x1f0] sm:$0xf]
        %v360 = vld [vmem:[%s234 + $0x1f4] sm:$0xf]
        %v361 = vld [vmem:[%s234 + $0x1f8] sm:$0xf]
        %v362 = vld [vmem:[%s234 + $0x1fc] sm:$0xf]
        %v363 = vld [vmem:[%s234 + $0x200] sm:$0xf]
        %v364 = vld [vmem:[%s234 + $0x204] sm:$0xf]
        %v365 = vld [vmem:[%s234 + $0x208] sm:$0xf]
        %v366 = vld [vmem:[%s234 + $0x20c] sm:$0xf]
        %v367 = vld [vmem:[%s234 + $0x210] sm:$0xf]
        %v368 = vld [vmem:[%s234 + $0x214] sm:$0xf]
        %v369 = vld [vmem:[%s234 + $0x218] sm:$0xf]
        %v370 = vld [vmem:[%s234 + $0x21c] sm:$0xf]
        %v371 = vld [vmem:[%s234 + $0x220] sm:$0xf]
        %v372 = vld [vmem:[%s234 + $0x224] sm:$0xf]
        %v373 = vld [vmem:[%s234 + $0x228] sm:$0xf]
        %v374 = vld [vmem:[%s234 + $0x22c] sm:$0xf]
        %v375 = vld [vmem:[%s234 + $0x230] sm:$0xf]
        %v376 = vld [vmem:[%s234 + $0x234] sm:$0xf]
        %v377 = vld [vmem:[%s234 + $0x238] sm:$0xf]
        %v378 = vld [vmem:[%s234 + $0x23c] sm:$0xf]
        %v379 = vld [vmem:[%s234 + $0x240] sm:$0xf]
        %v380 = vld [vmem:[%s234 + $0x244] sm:$0xf]
        %v381 = vld [vmem:[%s234 + $0x248] sm:$0xf]
        %v382 = vld [vmem:[%s234 + $0x24c] sm:$0xf]
        %v383 = vld [vmem:[%s234 + $0x250] sm:$0xf]
        %v384 = vld [vmem:[%s234 + $0x254] sm:$0xf]
        %v385 = vld [vmem:[%s234 + $0x258] sm:$0xf]
        %v386 = vld [vmem:[%s234 + $0x25c] sm:$0xf]
        %v387 = vld [vmem:[%s234 + $0x260] sm:$0xf]
        %v388 = vld [vmem:[%s234 + $0x264] sm:$0xf]
        %v389 = vld [vmem:[%s234 + $0x268] sm:$0xf]
        %v390 = vld [vmem:[%s234 + $0x26c] sm:$0xf]
        %v391 = vld [vmem:[%s234 + $0x270] sm:$0xf]
        %v392 = vld [vmem:[%s234 + $0x274] sm:$0xf]
        %v393 = vld [vmem:[%s234 + $0x278] sm:$0xf]
        %v394 = vld [vmem:[%s234 + $0x27c] sm:$0xf]
        %v395 = vld [vmem:[%s234 + $0x280] sm:$0xf]
        %v396 = vld [vmem:[%s234 + $0x284] sm:$0xf]
        %v397 = vld [vmem:[%s234 + $0x288] sm:$0xf]
        %v398 = vld [vmem:[%s234 + $0x28c] sm:$0xf]
        %v399 = vld [vmem:[%s234 + $0x290] sm:$0xf]
        %v400 = vld [vmem:[%s234 + $0x294] sm:$0xf]
        %v401 = vld [vmem:[%s234 + $0x298] sm:$0xf]
        %v402 = vld [vmem:[%s234 + $0x29c] sm:$0xf]
        %v403 = vld [vmem:[%s234 + $0x2a0] sm:$0xf]
        %v404 = vld [vmem:[%s234 + $0x2a4] sm:$0xf]
        %v405 = vld [vmem:[%s234 + $0x2a8] sm:$0xf]
        %v406 = vld [vmem:[%s234 + $0x2ac] sm:$0xf]
        %v407 = vld [vmem:[%s234 + $0x2b0] sm:$0xf]
        %v408 = vld [vmem:[%s234 + $0x2b4] sm:$0xf]
        %v409 = vld [vmem:[%s234 + $0x2b8] sm:$0xf]
        %v410 = vld [vmem:[%s234 + $0x2bc] sm:$0xf]
        %v411 = vld [vmem:[%s234 + $0x2c0] sm:$0xf]
        %v412 = vld [vmem:[%s234 + $0x2c4] sm:$0xf]
        %v413 = vld [vmem:[%s234 + $0x2c8] sm:$0xf]
        %v414 = vld [vmem:[%s234 + $0x2cc] sm:$0xf]
        %v415 = vld [vmem:[%s234 + $0x2d0] sm:$0xf]
        %v416 = vld [vmem:[%s234 + $0x2d4] sm:$0xf]
        %v417 = vld [vmem:[%s234 + $0x2d8] sm:$0xf]
        %v418 = vld [vmem:[%s234 + $0x2dc] sm:$0xf]
        %v419 = vld [vmem:[%s234 + $0x2e0] sm:$0xf]
        %v420 = vld [vmem:[%s234 + $0x2e4] sm:$0xf]
        %v421 = vld [vmem:[%s234 + $0x2e8] sm:$0xf]
        %v422 = vld [vmem:[%s234 + $0x2ec] sm:$0xf]
        %v423 = vld [vmem:[%s234 + $0x2f0] sm:$0xf]
        %v424 = vld [vmem:[%s234 + $0x2f4] sm:$0xf]
        %v425 = vld [vmem:[%s234 + $0x2f8] sm:$0xf]
        %v426 = vld [vmem:[%s234 + $0x2fc] sm:$0xf]
        %v427 = vld [vmem:[%s234 + $0x300] sm:$0xf]
        %v428 = vld [vmem:[%s234 + $0x304] sm:$0xf]
        %v429 = vld [vmem:[%s234 + $0x308] sm:$0xf]
        %v430 = vld [vmem:[%s234 + $0x30c] sm:$0xf]
        %v431 = vld [vmem:[%s234 + $0x310] sm:$0xf]
        %v432 = vld [vmem:[%s234 + $0x314] sm:$0xf]
        %v433 = vld [vmem:[%s234 + $0x318] sm:$0xf]
        %v434 = vld [vmem:[%s234 + $0x31c] sm:$0xf]
        %v435 = vld [vmem:[%s234 + $0x320] sm:$0xf]
        %v436 = vld [vmem:[%s234 + $0x324] sm:$0xf]
        %v437 = vld [vmem:[%s234 + $0x328] sm:$0xf]
        %v438 = vld [vmem:[%s234 + $0x32c] sm:$0xf]
        %v439 = vld [vmem:[%s234 + $0x330] sm:$0xf]
        %v440 = vld [vmem:[%s234 + $0x334] sm:$0xf]
        %v441 = vld [vmem:[%s234 + $0x338] sm:$0xf]
        %v442 = vld [vmem:[%s234 + $0x33c] sm:$0xf]
        %v443 = vld [vmem:[%s234 + $0x340] sm:$0xf]
        %v444 = vld [vmem:[%s234 + $0x344] sm:$0xf]
        %v445 = vld [vmem:[%s234 + $0x348] sm:$0xf]
        %v446 = vld [vmem:[%s234 + $0x34c] sm:$0xf]
        %v447 = vld [vmem:[%s234 + $0x350] sm:$0xf]
        %v448 = vld [vmem:[%s234 + $0x354] sm:$0xf]
        %v449 = vld [vmem:[%s234 + $0x358] sm:$0xf]
        %v450 = vld [vmem:[%s234 + $0x35c] sm:$0xf]
        %v451 = vld [vmem:[%s234 + $0x360] sm:$0xf]
        %v452 = vld [vmem:[%s234 + $0x364] sm:$0xf]
        %v453 = vld [vmem:[%s234 + $0x368] sm:$0xf]
        %v454 = vld [vmem:[%s234 + $0x36c] sm:$0xf]
        %v455 = vld [vmem:[%s234 + $0x370] sm:$0xf]
        %v456 = vld [vmem:[%s234 + $0x374] sm:$0xf]
        %v457 = vld [vmem:[%s234 + $0x378] sm:$0xf]
        %v458 = vld [vmem:[%s234 + $0x37c] sm:$0xf]
        %v459 = vld [vmem:[%s234 + $0x380] sm:$0xf]
        %v460 = vld [vmem:[%s234 + $0x384] sm:$0xf]
        %v461 = vld [vmem:[%s234 + $0x388] sm:$0xf]
        %v462 = vld [vmem:[%s234 + $0x38c] sm:$0xf]
        %v463 = vld [vmem:[%s234 + $0x390] sm:$0xf]
        %v464 = vld [vmem:[%s234 + $0x394] sm:$0xf]
        %v465 = vld [vmem:[%s234 + $0x398] sm:$0xf]
        %v466 = vld [vmem:[%s234 + $0x39c] sm:$0xf]
        %v467 = vld [vmem:[%s234 + $0x3a0] sm:$0xf]
        %v468 = vld [vmem:[%s234 + $0x3a4] sm:$0xf]
        %v469 = vld [vmem:[%s234 + $0x3a8] sm:$0xf]
        %v470 = vld [vmem:[%s234 + $0x3ac] sm:$0xf]
        %v471 = vld [vmem:[%s234 + $0x3b0] sm:$0xf]
        %v472 = vld [vmem:[%s234 + $0x3b4] sm:$0xf]
        %v473 = vld [vmem:[%s234 + $0x3b8] sm:$0xf]
        %v474 = vld [vmem:[%s234 + $0x3bc] sm:$0xf]
        %v475 = vld [vmem:[%s234 + $0x3c0] sm:$0xf]
        %v476 = vld [vmem:[%s234 + $0x3c4] sm:$0xf]
        %v477 = vld [vmem:[%s234 + $0x3c8] sm:$0xf]
        %v478 = vld [vmem:[%s234 + $0x3cc] sm:$0xf]
        %v479 = vld [vmem:[%s234 + $0x3d0] sm:$0xf]
        %v480 = vld [vmem:[%s234 + $0x3d4] sm:$0xf]
        %v481 = vld [vmem:[%s234 + $0x3d8] sm:$0xf]
        %v482 = vld [vmem:[%s234 + $0x3dc] sm:$0xf]
        %v483 = vld [vmem:[%s234 + $0x3e0] sm:$0xf]
        %v484 = vld [vmem:[%s234 + $0x3e4] sm:$0xf]
        %v485 = vld [vmem:[%s234 + $0x3e8] sm:$0xf]
        %v486 = vld [vmem:[%s234 + $0x3ec] sm:$0xf]
        %v487 = vld [vmem:[%s234 + $0x3f0] sm:$0xf]
        %v488 = vld [vmem:[%s234 + $0x3f4] sm:$0xf]
        %v489 = vld [vmem:[%s234 + $0x3f8] sm:$0xf]
        %v490 = vld [vmem:[%s234 + $0x3fc] sm:$0xf]
        %v491 = vld [vmem:[%s234 + $0x400] sm:$0xf]
        %v492 = vld [vmem:[%s234 + $0x404] sm:$0xf]
        %v493 = vld [vmem:[%s234 + $0x408] sm:$0xf]
        %v494 = vld [vmem:[%s234 + $0x40c] sm:$0xf]
        %v495 = vld [vmem:[%s234 + $0x410] sm:$0xf]
        %v496 = vld [vmem:[%s234 + $0x414] sm:$0xf]
        %v497 = vld [vmem:[%s234 + $0x418] sm:$0xf]
        %v498 = vld [vmem:[%s234 + $0x41c] sm:$0xf]
        %v499 = vld [vmem:[%s234 + $0x420] sm:$0xf]
        %v500 = vld [vmem:[%s234 + $0x424] sm:$0xf]
        %v501 = vld [vmem:[%s234 + $0x428] sm:$0xf]
        %v502 = vld [vmem:[%s234 + $0x42c] sm:$0xf]
        %v503 = vld [vmem:[%s234 + $0x430] sm:$0xf]
        %v504 = vld [vmem:[%s234 + $0x434] sm:$0xf]
        %v505 = vld [vmem:[%s234 + $0x438] sm:$0xf]
        %v506 = vld [vmem:[%s234 + $0x43c] sm:$0xf]
        %v507 = vld [vmem:[%s234 + $0x440] sm:$0xf]
        %v508 = vld [vmem:[%s234 + $0x444] sm:$0xf]
        %v509 = vld [vmem:[%s234 + $0x448] sm:$0xf]
        %v510 = vld [vmem:[%s234 + $0x44c] sm:$0xf]
        %v511 = vld [vmem:[%s234 + $0x450] sm:$0xf]
        %v512 = vld [vmem:[%s234 + $0x454] sm:$0xf]
        %v513 = vld [vmem:[%s234 + $0x458] sm:$0xf]
        %v514 = vld [vmem:[%s234 + $0x45c] sm:$0xf]
        %v515 = vld [vmem:[%s234 + $0x460] sm:$0xf]
        %v516 = vld [vmem:[%s234 + $0x464] sm:$0xf]
        %v517 = vld [vmem:[%s234 + $0x468] sm:$0xf]
        %v518 = vld [vmem:[%s234 + $0x46c] sm:$0xf]
        %v519 = vld [vmem:[%s234 + $0x470] sm:$0xf]
        %v520 = vld [vmem:[%s234 + $0x474] sm:$0xf]
        %v521 = vld [vmem:[%s234 + $0x478] sm:$0xf]
        %v522 = vld [vmem:[%s234 + $0x47c] sm:$0xf]
        %v523 = vld [vmem:[%s234 + $0x480] sm:$0xf]
        %v524 = vld [vmem:[%s234 + $0x484] sm:$0xf]
        %v525 = vld [vmem:[%s234 + $0x488] sm:$0xf]
        %v526 = vld [vmem:[%s234 + $0x48c] sm:$0xf]
        %v527 = vld [vmem:[%s234 + $0x490] sm:$0xf]
        %v528 = vld [vmem:[%s234 + $0x494] sm:$0xf]
        %v529 = vld [vmem:[%s234 + $0x498] sm:$0xf]
        %v530 = vld [vmem:[%s234 + $0x49c] sm:$0xf]
        %v531 = vld [vmem:[%s234 + $0x4a0] sm:$0xf]
        %v532 = vld [vmem:[%s234 + $0x4a4] sm:$0xf]
        %v533 = vld [vmem:[%s234 + $0x4a8] sm:$0xf]
        %v534 = vld [vmem:[%s234 + $0x4ac] sm:$0xf]
        %v535 = vld [vmem:[%s234 + $0x4b0] sm:$0xf]
        %v536 = vld [vmem:[%s234 + $0x4b4] sm:$0xf]
        %v537 = vld [vmem:[%s234 + $0x4b8] sm:$0xf]
        %v538 = vld [vmem:[%s234 + $0x4bc] sm:$0xf]
        %v539 = vld [vmem:[%s234 + $0x4c0] sm:$0xf]
        %v540 = vld [vmem:[%s234 + $0x4c4] sm:$0xf]
        %v541 = vld [vmem:[%s234 + $0x4c8] sm:$0xf]
        %v542 = vld [vmem:[%s234 + $0x4cc] sm:$0xf]
        %v543 = vld [vmem:[%s234 + $0x4d0] sm:$0xf]
        %v544 = vld [vmem:[%s234 + $0x4d4] sm:$0xf]
        %v545 = vld [vmem:[%s234 + $0x4d8] sm:$0xf]
        %v546 = vld [vmem:[%s234 + $0x4dc] sm:$0xf]
        %v547 = vld [vmem:[%s234 + $0x4e0] sm:$0xf]
        %v548 = vld [vmem:[%s234 + $0x4e4] sm:$0xf]
        %v549 = vld [vmem:[%s234 + $0x4e8] sm:$0xf]
        %v550 = vld [vmem:[%s234 + $0x4ec] sm:$0xf]
        %v551 = vld [vmem:[%s234 + $0x4f0] sm:$0xf]
        %v552 = vld [vmem:[%s234 + $0x4f4] sm:$0xf]
        %v553 = vld [vmem:[%s234 + $0x4f8] sm:$0xf]
        %v554 = vld [vmem:[%s234 + $0x4fc] sm:$0xf]
        %v555 = vld [vmem:[%s234 + $0x500] sm:$0xf]
        %v556 = vld [vmem:[%s234 + $0x504] sm:$0xf]
        %v557 = vld [vmem:[%s234 + $0x508] sm:$0xf]
        %v558 = vld [vmem:[%s234 + $0x50c] sm:$0xf]
        %v559 = vld [vmem:[%s234 + $0x510] sm:$0xf]
        %v560 = vld [vmem:[%s234 + $0x514] sm:$0xf]
        %v561 = vld [vmem:[%s234 + $0x518] sm:$0xf]
        %v562 = vld [vmem:[%s234 + $0x51c] sm:$0xf]
        %v563 = vld [vmem:[%s234 + $0x520] sm:$0xf]
        %v564 = vld [vmem:[%s234 + $0x524] sm:$0xf]
        %v565 = vld [vmem:[%s234 + $0x528] sm:$0xf]
        %v566 = vld [vmem:[%s234 + $0x52c] sm:$0xf]
        %v567 = vld [vmem:[%s234 + $0x530] sm:$0xf]
        %v568 = vld [vmem:[%s234 + $0x534] sm:$0xf]
        %v569 = vld [vmem:[%s234 + $0x538] sm:$0xf]
        %v570 = vld [vmem:[%s234 + $0x53c] sm:$0xf]
        %v571 = vld [vmem:[%s234 + $0x540] sm:$0xf]
        %v572 = vld [vmem:[%s234 + $0x544] sm:$0xf]
        %v573 = vld [vmem:[%s234 + $0x548] sm:$0xf]
        %v574 = vld [vmem:[%s234 + $0x54c] sm:$0xf]
        %v575 = vld [vmem:[%s234 + $0x550] sm:$0xf]
        %v576 = vld [vmem:[%s234 + $0x554] sm:$0xf]
        %v577 = vld [vmem:[%s234 + $0x558] sm:$0xf]
        %v578 = vld [vmem:[%s234 + $0x55c] sm:$0xf]
        %v579 = vld [vmem:[%s234 + $0x560] sm:$0xf]
        %v580 = vld [vmem:[%s234 + $0x564] sm:$0xf]
        %v581 = vld [vmem:[%s234 + $0x568] sm:$0xf]
        %v582 = vld [vmem:[%s234 + $0x56c] sm:$0xf]
        %v583 = vld [vmem:[%s234 + $0x570] sm:$0xf]
        %v584 = vld [vmem:[%s234 + $0x574] sm:$0xf]
        %v585 = vld [vmem:[%s234 + $0x578] sm:$0xf]
        %v586 = vld [vmem:[%s234 + $0x57c] sm:$0xf]
        %v587 = vld [vmem:[%s234 + $0x580] sm:$0xf]
        %v588 = vld [vmem:[%s234 + $0x584] sm:$0xf]
        %v589 = vld [vmem:[%s234 + $0x588] sm:$0xf]
        %v590 = vld [vmem:[%s234 + $0x58c] sm:$0xf]
        %v591 = vld [vmem:[%s234 + $0x590] sm:$0xf]
        %v592 = vld [vmem:[%s234 + $0x594] sm:$0xf]
        %v593 = vld [vmem:[%s234 + $0x598] sm:$0xf]
        %v594 = vld [vmem:[%s234 + $0x59c] sm:$0xf]
        %v595 = vld [vmem:[%s234 + $0x5a0] sm:$0xf]
        %v596 = vld [vmem:[%s234 + $0x5a4] sm:$0xf]
        %v597 = vld [vmem:[%s234 + $0x5a8] sm:$0xf]
        %v598 = vld [vmem:[%s234 + $0x5ac] sm:$0xf]
        %v599 = vld [vmem:[%s234 + $0x5b0] sm:$0xf]
        %v600 = vld [vmem:[%s234 + $0x5b4] sm:$0xf]
        %v601 = vld [vmem:[%s234 + $0x5b8] sm:$0xf]
        %v602 = vld [vmem:[%s234 + $0x5bc] sm:$0xf]
        %v603 = vld [vmem:[%s234 + $0x5c0] sm:$0xf]
        %v604 = vld [vmem:[%s234 + $0x5c4] sm:$0xf]
        %v605 = vld [vmem:[%s234 + $0x5c8] sm:$0xf]
        %v606 = vld [vmem:[%s234 + $0x5cc] sm:$0xf]
        %v607 = vld [vmem:[%s234 + $0x5d0] sm:$0xf]
        %v608 = vld [vmem:[%s234 + $0x5d4] sm:$0xf]
        %v609 = vld [vmem:[%s234 + $0x5d8] sm:$0xf]
        %v610 = vld [vmem:[%s234 + $0x5dc] sm:$0xf]
        %v611 = vld [vmem:[%s234 + $0x5e0] sm:$0xf]
        %v612 = vld [vmem:[%s234 + $0x5e4] sm:$0xf]
        %v613 = vld [vmem:[%s234 + $0x5e8] sm:$0xf]
        %v614 = vld [vmem:[%s234 + $0x5ec] sm:$0xf]
        %v615 = vld [vmem:[%s234 + $0x5f0] sm:$0xf]
        %v616 = vld [vmem:[%s234 + $0x5f4] sm:$0xf]
        %v617 = vld [vmem:[%s234 + $0x5f8] sm:$0xf]
        %v618 = vld [vmem:[%s234 + $0x5fc] sm:$0xf]
        %v619 = vld [vmem:[%s234 + $0x600] sm:$0xf]
        %v620 = vld [vmem:[%s234 + $0x604] sm:$0xf]
        %v621 = vld [vmem:[%s234 + $0x608] sm:$0xf]
        %v622 = vld [vmem:[%s234 + $0x60c] sm:$0xf]
        %v623 = vld [vmem:[%s234 + $0x610] sm:$0xf]
        %v624 = vld [vmem:[%s234 + $0x614] sm:$0xf]
        %v625 = vld [vmem:[%s234 + $0x618] sm:$0xf]
        %v626 = vld [vmem:[%s234 + $0x61c] sm:$0xf]
        %v627 = vld [vmem:[%s234 + $0x620] sm:$0xf]
        %v628 = vld [vmem:[%s234 + $0x624] sm:$0xf]
        %v629 = vld [vmem:[%s234 + $0x628] sm:$0xf]
        %v630 = vld [vmem:[%s234 + $0x62c] sm:$0xf]
        %v631 = vld [vmem:[%s234 + $0x630] sm:$0xf]
        %v632 = vld [vmem:[%s234 + $0x634] sm:$0xf]
        %v633 = vld [vmem:[%s234 + $0x638] sm:$0xf]
        %v634 = vld [vmem:[%s234 + $0x63c] sm:$0xf]
        %v635 = vld [vmem:[%s234 + $0x640] sm:$0xf]
        %v636 = vld [vmem:[%s234 + $0x644] sm:$0xf]
        %v637 = vld [vmem:[%s234 + $0x648] sm:$0xf]
        %v638 = vld [vmem:[%s234 + $0x64c] sm:$0xf]
        %v639 = vld [vmem:[%s234 + $0x650] sm:$0xf]
        %v640 = vld [vmem:[%s234 + $0x654] sm:$0xf]
        %v641 = vld [vmem:[%s234 + $0x658] sm:$0xf]
        %v642 = vld [vmem:[%s234 + $0x65c] sm:$0xf]
        %v643 = vld [vmem:[%s234 + $0x660] sm:$0xf]
        %v644 = vld [vmem:[%s234 + $0x664] sm:$0xf]
        %v645 = vld [vmem:[%s234 + $0x668] sm:$0xf]
        %v646 = vld [vmem:[%s234 + $0x66c] sm:$0xf]
        %v647 = vld [vmem:[%s234 + $0x670] sm:$0xf]
        %v648 = vld [vmem:[%s234 + $0x674] sm:$0xf]
        %v649 = vld [vmem:[%s234 + $0x678] sm:$0xf]
        %v650 = vld [vmem:[%s234 + $0x67c] sm:$0xf]
        %v651 = vld [vmem:[%s234 + $0x680] sm:$0xf]
        %v652 = vld [vmem:[%s234 + $0x684] sm:$0xf]
        %v653 = vld [vmem:[%s234 + $0x688] sm:$0xf]
        %v654 = vld [vmem:[%s234 + $0x68c] sm:$0xf]
        %v655 = vld [vmem:[%s234 + $0x690] sm:$0xf]
        %v656 = vld [vmem:[%s234 + $0x694] sm:$0xf]
        %v657 = vld [vmem:[%s234 + $0x698] sm:$0xf]
        %v658 = vld [vmem:[%s234 + $0x69c] sm:$0xf]
        %v659 = vld [vmem:[%s234 + $0x6a0] sm:$0xf]
        %v660 = vld [vmem:[%s234 + $0x6a4] sm:$0xf]
        %v661 = vld [vmem:[%s234 + $0x6a8] sm:$0xf]
        %v662 = vld [vmem:[%s234 + $0x6ac] sm:$0xf]
        %v663 = vld [vmem:[%s234 + $0x6b0] sm:$0xf]
        %v664 = vld [vmem:[%s234 + $0x6b4] sm:$0xf]
        %v665 = vld [vmem:[%s234 + $0x6b8] sm:$0xf]
        %v666 = vld [vmem:[%s234 + $0x6bc] sm:$0xf]
        %v667 = vld [vmem:[%s234 + $0x6c0] sm:$0xf]
        %v668 = vld [vmem:[%s234 + $0x6c4] sm:$0xf]
        %v669 = vld [vmem:[%s234 + $0x6c8] sm:$0xf]
        %v670 = vld [vmem:[%s234 + $0x6cc] sm:$0xf]
        %v671 = vld [vmem:[%s234 + $0x6d0] sm:$0xf]
        %v672 = vld [vmem:[%s234 + $0x6d4] sm:$0xf]
        %v673 = vld [vmem:[%s234 + $0x6d8] sm:$0xf]
        %v674 = vld [vmem:[%s234 + $0x6dc] sm:$0xf]
        %v675 = vld [vmem:[%s234 + $0x6e0] sm:$0xf]
        %v676 = vld [vmem:[%s234 + $0x6e4] sm:$0xf]
        %v677 = vld [vmem:[%s234 + $0x6e8] sm:$0xf]
        %v678 = vld [vmem:[%s234 + $0x6ec] sm:$0xf]
        %v679 = vld [vmem:[%s234 + $0x6f0] sm:$0xf]
        %v680 = vld [vmem:[%s234 + $0x6f4] sm:$0xf]
        %v681 = vld [vmem:[%s234 + $0x6f8] sm:$0xf]
        %v682 = vld [vmem:[%s234 + $0x6fc] sm:$0xf]
        %v683 = vld [vmem:[%s234 + $0x700] sm:$0xf]
        %v684 = vld [vmem:[%s234 + $0x704] sm:$0xf]
        %v685 = vld [vmem:[%s234 + $0x708] sm:$0xf]
        %v686 = vld [vmem:[%s234 + $0x70c] sm:$0xf]
        %v687 = vld [vmem:[%s234 + $0x710] sm:$0xf]
        %v688 = vld [vmem:[%s234 + $0x714] sm:$0xf]
        %v689 = vld [vmem:[%s234 + $0x718] sm:$0xf]
        %v690 = vld [vmem:[%s234 + $0x71c] sm:$0xf]
        %v691 = vld [vmem:[%s234 + $0x720] sm:$0xf]
        %v692 = vld [vmem:[%s234 + $0x724] sm:$0xf]
        %v693 = vld [vmem:[%s234 + $0x728] sm:$0xf]
        %v694 = vld [vmem:[%s234 + $0x72c] sm:$0xf]
        %v695 = vld [vmem:[%s234 + $0x730] sm:$0xf]
        %v696 = vld [vmem:[%s234 + $0x734] sm:$0xf]
        %v697 = vld [vmem:[%s234 + $0x738] sm:$0xf]
        %v698 = vld [vmem:[%s234 + $0x73c] sm:$0xf]
        %v699 = vld [vmem:[%s234 + $0x740] sm:$0xf]
        %v700 = vld [vmem:[%s234 + $0x744] sm:$0xf]
        %v701 = vld [vmem:[%s234 + $0x748] sm:$0xf]
        %v702 = vld [vmem:[%s234 + $0x74c] sm:$0xf]
        %v703 = vld [vmem:[%s234 + $0x750] sm:$0xf]
        %v704 = vld [vmem:[%s234 + $0x754] sm:$0xf]
        %v705 = vld [vmem:[%s234 + $0x758] sm:$0xf]
        %v706 = vld [vmem:[%s234 + $0x75c] sm:$0xf]
        %v707 = vld [vmem:[%s234 + $0x760] sm:$0xf]
        %v708 = vld [vmem:[%s234 + $0x764] sm:$0xf]
        %v709 = vld [vmem:[%s234 + $0x768] sm:$0xf]
        %v710 = vld [vmem:[%s234 + $0x76c] sm:$0xf]
        %v711 = vld [vmem:[%s234 + $0x770] sm:$0xf]
        %v712 = vld [vmem:[%s234 + $0x774] sm:$0xf]
        %v713 = vld [vmem:[%s234 + $0x778] sm:$0xf]
        %v714 = vld [vmem:[%s234 + $0x77c] sm:$0xf]
        %v715 = vld [vmem:[%s234 + $0x780] sm:$0xf]
        %v716 = vld [vmem:[%s234 + $0x784] sm:$0xf]
        %v717 = vld [vmem:[%s234 + $0x788] sm:$0xf]
        %v718 = vld [vmem:[%s234 + $0x78c] sm:$0xf]
        %v719 = vld [vmem:[%s234 + $0x790] sm:$0xf]
        %v720 = vld [vmem:[%s234 + $0x794] sm:$0xf]
        %v721 = vld [vmem:[%s234 + $0x798] sm:$0xf]
        %v722 = vld [vmem:[%s234 + $0x79c] sm:$0xf]
        %v723 = vld [vmem:[%s234 + $0x7a0] sm:$0xf]
        %v724 = vld [vmem:[%s234 + $0x7a4] sm:$0xf]
        %v725 = vld [vmem:[%s234 + $0x7a8] sm:$0xf]
        %v726 = vld [vmem:[%s234 + $0x7ac] sm:$0xf]
        %v727 = vld [vmem:[%s234 + $0x7b0] sm:$0xf]
        %v728 = vld [vmem:[%s234 + $0x7b4] sm:$0xf]
        %v729 = vld [vmem:[%s234 + $0x7b8] sm:$0xf]
        %v730 = vld [vmem:[%s234 + $0x7bc] sm:$0xf]
        %v731 = vld [vmem:[%s234 + $0x7c0] sm:$0xf]
        %v732 = vld [vmem:[%s234 + $0x7c4] sm:$0xf]
        %v733 = vld [vmem:[%s234 + $0x7c8] sm:$0xf]
        %v734 = vld [vmem:[%s234 + $0x7cc] sm:$0xf]
        %v735 = vld [vmem:[%s234 + $0x7d0] sm:$0xf]
        %v736 = vld [vmem:[%s234 + $0x7d4] sm:$0xf]
        %v737 = vld [vmem:[%s234 + $0x7d8] sm:$0xf]
        %v738 = vld [vmem:[%s234 + $0x7dc] sm:$0xf]
        %v739 = vld [vmem:[%s234 + $0x7e0] sm:$0xf]
        %v740 = vld [vmem:[%s234 + $0x7e4] sm:$0xf]
        %v741 = vld [vmem:[%s234 + $0x7e8] sm:$0xf]
        %v742 = vld [vmem:[%s234 + $0x7ec] sm:$0xf]
        %v743 = vld [vmem:[%s234 + $0x7f0] sm:$0xf]
        %v744 = vld [vmem:[%s234 + $0x7f4] sm:$0xf]
        %v745 = vld [vmem:[%s234 + $0x7f8] sm:$0xf]
        %v746 = vld [vmem:[%s234 + $0x7fc] sm:$0xf]
        %v747 = vld [vmem:[%s234 + $0x800] sm:$0xf]
        %v748 = vld [vmem:[%s234 + $0x804] sm:$0xf]
        %v749 = vld [vmem:[%s234 + $0x808] sm:$0xf]
        %v750 = vld [vmem:[%s234 + $0x80c] sm:$0xf]
        %v751 = vld [vmem:[%s234 + $0x810] sm:$0xf]
        %v752 = vld [vmem:[%s234 + $0x814] sm:$0xf]
        %v753 = vld [vmem:[%s234 + $0x818] sm:$0xf]
        %v754 = vld [vmem:[%s234 + $0x81c] sm:$0xf]
        %v755 = vld [vmem:[%s234 + $0x820] sm:$0xf]
        %v756 = vld [vmem:[%s234 + $0x824] sm:$0xf]
        %v757 = vld [vmem:[%s234 + $0x828] sm:$0xf]
        %v758 = vld [vmem:[%s234 + $0x82c] sm:$0xf]
        %v759 = vld [vmem:[%s234 + $0x830] sm:$0xf]
        %v760 = vld [vmem:[%s234 + $0x834] sm:$0xf]
        %v761 = vld [vmem:[%s234 + $0x838] sm:$0xf]
        %v762 = vld [vmem:[%s234 + $0x83c] sm:$0xf]
        %v763 = vld [vmem:[%s234 + $0x840] sm:$0xf]
        %v764 = vld [vmem:[%s234 + $0x844] sm:$0xf]
        %v765 = vld [vmem:[%s234 + $0x848] sm:$0xf]
        %v766 = vld [vmem:[%s234 + $0x84c] sm:$0xf]
        %v767 = vld [vmem:[%s234 + $0x850] sm:$0xf]
        %v768 = vld [vmem:[%s234 + $0x854] sm:$0xf]
        %v769 = vld [vmem:[%s234 + $0x858] sm:$0xf]
        %v770 = vld [vmem:[%s234 + $0x85c] sm:$0xf]
        %v771 = vld [vmem:[%s234 + $0x860] sm:$0xf]
        %v772 = vld [vmem:[%s234 + $0x864] sm:$0xf]
        %v773 = vld [vmem:[%s234 + $0x868] sm:$0xf]
        %v774 = vld [vmem:[%s234 + $0x86c] sm:$0xf]
        %v775 = vld [vmem:[%s234 + $0x870] sm:$0xf]
        %v776 = vld [vmem:[%s234 + $0x874] sm:$0xf]
        %v777 = vld [vmem:[%s234 + $0x878] sm:$0xf]
        %v778 = vld [vmem:[%s234 + $0x87c] sm:$0xf]
        %v779 = vld [vmem:[%s234 + $0x880] sm:$0xf]
        %v780 = vld [vmem:[%s234 + $0x884] sm:$0xf]
        %v781 = vld [vmem:[%s234 + $0x888] sm:$0xf]
        %v782 = vld [vmem:[%s234 + $0x88c] sm:$0xf]
        %v783 = vld [vmem:[%s234 + $0x890] sm:$0xf]
        %v784 = vld [vmem:[%s234 + $0x894] sm:$0xf]
        %v785 = vld [vmem:[%s234 + $0x898] sm:$0xf]
        %v786 = vld [vmem:[%s234 + $0x89c] sm:$0xf]
        %v787 = vld [vmem:[%s234 + $0x8a0] sm:$0xf]
        %v788 = vld [vmem:[%s234 + $0x8a4] sm:$0xf]
        %v789 = vld [vmem:[%s234 + $0x8a8] sm:$0xf]
        %v790 = vld [vmem:[%s234 + $0x8ac] sm:$0xf]
        %v791 = vld [vmem:[%s234 + $0x8b0] sm:$0xf]
        %v792 = vld [vmem:[%s234 + $0x8b4] sm:$0xf]
        %v793 = vld [vmem:[%s234 + $0x8b8] sm:$0xf]
        %v794 = vld [vmem:[%s234 + $0x8bc] sm:$0xf]
        %v795 = vld [vmem:[%s234 + $0x8c0] sm:$0xf]
        %v796 = vld [vmem:[%s234 + $0x8c4] sm:$0xf]
        %v797 = vld [vmem:[%s234 + $0x8c8] sm:$0xf]
        %v798 = vld [vmem:[%s234 + $0x8cc] sm:$0xf]
        %v799 = vld [vmem:[%s234 + $0x8d0] sm:$0xf]
        %v800 = vld [vmem:[%s234 + $0x8d4] sm:$0xf]
        %v801 = vld [vmem:[%s234 + $0x8d8] sm:$0xf]
        %v802 = vld [vmem:[%s234 + $0x8dc] sm:$0xf]
        %v803 = vld [vmem:[%s234 + $0x8e0] sm:$0xf]
        %v804 = vld [vmem:[%s234 + $0x8e4] sm:$0xf]
        %v805 = vld [vmem:[%s234 + $0x8e8] sm:$0xf]
        %v806 = vld [vmem:[%s234 + $0x8ec] sm:$0xf]
        %v807 = vld [vmem:[%s234 + $0x8f0] sm:$0xf]
        %v808 = vld [vmem:[%s234 + $0x8f4] sm:$0xf]
        %v809 = vld [vmem:[%s234 + $0x8f8] sm:$0xf]
        %v810 = vld [vmem:[%s234 + $0x8fc] sm:$0xf]
        %v811 = vld [vmem:[%s234 + $0x900] sm:$0xf]
        %v812 = vld [vmem:[%s234 + $0x904] sm:$0xf]
        %v813 = vld [vmem:[%s234 + $0x908] sm:$0xf]
        %v814 = vld [vmem:[%s234 + $0x90c] sm:$0xf]
        %v815 = vld [vmem:[%s234 + $0x910] sm:$0xf]
        %v816 = vld [vmem:[%s234 + $0x914] sm:$0xf]
        %v817 = vld [vmem:[%s234 + $0x918] sm:$0xf]
        %v818 = vld [vmem:[%s234 + $0x91c] sm:$0xf]
        %v819 = vld [vmem:[%s234 + $0x920] sm:$0xf]
        %v820 = vld [vmem:[%s234 + $0x924] sm:$0xf]
        %v821 = vld [vmem:[%s234 + $0x928] sm:$0xf]
        %v822 = vld [vmem:[%s234 + $0x92c] sm:$0xf]
        %v823 = vld [vmem:[%s234 + $0x930] sm:$0xf]
        %v824 = vld [vmem:[%s234 + $0x934] sm:$0xf]
        %v825 = vld [vmem:[%s234 + $0x938] sm:$0xf]
        %v826 = vld [vmem:[%s234 + $0x93c] sm:$0xf]
        %v827 = vld [vmem:[%s234 + $0x940] sm:$0xf]
        %v828 = vld [vmem:[%s234 + $0x944] sm:$0xf]
        %v829 = vld [vmem:[%s234 + $0x948] sm:$0xf]
        %v830 = vld [vmem:[%s234 + $0x94c] sm:$0xf]
        %v831 = vld [vmem:[%s234 + $0x950] sm:$0xf]
        %v832 = vld [vmem:[%s234 + $0x954] sm:$0xf]
        %v833 = vld [vmem:[%s234 + $0x958] sm:$0xf]
        %v834 = vld [vmem:[%s234 + $0x95c] sm:$0xf]
        %v835 = vld [vmem:[%s234 + $0x960] sm:$0xf]
        %v836 = vld [vmem:[%s234 + $0x964] sm:$0xf]
        %v837 = vld [vmem:[%s234 + $0x968] sm:$0xf]
        %v838 = vld [vmem:[%s234 + $0x96c] sm:$0xf]
        %v839 = vld [vmem:[%s234 + $0x970] sm:$0xf]
        %v840 = vld [vmem:[%s234 + $0x974] sm:$0xf]
        %v841 = vld [vmem:[%s234 + $0x978] sm:$0xf]
        %v842 = vld [vmem:[%s234 + $0x97c] sm:$0xf]
        %v843 = vld [vmem:[%s234 + $0x980] sm:$0xf]
        %v844 = vld [vmem:[%s234 + $0x984] sm:$0xf]
        %v845 = vld [vmem:[%s234 + $0x988] sm:$0xf]
        %v846 = vld [vmem:[%s234 + $0x98c] sm:$0xf]
        %v847 = vld [vmem:[%s234 + $0x990] sm:$0xf]
        %v848 = vld [vmem:[%s234 + $0x994] sm:$0xf]
        %v849 = vld [vmem:[%s234 + $0x998] sm:$0xf]
        %v850 = vld [vmem:[%s234 + $0x99c] sm:$0xf]
        %v851 = vld [vmem:[%s234 + $0x9a0] sm:$0xf]
        %v852 = vld [vmem:[%s234 + $0x9a4] sm:$0xf]
        %v853 = vld [vmem:[%s234 + $0x9a8] sm:$0xf]
        %v854 = vld [vmem:[%s234 + $0x9ac] sm:$0xf]
        %v855 = vld [vmem:[%s234 + $0x9b0] sm:$0xf]
        %v856 = vld [vmem:[%s234 + $0x9b4] sm:$0xf]
        %v857 = vld [vmem:[%s234 + $0x9b8] sm:$0xf]
        %v858 = vld [vmem:[%s234 + $0x9bc] sm:$0xf]
        %v859 = vld [vmem:[%s234 + $0x9c0] sm:$0xf]
        %v860 = vld [vmem:[%s234 + $0x9c4] sm:$0xf]
        %v861 = vld [vmem:[%s234 + $0x9c8] sm:$0xf]
        %v862 = vld [vmem:[%s234 + $0x9cc] sm:$0xf]
        %v863 = vld [vmem:[%s234 + $0x9d0] sm:$0xf]
        %v864 = vld [vmem:[%s234 + $0x9d4] sm:$0xf]
        %v865 = vld [vmem:[%s234 + $0x9d8] sm:$0xf]
        %v866 = vld [vmem:[%s234 + $0x9dc] sm:$0xf]
        %v867 = vld [vmem:[%s234 + $0x9e0] sm:$0xf]
        %v868 = vld [vmem:[%s234 + $0x9e4] sm:$0xf]
        %v869 = vld [vmem:[%s234 + $0x9e8] sm:$0xf]
        %v870 = vld [vmem:[%s234 + $0x9ec] sm:$0xf]
        %v871 = vld [vmem:[%s234 + $0x9f0] sm:$0xf]
        %v872 = vld [vmem:[%s234 + $0x9f4] sm:$0xf]
        %v873 = vld [vmem:[%s234 + $0x9f8] sm:$0xf]
        %v874 = vld [vmem:[%s234 + $0x9fc] sm:$0xf]
        %v875 = vld [vmem:[%s234 + $0xa00] sm:$0xf]
        %v876 = vld [vmem:[%s234 + $0xa04] sm:$0xf]
        %v877 = vld [vmem:[%s234 + $0xa08] sm:$0xf]
        %v878 = vld [vmem:[%s234 + $0xa0c] sm:$0xf]
        %v879 = vld [vmem:[%s234 + $0xa10] sm:$0xf]
        %v880 = vld [vmem:[%s234 + $0xa14] sm:$0xf]
        %v881 = vld [vmem:[%s234 + $0xa18] sm:$0xf]
        %v882 = vld [vmem:[%s234 + $0xa1c] sm:$0xf]
        %v883 = vld [vmem:[%s234 + $0xa20] sm:$0xf]
        %v884 = vld [vmem:[%s234 + $0xa24] sm:$0xf]
        %v885 = vld [vmem:[%s234 + $0xa28] sm:$0xf]
        %v886 = vld [vmem:[%s234 + $0xa2c] sm:$0xf]
        %v887 = vld [vmem:[%s234 + $0xa30] sm:$0xf]
        %v888 = vld [vmem:[%s234 + $0xa34] sm:$0xf]
        %v889 = vld [vmem:[%s234 + $0xa38] sm:$0xf]
        %v890 = vld [vmem:[%s234 + $0xa3c] sm:$0xf]
        %v891 = vld [vmem:[%s234 + $0xa40] sm:$0xf]
        %v892 = vld [vmem:[%s234 + $0xa44] sm:$0xf]
        %v893 = vld [vmem:[%s234 + $0xa48] sm:$0xf]
        %v894 = vld [vmem:[%s234 + $0xa4c] sm:$0xf]
        %v895 = vld [vmem:[%s234 + $0xa50] sm:$0xf]
        %v896 = vld [vmem:[%s234 + $0xa54] sm:$0xf]
        %v897 = vld [vmem:[%s234 + $0xa58] sm:$0xf]
        %v898 = vld [vmem:[%s234 + $0xa5c] sm:$0xf]
        %v899 = vld [vmem:[%s234 + $0xa60] sm:$0xf]
        %v900 = vld [vmem:[%s234 + $0xa64] sm:$0xf]
        %v901 = vld [vmem:[%s234 + $0xa68] sm:$0xf]
        %v902 = vld [vmem:[%s234 + $0xa6c] sm:$0xf]
        %v903 = vld [vmem:[%s234 + $0xa70] sm:$0xf]
        %v904 = vld [vmem:[%s234 + $0xa74] sm:$0xf]
        %v905 = vld [vmem:[%s234 + $0xa78] sm:$0xf]
        %v906 = vld [vmem:[%s234 + $0xa7c] sm:$0xf]
        %v907 = vld [vmem:[%s234 + $0xa80] sm:$0xf]
        %v908 = vld [vmem:[%s234 + $0xa84] sm:$0xf]
        %v909 = vld [vmem:[%s234 + $0xa88] sm:$0xf]
        %v910 = vld [vmem:[%s234 + $0xa8c] sm:$0xf]
        %v911 = vld [vmem:[%s234 + $0xa90] sm:$0xf]
        %v912 = vld [vmem:[%s234 + $0xa94] sm:$0xf]
        %v913 = vld [vmem:[%s234 + $0xa98] sm:$0xf]
        %v914 = vld [vmem:[%s234 + $0xa9c] sm:$0xf]
        %v915 = vld [vmem:[%s234 + $0xaa0] sm:$0xf]
        %v916 = vld [vmem:[%s234 + $0xaa4] sm:$0xf]
        %v917 = vld [vmem:[%s234 + $0xaa8] sm:$0xf]
        %v918 = vld [vmem:[%s234 + $0xaac] sm:$0xf]
        %v919 = vld [vmem:[%s234 + $0xab0] sm:$0xf]
        %v920 = vld [vmem:[%s234 + $0xab4] sm:$0xf]
        %v921 = vld [vmem:[%s234 + $0xab8] sm:$0xf]
        %v922 = vld [vmem:[%s234 + $0xabc] sm:$0xf]
        %v923 = vld [vmem:[%s234 + $0xac0] sm:$0xf]
        %v924 = vld [vmem:[%s234 + $0xac4] sm:$0xf]
        %v925 = vld [vmem:[%s234 + $0xac8] sm:$0xf]
        %v926 = vld [vmem:[%s234 + $0xacc] sm:$0xf]
        %v927 = vld [vmem:[%s234 + $0xad0] sm:$0xf]
        %v928 = vld [vmem:[%s234 + $0xad4] sm:$0xf]
        %v929 = vld [vmem:[%s234 + $0xad8] sm:$0xf]
        %v930 = vld [vmem:[%s234 + $0xadc] sm:$0xf]
        %v931 = vld [vmem:[%s234 + $0xae0] sm:$0xf]
        %v932 = vld [vmem:[%s234 + $0xae4] sm:$0xf]
        %v933 = vld [vmem:[%s234 + $0xae8] sm:$0xf]
        %v934 = vld [vmem:[%s234 + $0xaec] sm:$0xf]
        %v935 = vld [vmem:[%s234 + $0xaf0] sm:$0xf]
        %v936 = vld [vmem:[%s234 + $0xaf4] sm:$0xf]
        %v937 = vld [vmem:[%s234 + $0xaf8] sm:$0xf]
        %v938 = vld [vmem:[%s234 + $0xafc] sm:$0xf]
        %v939 = vld [vmem:[%s234 + $0xb00] sm:$0xf]
        %v940 = vld [vmem:[%s234 + $0xb04] sm:$0xf]
        %v941 = vld [vmem:[%s234 + $0xb08] sm:$0xf]
        %v942 = vld [vmem:[%s234 + $0xb0c] sm:$0xf]
        %v943 = vld [vmem:[%s234 + $0xb10] sm:$0xf]
        %v944 = vld [vmem:[%s234 + $0xb14] sm:$0xf]
        %v945 = vld [vmem:[%s234 + $0xb18] sm:$0xf]
        %v946 = vld [vmem:[%s234 + $0xb1c] sm:$0xf]
        %v947 = vld [vmem:[%s234 + $0xb20] sm:$0xf]
        %v948 = vld [vmem:[%s234 + $0xb24] sm:$0xf]
        %v949 = vld [vmem:[%s234 + $0xb28] sm:$0xf]
        %v950 = vld [vmem:[%s234 + $0xb2c] sm:$0xf]
        %v951 = vld [vmem:[%s234 + $0xb30] sm:$0xf]
        %v952 = vld [vmem:[%s234 + $0xb34] sm:$0xf]
        %v953 = vld [vmem:[%s234 + $0xb38] sm:$0xf]
        %v954 = vld [vmem:[%s234 + $0xb3c] sm:$0xf]
        %v955 = vld [vmem:[%s234 + $0xb40] sm:$0xf]
        %v956 = vld [vmem:[%s234 + $0xb44] sm:$0xf]
        %v957 = vld [vmem:[%s234 + $0xb48] sm:$0xf]
        %v958 = vld [vmem:[%s234 + $0xb4c] sm:$0xf]
        %v959 = vld [vmem:[%s234 + $0xb50] sm:$0xf]
        %v960 = vld [vmem:[%s234 + $0xb54] sm:$0xf]
        %v961 = vld [vmem:[%s234 + $0xb58] sm:$0xf]
        %v962 = vld [vmem:[%s234 + $0xb5c] sm:$0xf]
        %v963 = vld [vmem:[%s234 + $0xb60] sm:$0xf]
        %v964 = vld [vmem:[%s234 + $0xb64] sm:$0xf]
        %v965 = vld [vmem:[%s234 + $0xb68] sm:$0xf]
        %v966 = vld [vmem:[%s234 + $0xb6c] sm:$0xf]
        %v967 = vld [vmem:[%s234 + $0xb70] sm:$0xf]
        %v968 = vld [vmem:[%s234 + $0xb74] sm:$0xf]
        %v969 = vld [vmem:[%s234 + $0xb78] sm:$0xf]
        %v970 = vld [vmem:[%s234 + $0xb7c] sm:$0xf]
        %v971 = vld [vmem:[%s234 + $0xb80] sm:$0xf]
        %v972 = vld [vmem:[%s234 + $0xb84] sm:$0xf]
        %v973 = vld [vmem:[%s234 + $0xb88] sm:$0xf]
        %v974 = vld [vmem:[%s234 + $0xb8c] sm:$0xf]
        %v975 = vld [vmem:[%s234 + $0xb90] sm:$0xf]
        %v976 = vld [vmem:[%s234 + $0xb94] sm:$0xf]
        %v977 = vld [vmem:[%s234 + $0xb98] sm:$0xf]
        %v978 = vld [vmem:[%s234 + $0xb9c] sm:$0xf]
        %v979 = vld [vmem:[%s234 + $0xba0] sm:$0xf]
        %v980 = vld [vmem:[%s234 + $0xba4] sm:$0xf]
        %v981 = vld [vmem:[%s234 + $0xba8] sm:$0xf]
        %v982 = vld [vmem:[%s234 + $0xbac] sm:$0xf]
        %v983 = vld [vmem:[%s234 + $0xbb0] sm:$0xf]
        %v984 = vld [vmem:[%s234 + $0xbb4] sm:$0xf]
        %v985 = vld [vmem:[%s234 + $0xbb8] sm:$0xf]
        %v986 = vld [vmem:[%s234 + $0xbbc] sm:$0xf]
        %v987 = vld [vmem:[%s234 + $0xbc0] sm:$0xf]
        %v988 = vld [vmem:[%s234 + $0xbc4] sm:$0xf]
        %v989 = vld [vmem:[%s234 + $0xbc8] sm:$0xf]
        %v990 = vld [vmem:[%s234 + $0xbcc] sm:$0xf]
        %v991 = vld [vmem:[%s234 + $0xbd0] sm:$0xf]
        %v992 = vld [vmem:[%s234 + $0xbd4] sm:$0xf]
        %v993 = vld [vmem:[%s234 + $0xbd8] sm:$0xf]
        %v994 = vld [vmem:[%s234 + $0xbdc] sm:$0xf]
        %v995 = vld [vmem:[%s234 + $0xbe0] sm:$0xf]
        %v996 = vld [vmem:[%s234 + $0xbe4] sm:$0xf]
        %v997 = vld [vmem:[%s234 + $0xbe8] sm:$0xf]
        %v998 = vld [vmem:[%s234 + $0xbec] sm:$0xf]
        %v999 = vld [vmem:[%s234 + $0xbf0] sm:$0xf]
        %v1000 = vld [vmem:[%s234 + $0xbf4] sm:$0xf]
        %v1001 = vld [vmem:[%s234 + $0xbf8] sm:$0xf]
        %v1002 = vld [vmem:[%s234 + $0xbfc] sm:$0xf]
        %v1003 = vld [vmem:[%s234 + $0xc00] sm:$0xf]
        %v1004 = vld [vmem:[%s234 + $0xc04] sm:$0xf]
        %v1005 = vld [vmem:[%s234 + $0xc08] sm:$0xf]
        %v1006 = vld [vmem:[%s234 + $0xc0c] sm:$0xf]
        %v1007 = vld [vmem:[%s234 + $0xc10] sm:$0xf]
        %v1008 = vld [vmem:[%s234 + $0xc14] sm:$0xf]
        %v1009 = vld [vmem:[%s234 + $0xc18] sm:$0xf]
        %v1010 = vld [vmem:[%s234 + $0xc1c] sm:$0xf]
        %v1011 = vld [vmem:[%s234 + $0xc20] sm:$0xf]
        %v1012 = vld [vmem:[%s234 + $0xc24] sm:$0xf]
        %v1013 = vld [vmem:[%s234 + $0xc28] sm:$0xf]
        %v1014 = vld [vmem:[%s234 + $0xc2c] sm:$0xf]
        %v1015 = vld [vmem:[%s234 + $0xc30] sm:$0xf]
        %v1016 = vld [vmem:[%s234 + $0xc34] sm:$0xf]
        %v1017 = vld [vmem:[%s234 + $0xc38] sm:$0xf]
        %v1018 = vld [vmem:[%s234 + $0xc3c] sm:$0xf]
        %v1019 = vld [vmem:[#allocation2] sm:$0x3]
        %v1020 = vld [vmem:[%s197] sm:$0xff]
        %v1021 = vld [vmem:[%s197 + $0x8] sm:$0xff]
        %v1022 = vld [vmem:[%s197 + $0x10] sm:$0xff]
        %v1023 = vld [vmem:[%s197 + $0x18] sm:$0xff]
        %v1024 = vld [vmem:[%s197 + $0x20] sm:$0xff]
        %v1025 = vld [vmem:[%s197 + $0x28] sm:$0xff]
        %v1026 = vld [vmem:[%s197 + $0x30] sm:$0x1]
        %v1034 = vcombine.high %v1020, %v1020
        %v1036 = vunpack.c.l.s4 1966171168
        %v1037 = vunpack.c.0.s8 %v1036
        %v1038 = vlaneseq
        %v1039 = vshrl.u32 %v1038, 7
        %v1040 = vsub.s32 %v1037, %v1039
        %v1041 = vrot.slane %v1020, %v1040
        %v1043 = vunpack.c.l.s4 1966171168
        %v1044 = vunpack.c.0.s8 %v1043
        %v1045 = vlaneseq
        %v1046 = vshrl.u32 %v1045, 7
        %v1047 = vsub.s32 %v1044, %v1046
        %v1048 = vrot.slane %v1034, %v1047
        %v1049 = vcombine.high %v1041, %v1041
        %v1050 = vcombine.high %v1048, %v1048
        %v1052 = vunpack.c.l.s4 1966171168
        %v1053 = vunpack.c.0.s8 %v1052
        %v1054 = vlaneseq
        %v1055 = vshrl.u32 %v1054, 7
        %v1056 = vsub.s32 %v1053, %v1055
        %v1057 = vrot.slane %v1041, %v1056
        %v1059 = vunpack.c.l.s4 1966171168
        %v1060 = vunpack.c.0.s8 %v1059
        %v1061 = vlaneseq
        %v1062 = vshrl.u32 %v1061, 7
        %v1063 = vsub.s32 %v1060, %v1062
        %v1064 = vrot.slane %v1048, %v1063
        %v1066 = vunpack.c.l.s4 1966171168
        %v1067 = vunpack.c.0.s8 %v1066
        %v1068 = vlaneseq
        %v1069 = vshrl.u32 %v1068, 7
        %v1070 = vsub.s32 %v1067, %v1069
        %v1071 = vrot.slane %v1049, %v1070
        %v1073 = vunpack.c.l.s4 1966171168
        %v1074 = vunpack.c.0.s8 %v1073
        %v1075 = vlaneseq
        %v1076 = vshrl.u32 %v1075, 7
        %v1077 = vsub.s32 %v1074, %v1076
        %v1078 = vrot.slane %v1050, %v1077
        %v1079 = vcombine.high %v1057, %v1057
        %v1080 = vcombine.high %v1064, %v1064
        %v1081 = vcombine.high %v1071, %v1071
        %v1082 = vcombine.high %v1078, %v1078
        %v1083 = vcombine.high %v1021, %v1021
        %v1085 = vunpack.c.l.s4 1966171168
        %v1086 = vunpack.c.0.s8 %v1085
        %v1087 = vlaneseq
        %v1088 = vshrl.u32 %v1087, 7
        %v1089 = vsub.s32 %v1086, %v1088
        %v1090 = vrot.slane %v1021, %v1089
        %v1092 = vunpack.c.l.s4 1966171168
        %v1093 = vunpack.c.0.s8 %v1092
        %v1094 = vlaneseq
        %v1095 = vshrl.u32 %v1094, 7
        %v1096 = vsub.s32 %v1093, %v1095
        %v1097 = vrot.slane %v1083, %v1096
        %v1098 = vcombine.high %v1090, %v1090
        %v1099 = vcombine.high %v1097, %v1097
        %v1101 = vunpack.c.l.s4 1966171168
        %v1102 = vunpack.c.0.s8 %v1101
        %v1103 = vlaneseq
        %v1104 = vshrl.u32 %v1103, 7
        %v1105 = vsub.s32 %v1102, %v1104
        %v1106 = vrot.slane %v1090, %v1105
        %v1108 = vunpack.c.l.s4 1966171168
        %v1109 = vunpack.c.0.s8 %v1108
        %v1110 = vlaneseq
        %v1111 = vshrl.u32 %v1110, 7
        %v1112 = vsub.s32 %v1109, %v1111
        %v1113 = vrot.slane %v1097, %v1112
        %v1115 = vunpack.c.l.s4 1966171168
        %v1116 = vunpack.c.0.s8 %v1115
        %v1117 = vlaneseq
        %v1118 = vshrl.u32 %v1117, 7
        %v1119 = vsub.s32 %v1116, %v1118
        %v1120 = vrot.slane %v1098, %v1119
        %v1122 = vunpack.c.l.s4 1966171168
        %v1123 = vunpack.c.0.s8 %v1122
        %v1124 = vlaneseq
        %v1125 = vshrl.u32 %v1124, 7
        %v1126 = vsub.s32 %v1123, %v1125
        %v1127 = vrot.slane %v1099, %v1126
        %v1128 = vcombine.high %v1106, %v1106
        %v1129 = vcombine.high %v1113, %v1113
        %v1130 = vcombine.high %v1120, %v1120
        %v1131 = vcombine.high %v1127, %v1127
        %v1132 = vcombine.high %v1022, %v1022
        %v1134 = vunpack.c.l.s4 1966171168
        %v1135 = vunpack.c.0.s8 %v1134
        %v1136 = vlaneseq
        %v1137 = vshrl.u32 %v1136, 7
        %v1138 = vsub.s32 %v1135, %v1137
        %v1139 = vrot.slane %v1022, %v1138
        %v1141 = vunpack.c.l.s4 1966171168
        %v1142 = vunpack.c.0.s8 %v1141
        %v1143 = vlaneseq
        %v1144 = vshrl.u32 %v1143, 7
        %v1145 = vsub.s32 %v1142, %v1144
        %v1146 = vrot.slane %v1132, %v1145
        %v1147 = vcombine.high %v1139, %v1139
        %v1148 = vcombine.high %v1146, %v1146
        %v1150 = vunpack.c.l.s4 1966171168
        %v1151 = vunpack.c.0.s8 %v1150
        %v1152 = vlaneseq
        %v1153 = vshrl.u32 %v1152, 7
        %v1154 = vsub.s32 %v1151, %v1153
        %v1155 = vrot.slane %v1139, %v1154
        %v1157 = vunpack.c.l.s4 1966171168
        %v1158 = vunpack.c.0.s8 %v1157
        %v1159 = vlaneseq
        %v1160 = vshrl.u32 %v1159, 7
        %v1161 = vsub.s32 %v1158, %v1160
        %v1162 = vrot.slane %v1146, %v1161
        %v1164 = vunpack.c.l.s4 1966171168
        %v1165 = vunpack.c.0.s8 %v1164
        %v1166 = vlaneseq
        %v1167 = vshrl.u32 %v1166, 7
        %v1168 = vsub.s32 %v1165, %v1167
        %v1169 = vrot.slane %v1147, %v1168
        %v1171 = vunpack.c.l.s4 1966171168
        %v1172 = vunpack.c.0.s8 %v1171
        %v1173 = vlaneseq
        %v1174 = vshrl.u32 %v1173, 7
        %v1175 = vsub.s32 %v1172, %v1174
        %v1176 = vrot.slane %v1148, %v1175
        %v1177 = vcombine.high %v1155, %v1155
        %v1178 = vcombine.high %v1162, %v1162
        %v1179 = vcombine.high %v1169, %v1169
        %v1180 = vcombine.high %v1176, %v1176
        %v1181 = vcombine.high %v1023, %v1023
        %v1183 = vunpack.c.l.s4 1966171168
        %v1184 = vunpack.c.0.s8 %v1183
        %v1185 = vlaneseq
        %v1186 = vshrl.u32 %v1185, 7
        %v1187 = vsub.s32 %v1184, %v1186
        %v1188 = vrot.slane %v1023, %v1187
        %v1190 = vunpack.c.l.s4 1966171168
        %v1191 = vunpack.c.0.s8 %v1190
        %v1192 = vlaneseq
        %v1193 = vshrl.u32 %v1192, 7
        %v1194 = vsub.s32 %v1191, %v1193
        %v1195 = vrot.slane %v1181, %v1194
        %v1196 = vcombine.high %v1188, %v1188
        %v1197 = vcombine.high %v1195, %v1195
        %v1199 = vunpack.c.l.s4 1966171168
        %v1200 = vunpack.c.0.s8 %v1199
        %v1201 = vlaneseq
        %v1202 = vshrl.u32 %v1201, 7
        %v1203 = vsub.s32 %v1200, %v1202
        %v1204 = vrot.slane %v1188, %v1203
        %v1206 = vunpack.c.l.s4 1966171168
        %v1207 = vunpack.c.0.s8 %v1206
        %v1208 = vlaneseq
        %v1209 = vshrl.u32 %v1208, 7
        %v1210 = vsub.s32 %v1207, %v1209
        %v1211 = vrot.slane %v1195, %v1210
        %v1213 = vunpack.c.l.s4 1966171168
        %v1214 = vunpack.c.0.s8 %v1213
        %v1215 = vlaneseq
        %v1216 = vshrl.u32 %v1215, 7
        %v1217 = vsub.s32 %v1214, %v1216
        %v1218 = vrot.slane %v1196, %v1217
        %v1220 = vunpack.c.l.s4 1966171168
        %v1221 = vunpack.c.0.s8 %v1220
        %v1222 = vlaneseq
        %v1223 = vshrl.u32 %v1222, 7
        %v1224 = vsub.s32 %v1221, %v1223
        %v1225 = vrot.slane %v1197, %v1224
        %v1226 = vcombine.high %v1204, %v1204
        %v1227 = vcombine.high %v1211, %v1211
        %v1228 = vcombine.high %v1218, %v1218
        %v1229 = vcombine.high %v1225, %v1225
        %v1230 = vcombine.high %v1024, %v1024
        %v1232 = vunpack.c.l.s4 1966171168
        %v1233 = vunpack.c.0.s8 %v1232
        %v1234 = vlaneseq
        %v1235 = vshrl.u32 %v1234, 7
        %v1236 = vsub.s32 %v1233, %v1235
        %v1237 = vrot.slane %v1024, %v1236
        %v1239 = vunpack.c.l.s4 1966171168
        %v1240 = vunpack.c.0.s8 %v1239
        %v1241 = vlaneseq
        %v1242 = vshrl.u32 %v1241, 7
        %v1243 = vsub.s32 %v1240, %v1242
        %v1244 = vrot.slane %v1230, %v1243
        %v1245 = vcombine.high %v1237, %v1237
        %v1246 = vcombine.high %v1244, %v1244
        %v1248 = vunpack.c.l.s4 1966171168
        %v1249 = vunpack.c.0.s8 %v1248
        %v1250 = vlaneseq
        %v1251 = vshrl.u32 %v1250, 7
        %v1252 = vsub.s32 %v1249, %v1251
        %v1253 = vrot.slane %v1237, %v1252
        %v1255 = vunpack.c.l.s4 1966171168
        %v1256 = vunpack.c.0.s8 %v1255
        %v1257 = vlaneseq
        %v1258 = vshrl.u32 %v1257, 7
        %v1259 = vsub.s32 %v1256, %v1258
        %v1260 = vrot.slane %v1244, %v1259
        %v1262 = vunpack.c.l.s4 1966171168
        %v1263 = vunpack.c.0.s8 %v1262
        %v1264 = vlaneseq
        %v1265 = vshrl.u32 %v1264, 7
        %v1266 = vsub.s32 %v1263, %v1265
        %v1267 = vrot.slane %v1245, %v1266
        %v1269 = vunpack.c.l.s4 1966171168
        %v1270 = vunpack.c.0.s8 %v1269
        %v1271 = vlaneseq
        %v1272 = vshrl.u32 %v1271, 7
        %v1273 = vsub.s32 %v1270, %v1272
        %v1274 = vrot.slane %v1246, %v1273
        %v1275 = vcombine.high %v1253, %v1253
        %v1276 = vcombine.high %v1260, %v1260
        %v1277 = vcombine.high %v1267, %v1267
        %v1278 = vcombine.high %v1274, %v1274
        %v1279 = vcombine.high %v1025, %v1025
        %v1281 = vunpack.c.l.s4 1966171168
        %v1282 = vunpack.c.0.s8 %v1281
        %v1283 = vlaneseq
        %v1284 = vshrl.u32 %v1283, 7
        %v1285 = vsub.s32 %v1282, %v1284
        %v1286 = vrot.slane %v1025, %v1285
        %v1288 = vunpack.c.l.s4 1966171168
        %v1289 = vunpack.c.0.s8 %v1288
        %v1290 = vlaneseq
        %v1291 = vshrl.u32 %v1290, 7
        %v1292 = vsub.s32 %v1289, %v1291
        %v1293 = vrot.slane %v1279, %v1292
        %v1294 = vcombine.high %v1286, %v1286
        %v1295 = vcombine.high %v1293, %v1293
        %v1297 = vunpack.c.l.s4 1966171168
        %v1298 = vunpack.c.0.s8 %v1297
        %v1299 = vlaneseq
        %v1300 = vshrl.u32 %v1299, 7
        %v1301 = vsub.s32 %v1298, %v1300
        %v1302 = vrot.slane %v1286, %v1301
        %v1304 = vunpack.c.l.s4 1966171168
        %v1305 = vunpack.c.0.s8 %v1304
        %v1306 = vlaneseq
        %v1307 = vshrl.u32 %v1306, 7
        %v1308 = vsub.s32 %v1305, %v1307
        %v1309 = vrot.slane %v1293, %v1308
        %v1311 = vunpack.c.l.s4 1966171168
        %v1312 = vunpack.c.0.s8 %v1311
        %v1313 = vlaneseq
        %v1314 = vshrl.u32 %v1313, 7
        %v1315 = vsub.s32 %v1312, %v1314
        %v1316 = vrot.slane %v1294, %v1315
        %v1318 = vunpack.c.l.s4 1966171168
        %v1319 = vunpack.c.0.s8 %v1318
        %v1320 = vlaneseq
        %v1321 = vshrl.u32 %v1320, 7
        %v1322 = vsub.s32 %v1319, %v1321
        %v1323 = vrot.slane %v1295, %v1322
        %v1324 = vcombine.high %v1302, %v1302
        %v1325 = vcombine.high %v1309, %v1309
        %v1326 = vcombine.high %v1316, %v1316
        %v1327 = vcombine.high %v1323, %v1323
        %v1329 = vunpack.c.l.s4 1966171168
        %v1330 = vunpack.c.0.s8 %v1329
        %v1331 = vlaneseq
        %v1332 = vshrl.u32 %v1331, 7
        %v1333 = vsub.s32 %v1330, %v1332
        %v1334 = vrot.slane %v1026, %v1333
        %v1336 = vunpack.c.l.s4 1966171168
        %v1337 = vunpack.c.0.s8 %v1336
        %v1338 = vlaneseq
        %v1339 = vshrl.u32 %v1338, 7
        %v1340 = vsub.s32 %v1337, %v1339
        %v1341 = vrot.slane %v1334, %v1340
        %v2175 = vunpack.c.l.b16 %v235
        %v2176 = vunpack.c.l.b16 %v236
        %v2177 = vunpack.c.l.b16 %v237
        %v2178 = vunpack.c.l.b16 %v238
        %v2179 = vunpack.c.l.b16 %v239
        %v2180 = vunpack.c.l.b16 %v240
        %v2181 = vunpack.c.l.b16 %v241
        %v2182 = vunpack.c.l.b16 %v242
        %v2183 = vunpack.c.l.b16 %v243
        %v2184 = vunpack.c.l.b16 %v244
        %v2185 = vunpack.c.l.b16 %v245
        %v2186 = vunpack.c.l.b16 %v246
        %v2187 = vunpack.c.l.b16 %v247
        %v2188 = vunpack.c.l.b16 %v248
        %v2189 = vunpack.c.l.b16 %v249
        %v2190 = vunpack.c.l.b16 %v250
        %v2191 = vunpack.c.l.b16 %v251
        %v2192 = vunpack.c.l.b16 %v252
        %v2193 = vunpack.c.l.b16 %v253
        %v2194 = vunpack.c.l.b16 %v254
        %v2195 = vunpack.c.l.b16 %v255
        %v2196 = vunpack.c.l.b16 %v256
        %v2197 = vunpack.c.l.b16 %v257
        %v2198 = vunpack.c.l.b16 %v258
        %v2199 = vunpack.c.l.b16 %v259
        %v2200 = vunpack.c.l.b16 %v260
        %v2201 = vunpack.c.l.b16 %v261
        %v2202 = vunpack.c.l.b16 %v262
        %v2203 = vunpack.c.l.b16 %v263
        %v2204 = vunpack.c.l.b16 %v264
        %v2205 = vunpack.c.l.b16 %v265
        %v2206 = vunpack.c.l.b16 %v266
        %v2207 = vunpack.c.l.b16 %v267
        %v2208 = vunpack.c.l.b16 %v268
        %v2209 = vunpack.c.l.b16 %v269
        %v2210 = vunpack.c.l.b16 %v270
        %v2211 = vunpack.c.l.b16 %v271
        %v2212 = vunpack.c.l.b16 %v272
        %v2213 = vunpack.c.l.b16 %v273
        %v2214 = vunpack.c.l.b16 %v274
        %v2215 = vunpack.c.l.b16 %v275
        %v2216 = vunpack.c.l.b16 %v276
        %v2217 = vunpack.c.l.b16 %v277
        %v2218 = vunpack.c.l.b16 %v278
        %v2219 = vunpack.c.l.b16 %v279
        %v2220 = vunpack.c.l.b16 %v280
        %v2221 = vunpack.c.l.b16 %v281
        %v2222 = vunpack.c.l.b16 %v282
        %v2223 = vunpack.c.l.b16 %v283
        %v2224 = vunpack.c.l.b16 %v284
        %v2225 = vunpack.c.l.b16 %v285
        %v2226 = vunpack.c.l.b16 %v286
        %v2227 = vunpack.c.l.b16 %v287
        %v2228 = vunpack.c.l.b16 %v288
        %v2229 = vunpack.c.l.b16 %v289
        %v2230 = vunpack.c.l.b16 %v290
        %v2231 = vunpack.c.l.b16 %v291
        %v2232 = vunpack.c.l.b16 %v292
        %v2233 = vunpack.c.l.b16 %v293
        %v2234 = vunpack.c.l.b16 %v294
        %v2235 = vunpack.c.l.b16 %v295
        %v2236 = vunpack.c.l.b16 %v296
        %v2237 = vunpack.c.l.b16 %v297
        %v2238 = vunpack.c.l.b16 %v298
        %v2239 = vunpack.c.l.b16 %v299
        %v2240 = vunpack.c.l.b16 %v300
        %v2241 = vunpack.c.l.b16 %v301
        %v2242 = vunpack.c.l.b16 %v302
        %v2243 = vunpack.c.l.b16 %v303
        %v2244 = vunpack.c.l.b16 %v304
        %v2245 = vunpack.c.l.b16 %v305
        %v2246 = vunpack.c.l.b16 %v306
        %v2247 = vunpack.c.l.b16 %v307
        %v2248 = vunpack.c.l.b16 %v308
        %v2249 = vunpack.c.l.b16 %v309
        %v2250 = vunpack.c.l.b16 %v310
        %v2251 = vunpack.c.l.b16 %v311
        %v2252 = vunpack.c.l.b16 %v312
        %v2253 = vunpack.c.l.b16 %v313
        %v2254 = vunpack.c.l.b16 %v314
        %v2255 = vunpack.c.l.b16 %v315
        %v2256 = vunpack.c.l.b16 %v316
        %v2257 = vunpack.c.l.b16 %v317
        %v2258 = vunpack.c.l.b16 %v318
        %v2259 = vunpack.c.l.b16 %v319
        %v2260 = vunpack.c.l.b16 %v320
        %v2261 = vunpack.c.l.b16 %v321
        %v2262 = vunpack.c.l.b16 %v322
        %v2263 = vunpack.c.l.b16 %v323
        %v2264 = vunpack.c.l.b16 %v324
        %v2265 = vunpack.c.l.b16 %v325
        %v2266 = vunpack.c.l.b16 %v326
        %v2267 = vunpack.c.l.b16 %v327
        %v2268 = vunpack.c.l.b16 %v328
        %v2269 = vunpack.c.l.b16 %v329
        %v2270 = vunpack.c.l.b16 %v330
        %v2271 = vunpack.c.l.b16 %v331
        %v2272 = vunpack.c.l.b16 %v332
        %v2273 = vunpack.c.l.b16 %v333
        %v2274 = vunpack.c.l.b16 %v334
        %v2275 = vunpack.c.l.b16 %v335
        %v2276 = vunpack.c.l.b16 %v336
        %v2277 = vunpack.c.l.b16 %v337
        %v2278 = vunpack.c.l.b16 %v338
        %v2279 = vunpack.c.l.b16 %v339
        %v2280 = vunpack.c.l.b16 %v340
        %v2281 = vunpack.c.l.b16 %v341
        %v2282 = vunpack.c.l.b16 %v342
        %v2283 = vunpack.c.l.b16 %v343
        %v2284 = vunpack.c.l.b16 %v344
        %v2285 = vunpack.c.l.b16 %v345
        %v2286 = vunpack.c.l.b16 %v346
        %v2287 = vunpack.c.l.b16 %v347
        %v2288 = vunpack.c.l.b16 %v348
        %v2289 = vunpack.c.l.b16 %v349
        %v2290 = vunpack.c.l.b16 %v350
        %v2291 = vunpack.c.l.b16 %v351
        %v2292 = vunpack.c.l.b16 %v352
        %v2293 = vunpack.c.l.b16 %v353
        %v2294 = vunpack.c.l.b16 %v354
        %v2295 = vunpack.c.l.b16 %v355
        %v2296 = vunpack.c.l.b16 %v356
        %v2297 = vunpack.c.l.b16 %v357
        %v2298 = vunpack.c.l.b16 %v358
        %v2299 = vunpack.c.l.b16 %v359
        %v2300 = vunpack.c.l.b16 %v360
        %v2301 = vunpack.c.l.b16 %v361
        %v2302 = vunpack.c.l.b16 %v362
        %v2303 = vunpack.c.l.b16 %v363
        %v2304 = vunpack.c.l.b16 %v364
        %v2305 = vunpack.c.l.b16 %v365
        %v2306 = vunpack.c.l.b16 %v366
        %v2307 = vunpack.c.l.b16 %v367
        %v2308 = vunpack.c.l.b16 %v368
        %v2309 = vunpack.c.l.b16 %v369
        %v2310 = vunpack.c.l.b16 %v370
        %v2311 = vunpack.c.l.b16 %v371
        %v2312 = vunpack.c.l.b16 %v372
        %v2313 = vunpack.c.l.b16 %v373
        %v2314 = vunpack.c.l.b16 %v374
        %v2315 = vunpack.c.l.b16 %v375
        %v2316 = vunpack.c.l.b16 %v376
        %v2317 = vunpack.c.l.b16 %v377
        %v2318 = vunpack.c.l.b16 %v378
        %v2319 = vunpack.c.l.b16 %v379
        %v2320 = vunpack.c.l.b16 %v380
        %v2321 = vunpack.c.l.b16 %v381
        %v2322 = vunpack.c.l.b16 %v382
        %v2323 = vunpack.c.l.b16 %v383
        %v2324 = vunpack.c.l.b16 %v384
        %v2325 = vunpack.c.l.b16 %v385
        %v2326 = vunpack.c.l.b16 %v386
        %v2327 = vunpack.c.l.b16 %v387
        %v2328 = vunpack.c.l.b16 %v388
        %v2329 = vunpack.c.l.b16 %v389
        %v2330 = vunpack.c.l.b16 %v390
        %v2331 = vunpack.c.l.b16 %v391
        %v2332 = vunpack.c.l.b16 %v392
        %v2333 = vunpack.c.l.b16 %v393
        %v2334 = vunpack.c.l.b16 %v394
        %v2335 = vunpack.c.l.b16 %v395
        %v2336 = vunpack.c.l.b16 %v396
        %v2337 = vunpack.c.l.b16 %v397
        %v2338 = vunpack.c.l.b16 %v398
        %v2339 = vunpack.c.l.b16 %v399
        %v2340 = vunpack.c.l.b16 %v400
        %v2341 = vunpack.c.l.b16 %v401
        %v2342 = vunpack.c.l.b16 %v402
        %v2343 = vunpack.c.l.b16 %v403
        %v2344 = vunpack.c.l.b16 %v404
        %v2345 = vunpack.c.l.b16 %v405
        %v2346 = vunpack.c.l.b16 %v406
        %v2347 = vunpack.c.l.b16 %v407
        %v2348 = vunpack.c.l.b16 %v408
        %v2349 = vunpack.c.l.b16 %v409
        %v2350 = vunpack.c.l.b16 %v410
        %v2351 = vunpack.c.l.b16 %v411
        %v2352 = vunpack.c.l.b16 %v412
        %v2353 = vunpack.c.l.b16 %v413
        %v2354 = vunpack.c.l.b16 %v414
        %v2355 = vunpack.c.l.b16 %v415
        %v2356 = vunpack.c.l.b16 %v416
        %v2357 = vunpack.c.l.b16 %v417
        %v2358 = vunpack.c.l.b16 %v418
        %v2359 = vunpack.c.l.b16 %v419
        %v2360 = vunpack.c.l.b16 %v420
        %v2361 = vunpack.c.l.b16 %v421
        %v2362 = vunpack.c.l.b16 %v422
        %v2363 = vunpack.c.l.b16 %v423
        %v2364 = vunpack.c.l.b16 %v424
        %v2365 = vunpack.c.l.b16 %v425
        %v2366 = vunpack.c.l.b16 %v426
        %v2367 = vunpack.c.l.b16 %v427
        %v2368 = vunpack.c.l.b16 %v428
        %v2369 = vunpack.c.l.b16 %v429
        %v2370 = vunpack.c.l.b16 %v430
        %v2371 = vunpack.c.l.b16 %v431
        %v2372 = vunpack.c.l.b16 %v432
        %v2373 = vunpack.c.l.b16 %v433
        %v2374 = vunpack.c.l.b16 %v434
        %v2375 = vunpack.c.l.b16 %v435
        %v2376 = vunpack.c.l.b16 %v436
        %v2377 = vunpack.c.l.b16 %v437
        %v2378 = vunpack.c.l.b16 %v438
        %v2379 = vunpack.c.l.b16 %v439
        %v2380 = vunpack.c.l.b16 %v440
        %v2381 = vunpack.c.l.b16 %v441
        %v2382 = vunpack.c.l.b16 %v442
        %v2383 = vunpack.c.l.b16 %v443
        %v2384 = vunpack.c.l.b16 %v444
        %v2385 = vunpack.c.l.b16 %v445
        %v2386 = vunpack.c.l.b16 %v446
        %v2387 = vunpack.c.l.b16 %v447
        %v2388 = vunpack.c.l.b16 %v448
        %v2389 = vunpack.c.l.b16 %v449
        %v2390 = vunpack.c.l.b16 %v450
        %v2391 = vunpack.c.l.b16 %v451
        %v2392 = vunpack.c.l.b16 %v452
        %v2393 = vunpack.c.l.b16 %v453
        %v2394 = vunpack.c.l.b16 %v454
        %v2395 = vunpack.c.l.b16 %v455
        %v2396 = vunpack.c.l.b16 %v456
        %v2397 = vunpack.c.l.b16 %v457
        %v2398 = vunpack.c.l.b16 %v458
        %v2399 = vunpack.c.l.b16 %v459
        %v2400 = vunpack.c.l.b16 %v460
        %v2401 = vunpack.c.l.b16 %v461
        %v2402 = vunpack.c.l.b16 %v462
        %v2403 = vunpack.c.l.b16 %v463
        %v2404 = vunpack.c.l.b16 %v464
        %v2405 = vunpack.c.l.b16 %v465
        %v2406 = vunpack.c.l.b16 %v466
        %v2407 = vunpack.c.l.b16 %v467
        %v2408 = vunpack.c.l.b16 %v468
        %v2409 = vunpack.c.l.b16 %v469
        %v2410 = vunpack.c.l.b16 %v470
        %v2411 = vunpack.c.l.b16 %v471
        %v2412 = vunpack.c.l.b16 %v472
        %v2413 = vunpack.c.l.b16 %v473
        %v2414 = vunpack.c.l.b16 %v474
        %v2415 = vunpack.c.l.b16 %v475
        %v2416 = vunpack.c.l.b16 %v476
        %v2417 = vunpack.c.l.b16 %v477
        %v2418 = vunpack.c.l.b16 %v478
        %v2419 = vunpack.c.l.b16 %v479
        %v2420 = vunpack.c.l.b16 %v480
        %v2421 = vunpack.c.l.b16 %v481
        %v2422 = vunpack.c.l.b16 %v482
        %v2423 = vunpack.c.l.b16 %v483
        %v2424 = vunpack.c.l.b16 %v484
        %v2425 = vunpack.c.l.b16 %v485
        %v2426 = vunpack.c.l.b16 %v486
        %v2427 = vunpack.c.l.b16 %v487
        %v2428 = vunpack.c.l.b16 %v488
        %v2429 = vunpack.c.l.b16 %v489
        %v2430 = vunpack.c.l.b16 %v490
        %v2431 = vunpack.c.l.b16 %v491
        %v2432 = vunpack.c.l.b16 %v492
        %v2433 = vunpack.c.l.b16 %v493
        %v2434 = vunpack.c.l.b16 %v494
        %v2435 = vunpack.c.l.b16 %v495
        %v2436 = vunpack.c.l.b16 %v496
        %v2437 = vunpack.c.l.b16 %v497
        %v2438 = vunpack.c.l.b16 %v498
        %v2439 = vunpack.c.l.b16 %v499
        %v2440 = vunpack.c.l.b16 %v500
        %v2441 = vunpack.c.l.b16 %v501
        %v2442 = vunpack.c.l.b16 %v502
        %v2443 = vunpack.c.l.b16 %v503
        %v2444 = vunpack.c.l.b16 %v504
        %v2445 = vunpack.c.l.b16 %v505
        %v2446 = vunpack.c.l.b16 %v506
        %v2447 = vunpack.c.l.b16 %v507
        %v2448 = vunpack.c.l.b16 %v508
        %v2449 = vunpack.c.l.b16 %v509
        %v2450 = vunpack.c.l.b16 %v510
        %v2451 = vunpack.c.l.b16 %v511
        %v2452 = vunpack.c.l.b16 %v512
        %v2453 = vunpack.c.l.b16 %v513
        %v2454 = vunpack.c.l.b16 %v514
        %v2455 = vunpack.c.l.b16 %v515
        %v2456 = vunpack.c.l.b16 %v516
        %v2457 = vunpack.c.l.b16 %v517
        %v2458 = vunpack.c.l.b16 %v518
        %v2459 = vunpack.c.l.b16 %v519
        %v2460 = vunpack.c.l.b16 %v520
        %v2461 = vunpack.c.l.b16 %v521
        %v2462 = vunpack.c.l.b16 %v522
        %v2463 = vunpack.c.l.b16 %v523
        %v2464 = vunpack.c.l.b16 %v524
        %v2465 = vunpack.c.l.b16 %v525
        %v2466 = vunpack.c.l.b16 %v526
        %v2467 = vunpack.c.l.b16 %v527
        %v2468 = vunpack.c.l.b16 %v528
        %v2469 = vunpack.c.l.b16 %v529
        %v2470 = vunpack.c.l.b16 %v530
        %v2471 = vunpack.c.l.b16 %v531
        %v2472 = vunpack.c.l.b16 %v532
        %v2473 = vunpack.c.l.b16 %v533
        %v2474 = vunpack.c.l.b16 %v534
        %v2475 = vunpack.c.l.b16 %v535
        %v2476 = vunpack.c.l.b16 %v536
        %v2477 = vunpack.c.l.b16 %v537
        %v2478 = vunpack.c.l.b16 %v538
        %v2479 = vunpack.c.l.b16 %v539
        %v2480 = vunpack.c.l.b16 %v540
        %v2481 = vunpack.c.l.b16 %v541
        %v2482 = vunpack.c.l.b16 %v542
        %v2483 = vunpack.c.l.b16 %v543
        %v2484 = vunpack.c.l.b16 %v544
        %v2485 = vunpack.c.l.b16 %v545
        %v2486 = vunpack.c.l.b16 %v546
        %v2487 = vunpack.c.l.b16 %v547
        %v2488 = vunpack.c.l.b16 %v548
        %v2489 = vunpack.c.l.b16 %v549
        %v2490 = vunpack.c.l.b16 %v550
        %v2491 = vunpack.c.l.b16 %v551
        %v2492 = vunpack.c.l.b16 %v552
        %v2493 = vunpack.c.l.b16 %v553
        %v2494 = vunpack.c.l.b16 %v554
        %v2495 = vunpack.c.l.b16 %v555
        %v2496 = vunpack.c.l.b16 %v556
        %v2497 = vunpack.c.l.b16 %v557
        %v2498 = vunpack.c.l.b16 %v558
        %v2499 = vunpack.c.l.b16 %v559
        %v2500 = vunpack.c.l.b16 %v560
        %v2501 = vunpack.c.l.b16 %v561
        %v2502 = vunpack.c.l.b16 %v562
        %v2503 = vunpack.c.l.b16 %v563
        %v2504 = vunpack.c.l.b16 %v564
        %v2505 = vunpack.c.l.b16 %v565
        %v2506 = vunpack.c.l.b16 %v566
        %v2507 = vunpack.c.l.b16 %v567
        %v2508 = vunpack.c.l.b16 %v568
        %v2509 = vunpack.c.l.b16 %v569
        %v2510 = vunpack.c.l.b16 %v570
        %v2511 = vunpack.c.l.b16 %v571
        %v2512 = vunpack.c.l.b16 %v572
        %v2513 = vunpack.c.l.b16 %v573
        %v2514 = vunpack.c.l.b16 %v574
        %v2515 = vunpack.c.l.b16 %v575
        %v2516 = vunpack.c.l.b16 %v576
        %v2517 = vunpack.c.l.b16 %v577
        %v2518 = vunpack.c.l.b16 %v578
        %v2519 = vunpack.c.l.b16 %v579
        %v2520 = vunpack.c.l.b16 %v580
        %v2521 = vunpack.c.l.b16 %v581
        %v2522 = vunpack.c.l.b16 %v582
        %v2523 = vunpack.c.l.b16 %v583
        %v2524 = vunpack.c.l.b16 %v584
        %v2525 = vunpack.c.l.b16 %v585
        %v2526 = vunpack.c.l.b16 %v586
        %v2527 = vunpack.c.l.b16 %v587
        %v2528 = vunpack.c.l.b16 %v588
        %v2529 = vunpack.c.l.b16 %v589
        %v2530 = vunpack.c.l.b16 %v590
        %v2531 = vunpack.c.l.b16 %v591
        %v2532 = vunpack.c.l.b16 %v592
        %v2533 = vunpack.c.l.b16 %v593
        %v2534 = vunpack.c.l.b16 %v594
        %v2535 = vunpack.c.l.b16 %v595
        %v2536 = vunpack.c.l.b16 %v596
        %v2537 = vunpack.c.l.b16 %v597
        %v2538 = vunpack.c.l.b16 %v598
        %v2539 = vunpack.c.l.b16 %v599
        %v2540 = vunpack.c.l.b16 %v600
        %v2541 = vunpack.c.l.b16 %v601
        %v2542 = vunpack.c.l.b16 %v602
        %v2543 = vunpack.c.l.b16 %v603
        %v2544 = vunpack.c.l.b16 %v604
        %v2545 = vunpack.c.l.b16 %v605
        %v2546 = vunpack.c.l.b16 %v606
        %v2547 = vunpack.c.l.b16 %v607
        %v2548 = vunpack.c.l.b16 %v608
        %v2549 = vunpack.c.l.b16 %v609
        %v2550 = vunpack.c.l.b16 %v610
        %v2551 = vunpack.c.l.b16 %v611
        %v2552 = vunpack.c.l.b16 %v612
        %v2553 = vunpack.c.l.b16 %v613
        %v2554 = vunpack.c.l.b16 %v614
        %v2555 = vunpack.c.l.b16 %v615
        %v2556 = vunpack.c.l.b16 %v616
        %v2557 = vunpack.c.l.b16 %v617
        %v2558 = vunpack.c.l.b16 %v618
        %v2559 = vunpack.c.l.b16 %v619
        %v2560 = vunpack.c.l.b16 %v620
        %v2561 = vunpack.c.l.b16 %v621
        %v2562 = vunpack.c.l.b16 %v622
        %v2563 = vunpack.c.l.b16 %v623
        %v2564 = vunpack.c.l.b16 %v624
        %v2565 = vunpack.c.l.b16 %v625
        %v2566 = vunpack.c.l.b16 %v626
        %v2567 = vunpack.c.l.b16 %v627
        %v2568 = vunpack.c.l.b16 %v628
        %v2569 = vunpack.c.l.b16 %v629
        %v2570 = vunpack.c.l.b16 %v630
        %v2571 = vunpack.c.l.b16 %v631
        %v2572 = vunpack.c.l.b16 %v632
        %v2573 = vunpack.c.l.b16 %v633
        %v2574 = vunpack.c.l.b16 %v634
        %v2575 = vunpack.c.l.b16 %v635
        %v2576 = vunpack.c.l.b16 %v636
        %v2577 = vunpack.c.l.b16 %v637
        %v2578 = vunpack.c.l.b16 %v638
        %v2579 = vunpack.c.l.b16 %v639
        %v2580 = vunpack.c.l.b16 %v640
        %v2581 = vunpack.c.l.b16 %v641
        %v2582 = vunpack.c.l.b16 %v642
        %v2583 = vunpack.c.l.b16 %v643
        %v2584 = vunpack.c.l.b16 %v644
        %v2585 = vunpack.c.l.b16 %v645
        %v2586 = vunpack.c.l.b16 %v646
        %v2587 = vunpack.c.l.b16 %v647
        %v2588 = vunpack.c.l.b16 %v648
        %v2589 = vunpack.c.l.b16 %v649
        %v2590 = vunpack.c.l.b16 %v650
        %v2591 = vunpack.c.l.b16 %v651
        %v2592 = vunpack.c.l.b16 %v652
        %v2593 = vunpack.c.l.b16 %v653
        %v2594 = vunpack.c.l.b16 %v654
        %v2595 = vunpack.c.l.b16 %v655
        %v2596 = vunpack.c.l.b16 %v656
        %v2597 = vunpack.c.l.b16 %v657
        %v2598 = vunpack.c.l.b16 %v658
        %v2599 = vunpack.c.l.b16 %v659
        %v2600 = vunpack.c.l.b16 %v660
        %v2601 = vunpack.c.l.b16 %v661
        %v2602 = vunpack.c.l.b16 %v662
        %v2603 = vunpack.c.l.b16 %v663
        %v2604 = vunpack.c.l.b16 %v664
        %v2605 = vunpack.c.l.b16 %v665
        %v2606 = vunpack.c.l.b16 %v666
        %v2607 = vunpack.c.l.b16 %v667
        %v2608 = vunpack.c.l.b16 %v668
        %v2609 = vunpack.c.l.b16 %v669
        %v2610 = vunpack.c.l.b16 %v670
        %v2611 = vunpack.c.l.b16 %v671
        %v2612 = vunpack.c.l.b16 %v672
        %v2613 = vunpack.c.l.b16 %v673
        %v2614 = vunpack.c.l.b16 %v674
        %v2615 = vunpack.c.l.b16 %v675
        %v2616 = vunpack.c.l.b16 %v676
        %v2617 = vunpack.c.l.b16 %v677
        %v2618 = vunpack.c.l.b16 %v678
        %v2619 = vunpack.c.l.b16 %v679
        %v2620 = vunpack.c.l.b16 %v680
        %v2621 = vunpack.c.l.b16 %v681
        %v2622 = vunpack.c.l.b16 %v682
        %v2623 = vunpack.c.l.b16 %v683
        %v2624 = vunpack.c.l.b16 %v684
        %v2625 = vunpack.c.l.b16 %v685
        %v2626 = vunpack.c.l.b16 %v686
        %v2627 = vunpack.c.l.b16 %v687
        %v2628 = vunpack.c.l.b16 %v688
        %v2629 = vunpack.c.l.b16 %v689
        %v2630 = vunpack.c.l.b16 %v690
        %v2631 = vunpack.c.l.b16 %v691
        %v2632 = vunpack.c.l.b16 %v692
        %v2633 = vunpack.c.l.b16 %v693
        %v2634 = vunpack.c.l.b16 %v694
        %v2635 = vunpack.c.l.b16 %v695
        %v2636 = vunpack.c.l.b16 %v696
        %v2637 = vunpack.c.l.b16 %v697
        %v2638 = vunpack.c.l.b16 %v698
        %v2639 = vunpack.c.l.b16 %v699
        %v2640 = vunpack.c.l.b16 %v700
        %v2641 = vunpack.c.l.b16 %v701
        %v2642 = vunpack.c.l.b16 %v702
        %v2643 = vunpack.c.l.b16 %v703
        %v2644 = vunpack.c.l.b16 %v704
        %v2645 = vunpack.c.l.b16 %v705
        %v2646 = vunpack.c.l.b16 %v706
        %v2647 = vunpack.c.l.b16 %v707
        %v2648 = vunpack.c.l.b16 %v708
        %v2649 = vunpack.c.l.b16 %v709
        %v2650 = vunpack.c.l.b16 %v710
        %v2651 = vunpack.c.l.b16 %v711
        %v2652 = vunpack.c.l.b16 %v712
        %v2653 = vunpack.c.l.b16 %v713
        %v2654 = vunpack.c.l.b16 %v714
        %v2655 = vunpack.c.l.b16 %v715
        %v2656 = vunpack.c.l.b16 %v716
        %v2657 = vunpack.c.l.b16 %v717
        %v2658 = vunpack.c.l.b16 %v718
        %v2659 = vunpack.c.l.b16 %v719
        %v2660 = vunpack.c.l.b16 %v720
        %v2661 = vunpack.c.l.b16 %v721
        %v2662 = vunpack.c.l.b16 %v722
        %v2663 = vunpack.c.l.b16 %v723
        %v2664 = vunpack.c.l.b16 %v724
        %v2665 = vunpack.c.l.b16 %v725
        %v2666 = vunpack.c.l.b16 %v726
        %v2667 = vunpack.c.l.b16 %v727
        %v2668 = vunpack.c.l.b16 %v728
        %v2669 = vunpack.c.l.b16 %v729
        %v2670 = vunpack.c.l.b16 %v730
        %v2671 = vunpack.c.l.b16 %v731
        %v2672 = vunpack.c.l.b16 %v732
        %v2673 = vunpack.c.l.b16 %v733
        %v2674 = vunpack.c.l.b16 %v734
        %v2675 = vunpack.c.l.b16 %v735
        %v2676 = vunpack.c.l.b16 %v736
        %v2677 = vunpack.c.l.b16 %v737
        %v2678 = vunpack.c.l.b16 %v738
        %v2679 = vunpack.c.l.b16 %v739
        %v2680 = vunpack.c.l.b16 %v740
        %v2681 = vunpack.c.l.b16 %v741
        %v2682 = vunpack.c.l.b16 %v742
        %v2683 = vunpack.c.l.b16 %v743
        %v2684 = vunpack.c.l.b16 %v744
        %v2685 = vunpack.c.l.b16 %v745
        %v2686 = vunpack.c.l.b16 %v746
        %v2687 = vunpack.c.l.b16 %v747
        %v2688 = vunpack.c.l.b16 %v748
        %v2689 = vunpack.c.l.b16 %v749
        %v2690 = vunpack.c.l.b16 %v750
        %v2691 = vunpack.c.l.b16 %v751
        %v2692 = vunpack.c.l.b16 %v752
        %v2693 = vunpack.c.l.b16 %v753
        %v2694 = vunpack.c.l.b16 %v754
        %v2695 = vunpack.c.l.b16 %v755
        %v2696 = vunpack.c.l.b16 %v756
        %v2697 = vunpack.c.l.b16 %v757
        %v2698 = vunpack.c.l.b16 %v758
        %v2699 = vunpack.c.l.b16 %v759
        %v2700 = vunpack.c.l.b16 %v760
        %v2701 = vunpack.c.l.b16 %v761
        %v2702 = vunpack.c.l.b16 %v762
        %v2703 = vunpack.c.l.b16 %v763
        %v2704 = vunpack.c.l.b16 %v764
        %v2705 = vunpack.c.l.b16 %v765
        %v2706 = vunpack.c.l.b16 %v766
        %v2707 = vunpack.c.l.b16 %v767
        %v2708 = vunpack.c.l.b16 %v768
        %v2709 = vunpack.c.l.b16 %v769
        %v2710 = vunpack.c.l.b16 %v770
        %v2711 = vunpack.c.l.b16 %v771
        %v2712 = vunpack.c.l.b16 %v772
        %v2713 = vunpack.c.l.b16 %v773
        %v2714 = vunpack.c.l.b16 %v774
        %v2715 = vunpack.c.l.b16 %v775
        %v2716 = vunpack.c.l.b16 %v776
        %v2717 = vunpack.c.l.b16 %v777
        %v2718 = vunpack.c.l.b16 %v778
        %v2719 = vunpack.c.l.b16 %v779
        %v2720 = vunpack.c.l.b16 %v780
        %v2721 = vunpack.c.l.b16 %v781
        %v2722 = vunpack.c.l.b16 %v782
        %v2723 = vunpack.c.l.b16 %v783
        %v2724 = vunpack.c.l.b16 %v784
        %v2725 = vunpack.c.l.b16 %v785
        %v2726 = vunpack.c.l.b16 %v786
        %v2727 = vunpack.c.l.b16 %v787
        %v2728 = vunpack.c.l.b16 %v788
        %v2729 = vunpack.c.l.b16 %v789
        %v2730 = vunpack.c.l.b16 %v790
        %v2731 = vunpack.c.l.b16 %v791
        %v2732 = vunpack.c.l.b16 %v792
        %v2733 = vunpack.c.l.b16 %v793
        %v2734 = vunpack.c.l.b16 %v794
        %v2735 = vunpack.c.l.b16 %v795
        %v2736 = vunpack.c.l.b16 %v796
        %v2737 = vunpack.c.l.b16 %v797
        %v2738 = vunpack.c.l.b16 %v798
        %v2739 = vunpack.c.l.b16 %v799
        %v2740 = vunpack.c.l.b16 %v800
        %v2741 = vunpack.c.l.b16 %v801
        %v2742 = vunpack.c.l.b16 %v802
        %v2743 = vunpack.c.l.b16 %v803
        %v2744 = vunpack.c.l.b16 %v804
        %v2745 = vunpack.c.l.b16 %v805
        %v2746 = vunpack.c.l.b16 %v806
        %v2747 = vunpack.c.l.b16 %v807
        %v2748 = vunpack.c.l.b16 %v808
        %v2749 = vunpack.c.l.b16 %v809
        %v2750 = vunpack.c.l.b16 %v810
        %v2751 = vunpack.c.l.b16 %v811
        %v2752 = vunpack.c.l.b16 %v812
        %v2753 = vunpack.c.l.b16 %v813
        %v2754 = vunpack.c.l.b16 %v814
        %v2755 = vunpack.c.l.b16 %v815
        %v2756 = vunpack.c.l.b16 %v816
        %v2757 = vunpack.c.l.b16 %v817
        %v2758 = vunpack.c.l.b16 %v818
        %v2759 = vunpack.c.l.b16 %v819
        %v2760 = vunpack.c.l.b16 %v820
        %v2761 = vunpack.c.l.b16 %v821
        %v2762 = vunpack.c.l.b16 %v822
        %v2763 = vunpack.c.l.b16 %v823
        %v2764 = vunpack.c.l.b16 %v824
        %v2765 = vunpack.c.l.b16 %v825
        %v2766 = vunpack.c.l.b16 %v826
        %v2767 = vunpack.c.l.b16 %v827
        %v2768 = vunpack.c.l.b16 %v828
        %v2769 = vunpack.c.l.b16 %v829
        %v2770 = vunpack.c.l.b16 %v830
        %v2771 = vunpack.c.l.b16 %v831
        %v2772 = vunpack.c.l.b16 %v832
        %v2773 = vunpack.c.l.b16 %v833
        %v2774 = vunpack.c.l.b16 %v834
        %v2775 = vunpack.c.l.b16 %v835
        %v2776 = vunpack.c.l.b16 %v836
        %v2777 = vunpack.c.l.b16 %v837
        %v2778 = vunpack.c.l.b16 %v838
        %v2779 = vunpack.c.l.b16 %v839
        %v2780 = vunpack.c.l.b16 %v840
        %v2781 = vunpack.c.l.b16 %v841
        %v2782 = vunpack.c.l.b16 %v842
        %v2783 = vunpack.c.l.b16 %v843
        %v2784 = vunpack.c.l.b16 %v844
        %v2785 = vunpack.c.l.b16 %v845
        %v2786 = vunpack.c.l.b16 %v846
        %v2787 = vunpack.c.l.b16 %v847
        %v2788 = vunpack.c.l.b16 %v848
        %v2789 = vunpack.c.l.b16 %v849
        %v2790 = vunpack.c.l.b16 %v850
        %v2791 = vunpack.c.l.b16 %v851
        %v2792 = vunpack.c.l.b16 %v852
        %v2793 = vunpack.c.l.b16 %v853
        %v2794 = vunpack.c.l.b16 %v854
        %v2795 = vunpack.c.l.b16 %v855
        %v2796 = vunpack.c.l.b16 %v856
        %v2797 = vunpack.c.l.b16 %v857
        %v2798 = vunpack.c.l.b16 %v858
        %v2799 = vunpack.c.l.b16 %v859
        %v2800 = vunpack.c.l.b16 %v860
        %v2801 = vunpack.c.l.b16 %v861
        %v2802 = vunpack.c.l.b16 %v862
        %v2803 = vunpack.c.l.b16 %v863
        %v2804 = vunpack.c.l.b16 %v864
        %v2805 = vunpack.c.l.b16 %v865
        %v2806 = vunpack.c.l.b16 %v866
        %v2807 = vunpack.c.l.b16 %v867
        %v2808 = vunpack.c.l.b16 %v868
        %v2809 = vunpack.c.l.b16 %v869
        %v2810 = vunpack.c.l.b16 %v870
        %v2811 = vunpack.c.l.b16 %v871
        %v2812 = vunpack.c.l.b16 %v872
        %v2813 = vunpack.c.l.b16 %v873
        %v2814 = vunpack.c.l.b16 %v874
        %v2815 = vunpack.c.l.b16 %v875
        %v2816 = vunpack.c.l.b16 %v876
        %v2817 = vunpack.c.l.b16 %v877
        %v2818 = vunpack.c.l.b16 %v878
        %v2819 = vunpack.c.l.b16 %v879
        %v2820 = vunpack.c.l.b16 %v880
        %v2821 = vunpack.c.l.b16 %v881
        %v2822 = vunpack.c.l.b16 %v882
        %v2823 = vunpack.c.l.b16 %v883
        %v2824 = vunpack.c.l.b16 %v884
        %v2825 = vunpack.c.l.b16 %v885
        %v2826 = vunpack.c.l.b16 %v886
        %v2827 = vunpack.c.l.b16 %v887
        %v2828 = vunpack.c.l.b16 %v888
        %v2829 = vunpack.c.l.b16 %v889
        %v2830 = vunpack.c.l.b16 %v890
        %v2831 = vunpack.c.l.b16 %v891
        %v2832 = vunpack.c.l.b16 %v892
        %v2833 = vunpack.c.l.b16 %v893
        %v2834 = vunpack.c.l.b16 %v894
        %v2835 = vunpack.c.l.b16 %v895
        %v2836 = vunpack.c.l.b16 %v896
        %v2837 = vunpack.c.l.b16 %v897
        %v2838 = vunpack.c.l.b16 %v898
        %v2839 = vunpack.c.l.b16 %v899
        %v2840 = vunpack.c.l.b16 %v900
        %v2841 = vunpack.c.l.b16 %v901
        %v2842 = vunpack.c.l.b16 %v902
        %v2843 = vunpack.c.l.b16 %v903
        %v2844 = vunpack.c.l.b16 %v904
        %v2845 = vunpack.c.l.b16 %v905
        %v2846 = vunpack.c.l.b16 %v906
        %v2847 = vunpack.c.l.b16 %v907
        %v2848 = vunpack.c.l.b16 %v908
        %v2849 = vunpack.c.l.b16 %v909
        %v2850 = vunpack.c.l.b16 %v910
        %v2851 = vunpack.c.l.b16 %v911
        %v2852 = vunpack.c.l.b16 %v912
        %v2853 = vunpack.c.l.b16 %v913
        %v2854 = vunpack.c.l.b16 %v914
        %v2855 = vunpack.c.l.b16 %v915
        %v2856 = vunpack.c.l.b16 %v916
        %v2857 = vunpack.c.l.b16 %v917
        %v2858 = vunpack.c.l.b16 %v918
        %v2859 = vunpack.c.l.b16 %v919
        %v2860 = vunpack.c.l.b16 %v920
        %v2861 = vunpack.c.l.b16 %v921
        %v2862 = vunpack.c.l.b16 %v922
        %v2863 = vunpack.c.l.b16 %v923
        %v2864 = vunpack.c.l.b16 %v924
        %v2865 = vunpack.c.l.b16 %v925
        %v2866 = vunpack.c.l.b16 %v926
        %v2867 = vunpack.c.l.b16 %v927
        %v2868 = vunpack.c.l.b16 %v928
        %v2869 = vunpack.c.l.b16 %v929
        %v2870 = vunpack.c.l.b16 %v930
        %v2871 = vunpack.c.l.b16 %v931
        %v2872 = vunpack.c.l.b16 %v932
        %v2873 = vunpack.c.l.b16 %v933
        %v2874 = vunpack.c.l.b16 %v934
        %v2875 = vunpack.c.l.b16 %v935
        %v2876 = vunpack.c.l.b16 %v936
        %v2877 = vunpack.c.l.b16 %v937
        %v2878 = vunpack.c.l.b16 %v938
        %v2879 = vunpack.c.l.b16 %v939
        %v2880 = vunpack.c.l.b16 %v940
        %v2881 = vunpack.c.l.b16 %v941
        %v2882 = vunpack.c.l.b16 %v942
        %v2883 = vunpack.c.l.b16 %v943
        %v2884 = vunpack.c.l.b16 %v944
        %v2885 = vunpack.c.l.b16 %v945
        %v2886 = vunpack.c.l.b16 %v946
        %v2887 = vunpack.c.l.b16 %v947
        %v2888 = vunpack.c.l.b16 %v948
        %v2889 = vunpack.c.l.b16 %v949
        %v2890 = vunpack.c.l.b16 %v950
        %v2891 = vunpack.c.l.b16 %v951
        %v2892 = vunpack.c.l.b16 %v952
        %v2893 = vunpack.c.l.b16 %v953
        %v2894 = vunpack.c.l.b16 %v954
        %v2895 = vunpack.c.l.b16 %v955
        %v2896 = vunpack.c.l.b16 %v956
        %v2897 = vunpack.c.l.b16 %v957
        %v2898 = vunpack.c.l.b16 %v958
        %v2899 = vunpack.c.l.b16 %v959
        %v2900 = vunpack.c.l.b16 %v960
        %v2901 = vunpack.c.l.b16 %v961
        %v2902 = vunpack.c.l.b16 %v962
        %v2903 = vunpack.c.l.b16 %v963
        %v2904 = vunpack.c.l.b16 %v964
        %v2905 = vunpack.c.l.b16 %v965
        %v2906 = vunpack.c.l.b16 %v966
        %v2907 = vunpack.c.l.b16 %v967
        %v2908 = vunpack.c.l.b16 %v968
        %v2909 = vunpack.c.l.b16 %v969
        %v2910 = vunpack.c.l.b16 %v970
        %v2911 = vunpack.c.l.b16 %v971
        %v2912 = vunpack.c.l.b16 %v972
        %v2913 = vunpack.c.l.b16 %v973
        %v2914 = vunpack.c.l.b16 %v974
        %v2915 = vunpack.c.l.b16 %v975
        %v2916 = vunpack.c.l.b16 %v976
        %v2917 = vunpack.c.l.b16 %v977
        %v2918 = vunpack.c.l.b16 %v978
        %v2919 = vunpack.c.l.b16 %v979
        %v2920 = vunpack.c.l.b16 %v980
        %v2921 = vunpack.c.l.b16 %v981
        %v2922 = vunpack.c.l.b16 %v982
        %v2923 = vunpack.c.l.b16 %v983
        %v2924 = vunpack.c.l.b16 %v984
        %v2925 = vunpack.c.l.b16 %v985
        %v2926 = vunpack.c.l.b16 %v986
        %v2927 = vunpack.c.l.b16 %v987
        %v2928 = vunpack.c.l.b16 %v988
        %v2929 = vunpack.c.l.b16 %v989
        %v2930 = vunpack.c.l.b16 %v990
        %v2931 = vunpack.c.l.b16 %v991
        %v2932 = vunpack.c.l.b16 %v992
        %v2933 = vunpack.c.l.b16 %v993
        %v2934 = vunpack.c.l.b16 %v994
        %v2935 = vunpack.c.l.b16 %v995
        %v2936 = vunpack.c.l.b16 %v996
        %v2937 = vunpack.c.l.b16 %v997
        %v2938 = vunpack.c.l.b16 %v998
        %v2939 = vunpack.c.l.b16 %v999
        %v2940 = vunpack.c.l.b16 %v1000
        %v2941 = vunpack.c.l.b16 %v1001
        %v2942 = vunpack.c.l.b16 %v1002
        %v2943 = vunpack.c.l.b16 %v1003
        %v2944 = vunpack.c.l.b16 %v1004
        %v2945 = vunpack.c.l.b16 %v1005
        %v2946 = vunpack.c.l.b16 %v1006
        %v2947 = vunpack.c.l.b16 %v1007
        %v2948 = vunpack.c.l.b16 %v1008
        %v2949 = vunpack.c.l.b16 %v1009
        %v2950 = vunpack.c.l.b16 %v1010
        %v2951 = vunpack.c.l.b16 %v1011
        %v2952 = vunpack.c.l.b16 %v1012
        %v2953 = vunpack.c.l.b16 %v1013
        %v2954 = vunpack.c.l.b16 %v1014
        %v2955 = vunpack.c.l.b16 %v1015
        %v2956 = vunpack.c.l.b16 %v1016
        %v2957 = vunpack.c.l.b16 %v1017
        %v2958 = vunpack.c.l.b16 %v1018
        %v2959 = vpack.c.b16 %v2176, %v2175
        %v2960 = vpack.c.b16 %v2178, %v2177
        %v2961 = vpack.c.b16 %v2180, %v2179
        %v2962 = vpack.c.b16 %v2182, %v2181
        %v2963 = vpack.c.b16 %v2184, %v2183
        %v2964 = vpack.c.b16 %v2186, %v2185
        %v2965 = vpack.c.b16 %v2188, %v2187
        %v2966 = vpack.c.b16 %v2190, %v2189
        %v2967 = vpack.c.b16 %v2192, %v2191
        %v2968 = vpack.c.b16 %v2194, %v2193
        %v2969 = vpack.c.b16 %v2196, %v2195
        %v2970 = vpack.c.b16 %v2198, %v2197
        %v2971 = vpack.c.b16 %v2200, %v2199
        %v2972 = vpack.c.b16 %v2202, %v2201
        %v2973 = vpack.c.b16 %v2204, %v2203
        %v2974 = vpack.c.b16 %v2206, %v2205
        %v2975 = vpack.c.b16 %v2208, %v2207
        %v2976 = vpack.c.b16 %v2210, %v2209
        %v2977 = vpack.c.b16 %v2212, %v2211
        %v2978 = vpack.c.b16 %v2214, %v2213
        %v2979 = vpack.c.b16 %v2216, %v2215
        %v2980 = vpack.c.b16 %v2218, %v2217
        %v2981 = vpack.c.b16 %v2220, %v2219
        %v2982 = vpack.c.b16 %v2222, %v2221
        %v2983 = vpack.c.b16 %v2224, %v2223
        %v2984 = vpack.c.b16 %v2226, %v2225
        %v2985 = vpack.c.b16 %v2228, %v2227
        %v2986 = vpack.c.b16 %v2230, %v2229
        %v2987 = vpack.c.b16 %v2232, %v2231
        %v2988 = vpack.c.b16 %v2234, %v2233
        %v2989 = vpack.c.b16 %v2236, %v2235
        %v2990 = vpack.c.b16 %v2238, %v2237
        %v2991 = vpack.c.b16 %v2240, %v2239
        %v2992 = vpack.c.b16 %v2242, %v2241
        %v2993 = vpack.c.b16 %v2244, %v2243
        %v2994 = vpack.c.b16 %v2246, %v2245
        %v2995 = vpack.c.b16 %v2248, %v2247
        %v2996 = vpack.c.b16 %v2250, %v2249
        %v2997 = vpack.c.b16 %v2252, %v2251
        %v2998 = vpack.c.b16 %v2254, %v2253
        %v2999 = vpack.c.b16 %v2256, %v2255
        %v3000 = vpack.c.b16 %v2258, %v2257
        %v3001 = vpack.c.b16 %v2260, %v2259
        %v3002 = vpack.c.b16 %v2262, %v2261
        %v3003 = vpack.c.b16 %v2264, %v2263
        %v3004 = vpack.c.b16 %v2266, %v2265
        %v3005 = vpack.c.b16 %v2268, %v2267
        %v3006 = vpack.c.b16 %v2270, %v2269
        %v3007 = vpack.c.b16 %v2272, %v2271
        %v3008 = vpack.c.b16 %v2274, %v2273
        %v3009 = vpack.c.b16 %v2276, %v2275
        %v3010 = vpack.c.b16 %v2278, %v2277
        %v3011 = vpack.c.b16 %v2280, %v2279
        %v3012 = vpack.c.b16 %v2282, %v2281
        %v3013 = vpack.c.b16 %v2284, %v2283
        %v3014 = vpack.c.b16 %v2286, %v2285
        %v3015 = vpack.c.b16 %v2288, %v2287
        %v3016 = vpack.c.b16 %v2290, %v2289
        %v3017 = vpack.c.b16 %v2292, %v2291
        %v3018 = vpack.c.b16 %v2294, %v2293
        %v3019 = vpack.c.b16 %v2296, %v2295
        %v3020 = vpack.c.b16 %v2298, %v2297
        %v3021 = vpack.c.b16 %v2300, %v2299
        %v3022 = vpack.c.b16 %v2302, %v2301
        %v3023 = vpack.c.b16 %v2304, %v2303
        %v3024 = vpack.c.b16 %v2306, %v2305
        %v3025 = vpack.c.b16 %v2308, %v2307
        %v3026 = vpack.c.b16 %v2310, %v2309
        %v3027 = vpack.c.b16 %v2312, %v2311
        %v3028 = vpack.c.b16 %v2314, %v2313
        %v3029 = vpack.c.b16 %v2316, %v2315
        %v3030 = vpack.c.b16 %v2318, %v2317
        %v3031 = vpack.c.b16 %v2320, %v2319
        %v3032 = vpack.c.b16 %v2322, %v2321
        %v3033 = vpack.c.b16 %v2324, %v2323
        %v3034 = vpack.c.b16 %v2326, %v2325
        %v3035 = vpack.c.b16 %v2328, %v2327
        %v3036 = vpack.c.b16 %v2330, %v2329
        %v3037 = vpack.c.b16 %v2332, %v2331
        %v3038 = vpack.c.b16 %v2334, %v2333
        %v3039 = vpack.c.b16 %v2336, %v2335
        %v3040 = vpack.c.b16 %v2338, %v2337
        %v3041 = vpack.c.b16 %v2340, %v2339
        %v3042 = vpack.c.b16 %v2342, %v2341
        %v3043 = vpack.c.b16 %v2344, %v2343
        %v3044 = vpack.c.b16 %v2346, %v2345
        %v3045 = vpack.c.b16 %v2348, %v2347
        %v3046 = vpack.c.b16 %v2350, %v2349
        %v3047 = vpack.c.b16 %v2352, %v2351
        %v3048 = vpack.c.b16 %v2354, %v2353
        %v3049 = vpack.c.b16 %v2356, %v2355
        %v3050 = vpack.c.b16 %v2358, %v2357
        %v3051 = vpack.c.b16 %v2360, %v2359
        %v3052 = vpack.c.b16 %v2362, %v2361
        %v3053 = vpack.c.b16 %v2364, %v2363
        %v3054 = vpack.c.b16 %v2366, %v2365
        %v3055 = vpack.c.b16 %v2368, %v2367
        %v3056 = vpack.c.b16 %v2370, %v2369
        %v3057 = vpack.c.b16 %v2372, %v2371
        %v3058 = vpack.c.b16 %v2374, %v2373
        %v3059 = vpack.c.b16 %v2376, %v2375
        %v3060 = vpack.c.b16 %v2378, %v2377
        %v3061 = vpack.c.b16 %v2380, %v2379
        %v3062 = vpack.c.b16 %v2382, %v2381
        %v3063 = vpack.c.b16 %v2384, %v2383
        %v3064 = vpack.c.b16 %v2386, %v2385
        %v3065 = vpack.c.b16 %v2388, %v2387
        %v3066 = vpack.c.b16 %v2390, %v2389
        %v3067 = vpack.c.b16 %v2392, %v2391
        %v3068 = vpack.c.b16 %v2394, %v2393
        %v3069 = vpack.c.b16 %v2396, %v2395
        %v3070 = vpack.c.b16 %v2398, %v2397
        %v3071 = vpack.c.b16 %v2400, %v2399
        %v3072 = vpack.c.b16 %v2402, %v2401
        %v3073 = vpack.c.b16 %v2404, %v2403
        %v3074 = vpack.c.b16 %v2406, %v2405
        %v3075 = vpack.c.b16 %v2408, %v2407
        %v3076 = vpack.c.b16 %v2410, %v2409
        %v3077 = vpack.c.b16 %v2412, %v2411
        %v3078 = vpack.c.b16 %v2414, %v2413
        %v3079 = vpack.c.b16 %v2416, %v2415
        %v3080 = vpack.c.b16 %v2418, %v2417
        %v3081 = vpack.c.b16 %v2420, %v2419
        %v3082 = vpack.c.b16 %v2422, %v2421
        %v3083 = vpack.c.b16 %v2424, %v2423
        %v3084 = vpack.c.b16 %v2426, %v2425
        %v3085 = vpack.c.b16 %v2428, %v2427
        %v3086 = vpack.c.b16 %v2430, %v2429
        %v3087 = vpack.c.b16 %v2432, %v2431
        %v3088 = vpack.c.b16 %v2434, %v2433
        %v3089 = vpack.c.b16 %v2436, %v2435
        %v3090 = vpack.c.b16 %v2438, %v2437
        %v3091 = vpack.c.b16 %v2440, %v2439
        %v3092 = vpack.c.b16 %v2442, %v2441
        %v3093 = vpack.c.b16 %v2444, %v2443
        %v3094 = vpack.c.b16 %v2446, %v2445
        %v3095 = vpack.c.b16 %v2448, %v2447
        %v3096 = vpack.c.b16 %v2450, %v2449
        %v3097 = vpack.c.b16 %v2452, %v2451
        %v3098 = vpack.c.b16 %v2454, %v2453
        %v3099 = vpack.c.b16 %v2456, %v2455
        %v3100 = vpack.c.b16 %v2458, %v2457
        %v3101 = vpack.c.b16 %v2460, %v2459
        %v3102 = vpack.c.b16 %v2462, %v2461
        %v3103 = vpack.c.b16 %v2464, %v2463
        %v3104 = vpack.c.b16 %v2466, %v2465
        %v3105 = vpack.c.b16 %v2468, %v2467
        %v3106 = vpack.c.b16 %v2470, %v2469
        %v3107 = vpack.c.b16 %v2472, %v2471
        %v3108 = vpack.c.b16 %v2474, %v2473
        %v3109 = vpack.c.b16 %v2476, %v2475
        %v3110 = vpack.c.b16 %v2478, %v2477
        %v3111 = vpack.c.b16 %v2480, %v2479
        %v3112 = vpack.c.b16 %v2482, %v2481
        %v3113 = vpack.c.b16 %v2484, %v2483
        %v3114 = vpack.c.b16 %v2486, %v2485
        %v3115 = vpack.c.b16 %v2488, %v2487
        %v3116 = vpack.c.b16 %v2490, %v2489
        %v3117 = vpack.c.b16 %v2492, %v2491
        %v3118 = vpack.c.b16 %v2494, %v2493
        %v3119 = vpack.c.b16 %v2496, %v2495
        %v3120 = vpack.c.b16 %v2498, %v2497
        %v3121 = vpack.c.b16 %v2500, %v2499
        %v3122 = vpack.c.b16 %v2502, %v2501
        %v3123 = vpack.c.b16 %v2504, %v2503
        %v3124 = vpack.c.b16 %v2506, %v2505
        %v3125 = vpack.c.b16 %v2508, %v2507
        %v3126 = vpack.c.b16 %v2510, %v2509
        %v3127 = vpack.c.b16 %v2512, %v2511
        %v3128 = vpack.c.b16 %v2514, %v2513
        %v3129 = vpack.c.b16 %v2516, %v2515
        %v3130 = vpack.c.b16 %v2518, %v2517
        %v3131 = vpack.c.b16 %v2520, %v2519
        %v3132 = vpack.c.b16 %v2522, %v2521
        %v3133 = vpack.c.b16 %v2524, %v2523
        %v3134 = vpack.c.b16 %v2526, %v2525
        %v3135 = vpack.c.b16 %v2528, %v2527
        %v3136 = vpack.c.b16 %v2530, %v2529
        %v3137 = vpack.c.b16 %v2532, %v2531
        %v3138 = vpack.c.b16 %v2534, %v2533
        %v3139 = vpack.c.b16 %v2536, %v2535
        %v3140 = vpack.c.b16 %v2538, %v2537
        %v3141 = vpack.c.b16 %v2540, %v2539
        %v3142 = vpack.c.b16 %v2542, %v2541
        %v3143 = vpack.c.b16 %v2544, %v2543
        %v3144 = vpack.c.b16 %v2546, %v2545
        %v3145 = vpack.c.b16 %v2548, %v2547
        %v3146 = vpack.c.b16 %v2550, %v2549
        %v3147 = vpack.c.b16 %v2552, %v2551
        %v3148 = vpack.c.b16 %v2554, %v2553
        %v3149 = vpack.c.b16 %v2556, %v2555
        %v3150 = vpack.c.b16 %v2558, %v2557
        %v3151 = vpack.c.b16 %v2560, %v2559
        %v3152 = vpack.c.b16 %v2562, %v2561
        %v3153 = vpack.c.b16 %v2564, %v2563
        %v3154 = vpack.c.b16 %v2566, %v2565
        %v3155 = vpack.c.b16 %v2568, %v2567
        %v3156 = vpack.c.b16 %v2570, %v2569
        %v3157 = vpack.c.b16 %v2572, %v2571
        %v3158 = vpack.c.b16 %v2574, %v2573
        %v3159 = vpack.c.b16 %v2576, %v2575
        %v3160 = vpack.c.b16 %v2578, %v2577
        %v3161 = vpack.c.b16 %v2580, %v2579
        %v3162 = vpack.c.b16 %v2582, %v2581
        %v3163 = vpack.c.b16 %v2584, %v2583
        %v3164 = vpack.c.b16 %v2586, %v2585
        %v3165 = vpack.c.b16 %v2588, %v2587
        %v3166 = vpack.c.b16 %v2590, %v2589
        %v3167 = vpack.c.b16 %v2592, %v2591
        %v3168 = vpack.c.b16 %v2594, %v2593
        %v3169 = vpack.c.b16 %v2596, %v2595
        %v3170 = vpack.c.b16 %v2598, %v2597
        %v3171 = vpack.c.b16 %v2600, %v2599
        %v3172 = vpack.c.b16 %v2602, %v2601
        %v3173 = vpack.c.b16 %v2604, %v2603
        %v3174 = vpack.c.b16 %v2606, %v2605
        %v3175 = vpack.c.b16 %v2608, %v2607
        %v3176 = vpack.c.b16 %v2610, %v2609
        %v3177 = vpack.c.b16 %v2612, %v2611
        %v3178 = vpack.c.b16 %v2614, %v2613
        %v3179 = vpack.c.b16 %v2616, %v2615
        %v3180 = vpack.c.b16 %v2618, %v2617
        %v3181 = vpack.c.b16 %v2620, %v2619
        %v3182 = vpack.c.b16 %v2622, %v2621
        %v3183 = vpack.c.b16 %v2624, %v2623
        %v3184 = vpack.c.b16 %v2626, %v2625
        %v3185 = vpack.c.b16 %v2628, %v2627
        %v3186 = vpack.c.b16 %v2630, %v2629
        %v3187 = vpack.c.b16 %v2632, %v2631
        %v3188 = vpack.c.b16 %v2634, %v2633
        %v3189 = vpack.c.b16 %v2636, %v2635
        %v3190 = vpack.c.b16 %v2638, %v2637
        %v3191 = vpack.c.b16 %v2640, %v2639
        %v3192 = vpack.c.b16 %v2642, %v2641
        %v3193 = vpack.c.b16 %v2644, %v2643
        %v3194 = vpack.c.b16 %v2646, %v2645
        %v3195 = vpack.c.b16 %v2648, %v2647
        %v3196 = vpack.c.b16 %v2650, %v2649
        %v3197 = vpack.c.b16 %v2652, %v2651
        %v3198 = vpack.c.b16 %v2654, %v2653
        %v3199 = vpack.c.b16 %v2656, %v2655
        %v3200 = vpack.c.b16 %v2658, %v2657
        %v3201 = vpack.c.b16 %v2660, %v2659
        %v3202 = vpack.c.b16 %v2662, %v2661
        %v3203 = vpack.c.b16 %v2664, %v2663
        %v3204 = vpack.c.b16 %v2666, %v2665
        %v3205 = vpack.c.b16 %v2668, %v2667
        %v3206 = vpack.c.b16 %v2670, %v2669
        %v3207 = vpack.c.b16 %v2672, %v2671
        %v3208 = vpack.c.b16 %v2674, %v2673
        %v3209 = vpack.c.b16 %v2676, %v2675
        %v3210 = vpack.c.b16 %v2678, %v2677
        %v3211 = vpack.c.b16 %v2680, %v2679
        %v3212 = vpack.c.b16 %v2682, %v2681
        %v3213 = vpack.c.b16 %v2684, %v2683
        %v3214 = vpack.c.b16 %v2686, %v2685
        %v3215 = vpack.c.b16 %v2688, %v2687
        %v3216 = vpack.c.b16 %v2690, %v2689
        %v3217 = vpack.c.b16 %v2692, %v2691
        %v3218 = vpack.c.b16 %v2694, %v2693
        %v3219 = vpack.c.b16 %v2696, %v2695
        %v3220 = vpack.c.b16 %v2698, %v2697
        %v3221 = vpack.c.b16 %v2700, %v2699
        %v3222 = vpack.c.b16 %v2702, %v2701
        %v3223 = vpack.c.b16 %v2704, %v2703
        %v3224 = vpack.c.b16 %v2706, %v2705
        %v3225 = vpack.c.b16 %v2708, %v2707
        %v3226 = vpack.c.b16 %v2710, %v2709
        %v3227 = vpack.c.b16 %v2712, %v2711
        %v3228 = vpack.c.b16 %v2714, %v2713
        %v3229 = vpack.c.b16 %v2716, %v2715
        %v3230 = vpack.c.b16 %v2718, %v2717
        %v3231 = vpack.c.b16 %v2720, %v2719
        %v3232 = vpack.c.b16 %v2722, %v2721
        %v3233 = vpack.c.b16 %v2724, %v2723
        %v3234 = vpack.c.b16 %v2726, %v2725
        %v3235 = vpack.c.b16 %v2728, %v2727
        %v3236 = vpack.c.b16 %v2730, %v2729
        %v3237 = vpack.c.b16 %v2732, %v2731
        %v3238 = vpack.c.b16 %v2734, %v2733
        %v3239 = vpack.c.b16 %v2736, %v2735
        %v3240 = vpack.c.b16 %v2738, %v2737
        %v3241 = vpack.c.b16 %v2740, %v2739
        %v3242 = vpack.c.b16 %v2742, %v2741
        %v3243 = vpack.c.b16 %v2744, %v2743
        %v3244 = vpack.c.b16 %v2746, %v2745
        %v3245 = vpack.c.b16 %v2748, %v2747
        %v3246 = vpack.c.b16 %v2750, %v2749
        %v3247 = vpack.c.b16 %v2752, %v2751
        %v3248 = vpack.c.b16 %v2754, %v2753
        %v3249 = vpack.c.b16 %v2756, %v2755
        %v3250 = vpack.c.b16 %v2758, %v2757
        %v3251 = vpack.c.b16 %v2760, %v2759
        %v3252 = vpack.c.b16 %v2762, %v2761
        %v3253 = vpack.c.b16 %v2764, %v2763
        %v3254 = vpack.c.b16 %v2766, %v2765
        %v3255 = vpack.c.b16 %v2768, %v2767
        %v3256 = vpack.c.b16 %v2770, %v2769
        %v3257 = vpack.c.b16 %v2772, %v2771
        %v3258 = vpack.c.b16 %v2774, %v2773
        %v3259 = vpack.c.b16 %v2776, %v2775
        %v3260 = vpack.c.b16 %v2778, %v2777
        %v3261 = vpack.c.b16 %v2780, %v2779
        %v3262 = vpack.c.b16 %v2782, %v2781
        %v3263 = vpack.c.b16 %v2784, %v2783
        %v3264 = vpack.c.b16 %v2786, %v2785
        %v3265 = vpack.c.b16 %v2788, %v2787
        %v3266 = vpack.c.b16 %v2790, %v2789
        %v3267 = vpack.c.b16 %v2792, %v2791
        %v3268 = vpack.c.b16 %v2794, %v2793
        %v3269 = vpack.c.b16 %v2796, %v2795
        %v3270 = vpack.c.b16 %v2798, %v2797
        %v3271 = vpack.c.b16 %v2800, %v2799
        %v3272 = vpack.c.b16 %v2802, %v2801
        %v3273 = vpack.c.b16 %v2804, %v2803
        %v3274 = vpack.c.b16 %v2806, %v2805
        %v3275 = vpack.c.b16 %v2808, %v2807
        %v3276 = vpack.c.b16 %v2810, %v2809
        %v3277 = vpack.c.b16 %v2812, %v2811
        %v3278 = vpack.c.b16 %v2814, %v2813
        %v3279 = vpack.c.b16 %v2816, %v2815
        %v3280 = vpack.c.b16 %v2818, %v2817
        %v3281 = vpack.c.b16 %v2820, %v2819
        %v3282 = vpack.c.b16 %v2822, %v2821
        %v3283 = vpack.c.b16 %v2824, %v2823
        %v3284 = vpack.c.b16 %v2826, %v2825
        %v3285 = vpack.c.b16 %v2828, %v2827
        %v3286 = vpack.c.b16 %v2830, %v2829
        %v3287 = vpack.c.b16 %v2832, %v2831
        %v3288 = vpack.c.b16 %v2834, %v2833
        %v3289 = vpack.c.b16 %v2836, %v2835
        %v3290 = vpack.c.b16 %v2838, %v2837
        %v3291 = vpack.c.b16 %v2840, %v2839
        %v3292 = vpack.c.b16 %v2842, %v2841
        %v3293 = vpack.c.b16 %v2844, %v2843
        %v3294 = vpack.c.b16 %v2846, %v2845
        %v3295 = vpack.c.b16 %v2848, %v2847
        %v3296 = vpack.c.b16 %v2850, %v2849
        %v3297 = vpack.c.b16 %v2852, %v2851
        %v3298 = vpack.c.b16 %v2854, %v2853
        %v3299 = vpack.c.b16 %v2856, %v2855
        %v3300 = vpack.c.b16 %v2858, %v2857
        %v3301 = vpack.c.b16 %v2860, %v2859
        %v3302 = vpack.c.b16 %v2862, %v2861
        %v3303 = vpack.c.b16 %v2864, %v2863
        %v3304 = vpack.c.b16 %v2866, %v2865
        %v3305 = vpack.c.b16 %v2868, %v2867
        %v3306 = vpack.c.b16 %v2870, %v2869
        %v3307 = vpack.c.b16 %v2872, %v2871
        %v3308 = vpack.c.b16 %v2874, %v2873
        %v3309 = vpack.c.b16 %v2876, %v2875
        %v3310 = vpack.c.b16 %v2878, %v2877
        %v3311 = vpack.c.b16 %v2880, %v2879
        %v3312 = vpack.c.b16 %v2882, %v2881
        %v3313 = vpack.c.b16 %v2884, %v2883
        %v3314 = vpack.c.b16 %v2886, %v2885
        %v3315 = vpack.c.b16 %v2888, %v2887
        %v3316 = vpack.c.b16 %v2890, %v2889
        %v3317 = vpack.c.b16 %v2892, %v2891
        %v3318 = vpack.c.b16 %v2894, %v2893
        %v3319 = vpack.c.b16 %v2896, %v2895
        %v3320 = vpack.c.b16 %v2898, %v2897
        %v3321 = vpack.c.b16 %v2900, %v2899
        %v3322 = vpack.c.b16 %v2902, %v2901
        %v3323 = vpack.c.b16 %v2904, %v2903
        %v3324 = vpack.c.b16 %v2906, %v2905
        %v3325 = vpack.c.b16 %v2908, %v2907
        %v3326 = vpack.c.b16 %v2910, %v2909
        %v3327 = vpack.c.b16 %v2912, %v2911
        %v3328 = vpack.c.b16 %v2914, %v2913
        %v3329 = vpack.c.b16 %v2916, %v2915
        %v3330 = vpack.c.b16 %v2918, %v2917
        %v3331 = vpack.c.b16 %v2920, %v2919
        %v3332 = vpack.c.b16 %v2922, %v2921
        %v3333 = vpack.c.b16 %v2924, %v2923
        %v3334 = vpack.c.b16 %v2926, %v2925
        %v3335 = vpack.c.b16 %v2928, %v2927
        %v3336 = vpack.c.b16 %v2930, %v2929
        %v3337 = vpack.c.b16 %v2932, %v2931
        %v3338 = vpack.c.b16 %v2934, %v2933
        %v3339 = vpack.c.b16 %v2936, %v2935
        %v3340 = vpack.c.b16 %v2938, %v2937
        %v3341 = vpack.c.b16 %v2940, %v2939
        %v3342 = vpack.c.b16 %v2942, %v2941
        %v3343 = vpack.c.b16 %v2944, %v2943
        %v3344 = vpack.c.b16 %v2946, %v2945
        %v3345 = vpack.c.b16 %v2948, %v2947
        %v3346 = vpack.c.b16 %v2950, %v2949
        %v3347 = vpack.c.b16 %v2952, %v2951
        %v3348 = vpack.c.b16 %v2954, %v2953
        %v3349 = vpack.c.b16 %v2956, %v2955
        %v3350 = vpack.c.b16 %v2958, %v2957
        %3743 = vmatprep.subr.bf16.mxu0 0
        %3744 = vmatpush1.bf16.msra.mxu0 %v2966
        %3745 = vmatprep.subr.bf16.mxu0 0
        %3746 = vmatpush1.bf16.msra.mxu0 %v2965
        %3747 = vmatprep.subr.bf16.mxu0 0
        %3748 = vmatpush1.bf16.msra.mxu0 %v2964
        %3749 = vmatprep.subr.bf16.mxu0 0
        %3750 = vmatpush1.bf16.msra.mxu0 %v2963
        %3751 = vmatprep.subr.bf16.mxu0 0
        %3752 = vmatpush1.bf16.msra.mxu0 %v2962
        %3753 = vmatprep.subr.bf16.mxu0 0
        %3754 = vmatpush1.bf16.msra.mxu0 %v2961
        %3755 = vmatprep.subr.bf16.mxu0 0
        %3756 = vmatpush1.bf16.msra.mxu0 %v2960
        %3757 = vmatprep.subr.bf16.mxu0 0
        %3758 = vmatpush1.bf16.msra.mxu0 %v2959
        %3759 = vmatprep.subr.bf16.mxu0 0
        %3760 = vmatpush2.bf16.msra.mxu0 %v2974
        %3761 = vmatprep.subr.bf16.mxu0 0
        %3762 = vmatpush2.bf16.msra.mxu0 %v2973
        %3763 = vmatprep.subr.bf16.mxu0 0
        %3764 = vmatpush2.bf16.msra.mxu0 %v2972
        %3765 = vmatprep.subr.bf16.mxu0 0
        %3766 = vmatpush2.bf16.msra.mxu0 %v2971
        %3767 = vmatprep.subr.bf16.mxu0 0
        %3768 = vmatpush2.bf16.msra.mxu0 %v2970
        %3769 = vmatprep.subr.bf16.mxu0 0
        %3770 = vmatpush2.bf16.msra.mxu0 %v2969
        %3771 = vmatprep.subr.bf16.mxu0 0
        %3772 = vmatpush2.bf16.msra.mxu0 %v2968
        %3773 = vmatprep.subr.bf16.mxu0 0
        %3774 = vmatpush2.bf16.msra.mxu0 %v2967
        %3775 = vmatprep.mubr.bf16.mxu0 %v1071
        %3776 = vmatmul.mubr.bf16.gmra.mxu0 %v1057
        %v3777 = vpop.f32.mrf.mxu0
        %v3778 = vadd.f32 0.0, %v3777
        %v3779 = vpop.f32.mrf.mxu0
        %v3780 = vpop.f32.mrf.mxu0
        %v3781 = vpop.f32.mrf.mxu0
        %3782 = vdwg.mxu0
        %3783 = vmatprep.subr.bf16.mxu0 0
        %3784 = vmatpush1.bf16.msra.mxu0 %v2982
        %3785 = vmatprep.subr.bf16.mxu0 0
        %3786 = vmatpush1.bf16.msra.mxu0 %v2981
        %3787 = vmatprep.subr.bf16.mxu0 0
        %3788 = vmatpush1.bf16.msra.mxu0 %v2980
        %3789 = vmatprep.subr.bf16.mxu0 0
        %3790 = vmatpush1.bf16.msra.mxu0 %v2979
        %3791 = vmatprep.subr.bf16.mxu0 0
        %3792 = vmatpush1.bf16.msra.mxu0 %v2978
        %3793 = vmatprep.subr.bf16.mxu0 0
        %3794 = vmatpush1.bf16.msra.mxu0 %v2977
        %3795 = vmatprep.subr.bf16.mxu0 0
        %3796 = vmatpush1.bf16.msra.mxu0 %v2976
        %3797 = vmatprep.subr.bf16.mxu0 0
        %3798 = vmatpush1.bf16.msra.mxu0 %v2975
        %3799 = vmatprep.subr.bf16.mxu0 0
        %3800 = vmatpush2.bf16.msra.mxu0 %v2990
        %3801 = vmatprep.subr.bf16.mxu0 0
        %3802 = vmatpush2.bf16.msra.mxu0 %v2989
        %3803 = vmatprep.subr.bf16.mxu0 0
        %3804 = vmatpush2.bf16.msra.mxu0 %v2988
        %3805 = vmatprep.subr.bf16.mxu0 0
        %3806 = vmatpush2.bf16.msra.mxu0 %v2987
        %3807 = vmatprep.subr.bf16.mxu0 0
        %3808 = vmatpush2.bf16.msra.mxu0 %v2986
        %3809 = vmatprep.subr.bf16.mxu0 0
        %3810 = vmatpush2.bf16.msra.mxu0 %v2985
        %3811 = vmatprep.subr.bf16.mxu0 0
        %3812 = vmatpush2.bf16.msra.mxu0 %v2984
        %3813 = vmatprep.subr.bf16.mxu0 0
        %3814 = vmatpush2.bf16.msra.mxu0 %v2983
        %3815 = vmatprep.mubr.bf16.mxu0 %v1081
        %3816 = vmatmul.mubr.bf16.gmra.mxu0 %v1079
        %v3817 = vpop.f32.mrf.mxu0
        %v3818 = vadd.f32 %v3778, %v3817
        %v3819 = vpop.f32.mrf.mxu0
        %v3820 = vpop.f32.mrf.mxu0
        %v3821 = vpop.f32.mrf.mxu0
        %3822 = vdwg.mxu0
        %3823 = vmatprep.subr.bf16.mxu0 0
        %3824 = vmatpush1.bf16.msra.mxu0 %v2998
        %3825 = vmatprep.subr.bf16.mxu0 0
        %3826 = vmatpush1.bf16.msra.mxu0 %v2997
        %3827 = vmatprep.subr.bf16.mxu0 0
        %3828 = vmatpush1.bf16.msra.mxu0 %v2996
        %3829 = vmatprep.subr.bf16.mxu0 0
        %3830 = vmatpush1.bf16.msra.mxu0 %v2995
        %3831 = vmatprep.subr.bf16.mxu0 0
        %3832 = vmatpush1.bf16.msra.mxu0 %v2994
        %3833 = vmatprep.subr.bf16.mxu0 0
        %3834 = vmatpush1.bf16.msra.mxu0 %v2993
        %3835 = vmatprep.subr.bf16.mxu0 0
        %3836 = vmatpush1.bf16.msra.mxu0 %v2992
        %3837 = vmatprep.subr.bf16.mxu0 0
        %3838 = vmatpush1.bf16.msra.mxu0 %v2991
        %3839 = vmatprep.subr.bf16.mxu0 0
        %3840 = vmatpush2.bf16.msra.mxu0 %v3006
        %3841 = vmatprep.subr.bf16.mxu0 0
        %3842 = vmatpush2.bf16.msra.mxu0 %v3005
        %3843 = vmatprep.subr.bf16.mxu0 0
        %3844 = vmatpush2.bf16.msra.mxu0 %v3004
        %3845 = vmatprep.subr.bf16.mxu0 0
        %3846 = vmatpush2.bf16.msra.mxu0 %v3003
        %3847 = vmatprep.subr.bf16.mxu0 0
        %3848 = vmatpush2.bf16.msra.mxu0 %v3002
        %3849 = vmatprep.subr.bf16.mxu0 0
        %3850 = vmatpush2.bf16.msra.mxu0 %v3001
        %3851 = vmatprep.subr.bf16.mxu0 0
        %3852 = vmatpush2.bf16.msra.mxu0 %v3000
        %3853 = vmatprep.subr.bf16.mxu0 0
        %3854 = vmatpush2.bf16.msra.mxu0 %v2999
        %3855 = vmatprep.mubr.bf16.mxu0 %v1078
        %3856 = vmatmul.mubr.bf16.gmra.mxu0 %v1064
        %v3857 = vpop.f32.mrf.mxu0
        %v3858 = vadd.f32 %v3818, %v3857
        %v3859 = vpop.f32.mrf.mxu0
        %v3860 = vpop.f32.mrf.mxu0
        %v3861 = vpop.f32.mrf.mxu0
        %3862 = vdwg.mxu0
        %3863 = vmatprep.subr.bf16.mxu0 0
        %3864 = vmatpush1.bf16.msra.mxu0 %v3014
        %3865 = vmatprep.subr.bf16.mxu0 0
        %3866 = vmatpush1.bf16.msra.mxu0 %v3013
        %3867 = vmatprep.subr.bf16.mxu0 0
        %3868 = vmatpush1.bf16.msra.mxu0 %v3012
        %3869 = vmatprep.subr.bf16.mxu0 0
        %3870 = vmatpush1.bf16.msra.mxu0 %v3011
        %3871 = vmatprep.subr.bf16.mxu0 0
        %3872 = vmatpush1.bf16.msra.mxu0 %v3010
        %3873 = vmatprep.subr.bf16.mxu0 0
        %3874 = vmatpush1.bf16.msra.mxu0 %v3009
        %3875 = vmatprep.subr.bf16.mxu0 0
        %3876 = vmatpush1.bf16.msra.mxu0 %v3008
        %3877 = vmatprep.subr.bf16.mxu0 0
        %3878 = vmatpush1.bf16.msra.mxu0 %v3007
        %3879 = vmatprep.subr.bf16.mxu0 0
        %3880 = vmatpush2.bf16.msra.mxu0 %v3022
        %3881 = vmatprep.subr.bf16.mxu0 0
        %3882 = vmatpush2.bf16.msra.mxu0 %v3021
        %3883 = vmatprep.subr.bf16.mxu0 0
        %3884 = vmatpush2.bf16.msra.mxu0 %v3020
        %3885 = vmatprep.subr.bf16.mxu0 0
        %3886 = vmatpush2.bf16.msra.mxu0 %v3019
        %3887 = vmatprep.subr.bf16.mxu0 0
        %3888 = vmatpush2.bf16.msra.mxu0 %v3018
        %3889 = vmatprep.subr.bf16.mxu0 0
        %3890 = vmatpush2.bf16.msra.mxu0 %v3017
        %3891 = vmatprep.subr.bf16.mxu0 0
        %3892 = vmatpush2.bf16.msra.mxu0 %v3016
        %3893 = vmatprep.subr.bf16.mxu0 0
        %3894 = vmatpush2.bf16.msra.mxu0 %v3015
        %3895 = vmatprep.mubr.bf16.mxu0 %v1082
        %3896 = vmatmul.mubr.bf16.gmra.mxu0 %v1080
        %v3897 = vpop.f32.mrf.mxu0
        %v3898 = vadd.f32 %v3858, %v3897
        %v3899 = vpop.f32.mrf.mxu0
        %v3900 = vpop.f32.mrf.mxu0
        %v3901 = vpop.f32.mrf.mxu0
        %3902 = vdwg.mxu0
        %3903 = vmatprep.subr.bf16.mxu0 0
        %3904 = vmatpush1.bf16.msra.mxu0 %v3030
        %3905 = vmatprep.subr.bf16.mxu0 0
        %3906 = vmatpush1.bf16.msra.mxu0 %v3029
        %3907 = vmatprep.subr.bf16.mxu0 0
        %3908 = vmatpush1.bf16.msra.mxu0 %v3028
        %3909 = vmatprep.subr.bf16.mxu0 0
        %3910 = vmatpush1.bf16.msra.mxu0 %v3027
        %3911 = vmatprep.subr.bf16.mxu0 0
        %3912 = vmatpush1.bf16.msra.mxu0 %v3026
        %3913 = vmatprep.subr.bf16.mxu0 0
        %3914 = vmatpush1.bf16.msra.mxu0 %v3025
        %3915 = vmatprep.subr.bf16.mxu0 0
        %3916 = vmatpush1.bf16.msra.mxu0 %v3024
        %3917 = vmatprep.subr.bf16.mxu0 0
        %3918 = vmatpush1.bf16.msra.mxu0 %v3023
        %3919 = vmatprep.subr.bf16.mxu0 0
        %3920 = vmatpush2.bf16.msra.mxu0 %v3038
        %3921 = vmatprep.subr.bf16.mxu0 0
        %3922 = vmatpush2.bf16.msra.mxu0 %v3037
        %3923 = vmatprep.subr.bf16.mxu0 0
        %3924 = vmatpush2.bf16.msra.mxu0 %v3036
        %3925 = vmatprep.subr.bf16.mxu0 0
        %3926 = vmatpush2.bf16.msra.mxu0 %v3035
        %3927 = vmatprep.subr.bf16.mxu0 0
        %3928 = vmatpush2.bf16.msra.mxu0 %v3034
        %3929 = vmatprep.subr.bf16.mxu0 0
        %3930 = vmatpush2.bf16.msra.mxu0 %v3033
        %3931 = vmatprep.subr.bf16.mxu0 0
        %3932 = vmatpush2.bf16.msra.mxu0 %v3032
        %3933 = vmatprep.subr.bf16.mxu0 0
        %3934 = vmatpush2.bf16.msra.mxu0 %v3031
        %3935 = vmatprep.mubr.bf16.mxu0 %v1120
        %3936 = vmatmul.mubr.bf16.gmra.mxu0 %v1106
        %v3937 = vpop.f32.mrf.mxu0
        %v3938 = vadd.f32 %v3898, %v3937
        %v3939 = vpop.f32.mrf.mxu0
        %v3940 = vpop.f32.mrf.mxu0
        %v3941 = vpop.f32.mrf.mxu0
        %3942 = vdwg.mxu0
        %3943 = vmatprep.subr.bf16.mxu0 0
        %3944 = vmatpush1.bf16.msra.mxu0 %v3046
        %3945 = vmatprep.subr.bf16.mxu0 0
        %3946 = vmatpush1.bf16.msra.mxu0 %v3045
        %3947 = vmatprep.subr.bf16.mxu0 0
        %3948 = vmatpush1.bf16.msra.mxu0 %v3044
        %3949 = vmatprep.subr.bf16.mxu0 0
        %3950 = vmatpush1.bf16.msra.mxu0 %v3043
        %3951 = vmatprep.subr.bf16.mxu0 0
        %3952 = vmatpush1.bf16.msra.mxu0 %v3042
        %3953 = vmatprep.subr.bf16.mxu0 0
        %3954 = vmatpush1.bf16.msra.mxu0 %v3041
        %3955 = vmatprep.subr.bf16.mxu0 0
        %3956 = vmatpush1.bf16.msra.mxu0 %v3040
        %3957 = vmatprep.subr.bf16.mxu0 0
        %3958 = vmatpush1.bf16.msra.mxu0 %v3039
        %3959 = vmatprep.subr.bf16.mxu0 0
        %3960 = vmatpush2.bf16.msra.mxu0 %v3054
        %3961 = vmatprep.subr.bf16.mxu0 0
        %3962 = vmatpush2.bf16.msra.mxu0 %v3053
        %3963 = vmatprep.subr.bf16.mxu0 0
        %3964 = vmatpush2.bf16.msra.mxu0 %v3052
        %3965 = vmatprep.subr.bf16.mxu0 0
        %3966 = vmatpush2.bf16.msra.mxu0 %v3051
        %3967 = vmatprep.subr.bf16.mxu0 0
        %3968 = vmatpush2.bf16.msra.mxu0 %v3050
        %3969 = vmatprep.subr.bf16.mxu0 0
        %3970 = vmatpush2.bf16.msra.mxu0 %v3049
        %3971 = vmatprep.subr.bf16.mxu0 0
        %3972 = vmatpush2.bf16.msra.mxu0 %v3048
        %3973 = vmatprep.subr.bf16.mxu0 0
        %3974 = vmatpush2.bf16.msra.mxu0 %v3047
        %3975 = vmatprep.mubr.bf16.mxu0 %v1130
        %3976 = vmatmul.mubr.bf16.gmra.mxu0 %v1128
        %v3977 = vpop.f32.mrf.mxu0
        %v3978 = vadd.f32 %v3938, %v3977
        %v3979 = vpop.f32.mrf.mxu0
        %v3980 = vpop.f32.mrf.mxu0
        %v3981 = vpop.f32.mrf.mxu0
        %3982 = vdwg.mxu0
        %3983 = vmatprep.subr.bf16.mxu0 0
        %3984 = vmatpush1.bf16.msra.mxu0 %v3062
        %3985 = vmatprep.subr.bf16.mxu0 0
        %3986 = vmatpush1.bf16.msra.mxu0 %v3061
        %3987 = vmatprep.subr.bf16.mxu0 0
        %3988 = vmatpush1.bf16.msra.mxu0 %v3060
        %3989 = vmatprep.subr.bf16.mxu0 0
        %3990 = vmatpush1.bf16.msra.mxu0 %v3059
        %3991 = vmatprep.subr.bf16.mxu0 0
        %3992 = vmatpush1.bf16.msra.mxu0 %v3058
        %3993 = vmatprep.subr.bf16.mxu0 0
        %3994 = vmatpush1.bf16.msra.mxu0 %v3057
        %3995 = vmatprep.subr.bf16.mxu0 0
        %3996 = vmatpush1.bf16.msra.mxu0 %v3056
        %3997 = vmatprep.subr.bf16.mxu0 0
        %3998 = vmatpush1.bf16.msra.mxu0 %v3055
        %3999 = vmatprep.subr.bf16.mxu0 0
        %4000 = vmatpush2.bf16.msra.mxu0 %v3070
        %4001 = vmatprep.subr.bf16.mxu0 0
        %4002 = vmatpush2.bf16.msra.mxu0 %v3069
        %4003 = vmatprep.subr.bf16.mxu0 0
        %4004 = vmatpush2.bf16.msra.mxu0 %v3068
        %4005 = vmatprep.subr.bf16.mxu0 0
        %4006 = vmatpush2.bf16.msra.mxu0 %v3067
        %4007 = vmatprep.subr.bf16.mxu0 0
        %4008 = vmatpush2.bf16.msra.mxu0 %v3066
        %4009 = vmatprep.subr.bf16.mxu0 0
        %4010 = vmatpush2.bf16.msra.mxu0 %v3065
        %4011 = vmatprep.subr.bf16.mxu0 0
        %4012 = vmatpush2.bf16.msra.mxu0 %v3064
        %4013 = vmatprep.subr.bf16.mxu0 0
        %4014 = vmatpush2.bf16.msra.mxu0 %v3063
        %4015 = vmatprep.mubr.bf16.mxu0 %v1127
        %4016 = vmatmul.mubr.bf16.gmra.mxu0 %v1113
        %v4017 = vpop.f32.mrf.mxu0
        %v4018 = vadd.f32 %v3978, %v4017
        %v4019 = vpop.f32.mrf.mxu0
        %v4020 = vpop.f32.mrf.mxu0
        %v4021 = vpop.f32.mrf.mxu0
        %4022 = vdwg.mxu0
        %4023 = vmatprep.subr.bf16.mxu0 0
        %4024 = vmatpush1.bf16.msra.mxu0 %v3078
        %4025 = vmatprep.subr.bf16.mxu0 0
        %4026 = vmatpush1.bf16.msra.mxu0 %v3077
        %4027 = vmatprep.subr.bf16.mxu0 0
        %4028 = vmatpush1.bf16.msra.mxu0 %v3076
        %4029 = vmatprep.subr.bf16.mxu0 0
        %4030 = vmatpush1.bf16.msra.mxu0 %v3075
        %4031 = vmatprep.subr.bf16.mxu0 0
        %4032 = vmatpush1.bf16.msra.mxu0 %v3074
        %4033 = vmatprep.subr.bf16.mxu0 0
        %4034 = vmatpush1.bf16.msra.mxu0 %v3073
        %4035 = vmatprep.subr.bf16.mxu0 0
        %4036 = vmatpush1.bf16.msra.mxu0 %v3072
        %4037 = vmatprep.subr.bf16.mxu0 0
        %4038 = vmatpush1.bf16.msra.mxu0 %v3071
        %4039 = vmatprep.subr.bf16.mxu0 0
        %4040 = vmatpush2.bf16.msra.mxu0 %v3086
        %4041 = vmatprep.subr.bf16.mxu0 0
        %4042 = vmatpush2.bf16.msra.mxu0 %v3085
        %4043 = vmatprep.subr.bf16.mxu0 0
        %4044 = vmatpush2.bf16.msra.mxu0 %v3084
        %4045 = vmatprep.subr.bf16.mxu0 0
        %4046 = vmatpush2.bf16.msra.mxu0 %v3083
        %4047 = vmatprep.subr.bf16.mxu0 0
        %4048 = vmatpush2.bf16.msra.mxu0 %v3082
        %4049 = vmatprep.subr.bf16.mxu0 0
        %4050 = vmatpush2.bf16.msra.mxu0 %v3081
        %4051 = vmatprep.subr.bf16.mxu0 0
        %4052 = vmatpush2.bf16.msra.mxu0 %v3080
        %4053 = vmatprep.subr.bf16.mxu0 0
        %4054 = vmatpush2.bf16.msra.mxu0 %v3079
        %4055 = vmatprep.mubr.bf16.mxu0 %v1131
        %4056 = vmatmul.mubr.bf16.gmra.mxu0 %v1129
        %v4057 = vpop.f32.mrf.mxu0
        %v4058 = vadd.f32 %v4018, %v4057
        %v4059 = vpop.f32.mrf.mxu0
        %v4060 = vpop.f32.mrf.mxu0
        %v4061 = vpop.f32.mrf.mxu0
        %4062 = vdwg.mxu0
        %4063 = vmatprep.subr.bf16.mxu0 0
        %4064 = vmatpush1.bf16.msra.mxu0 %v3094
        %4065 = vmatprep.subr.bf16.mxu0 0
        %4066 = vmatpush1.bf16.msra.mxu0 %v3093
        %4067 = vmatprep.subr.bf16.mxu0 0
        %4068 = vmatpush1.bf16.msra.mxu0 %v3092
        %4069 = vmatprep.subr.bf16.mxu0 0
        %4070 = vmatpush1.bf16.msra.mxu0 %v3091
        %4071 = vmatprep.subr.bf16.mxu0 0
        %4072 = vmatpush1.bf16.msra.mxu0 %v3090
        %4073 = vmatprep.subr.bf16.mxu0 0
        %4074 = vmatpush1.bf16.msra.mxu0 %v3089
        %4075 = vmatprep.subr.bf16.mxu0 0
        %4076 = vmatpush1.bf16.msra.mxu0 %v3088
        %4077 = vmatprep.subr.bf16.mxu0 0
        %4078 = vmatpush1.bf16.msra.mxu0 %v3087
        %4079 = vmatprep.subr.bf16.mxu0 0
        %4080 = vmatpush2.bf16.msra.mxu0 %v3102
        %4081 = vmatprep.subr.bf16.mxu0 0
        %4082 = vmatpush2.bf16.msra.mxu0 %v3101
        %4083 = vmatprep.subr.bf16.mxu0 0
        %4084 = vmatpush2.bf16.msra.mxu0 %v3100
        %4085 = vmatprep.subr.bf16.mxu0 0
        %4086 = vmatpush2.bf16.msra.mxu0 %v3099
        %4087 = vmatprep.subr.bf16.mxu0 0
        %4088 = vmatpush2.bf16.msra.mxu0 %v3098
        %4089 = vmatprep.subr.bf16.mxu0 0
        %4090 = vmatpush2.bf16.msra.mxu0 %v3097
        %4091 = vmatprep.subr.bf16.mxu0 0
        %4092 = vmatpush2.bf16.msra.mxu0 %v3096
        %4093 = vmatprep.subr.bf16.mxu0 0
        %4094 = vmatpush2.bf16.msra.mxu0 %v3095
        %4095 = vmatprep.mubr.bf16.mxu0 %v1169
        %4096 = vmatmul.mubr.bf16.gmra.mxu0 %v1155
        %v4097 = vpop.f32.mrf.mxu0
        %v4098 = vadd.f32 %v4058, %v4097
        %v4099 = vpop.f32.mrf.mxu0
        %v4100 = vpop.f32.mrf.mxu0
        %v4101 = vpop.f32.mrf.mxu0
        %4102 = vdwg.mxu0
        %4103 = vmatprep.subr.bf16.mxu0 0
        %4104 = vmatpush1.bf16.msra.mxu0 %v3110
        %4105 = vmatprep.subr.bf16.mxu0 0
        %4106 = vmatpush1.bf16.msra.mxu0 %v3109
        %4107 = vmatprep.subr.bf16.mxu0 0
        %4108 = vmatpush1.bf16.msra.mxu0 %v3108
        %4109 = vmatprep.subr.bf16.mxu0 0
        %4110 = vmatpush1.bf16.msra.mxu0 %v3107
        %4111 = vmatprep.subr.bf16.mxu0 0
        %4112 = vmatpush1.bf16.msra.mxu0 %v3106
        %4113 = vmatprep.subr.bf16.mxu0 0
        %4114 = vmatpush1.bf16.msra.mxu0 %v3105
        %4115 = vmatprep.subr.bf16.mxu0 0
        %4116 = vmatpush1.bf16.msra.mxu0 %v3104
        %4117 = vmatprep.subr.bf16.mxu0 0
        %4118 = vmatpush1.bf16.msra.mxu0 %v3103
        %4119 = vmatprep.subr.bf16.mxu0 0
        %4120 = vmatpush2.bf16.msra.mxu0 %v3118
        %4121 = vmatprep.subr.bf16.mxu0 0
        %4122 = vmatpush2.bf16.msra.mxu0 %v3117
        %4123 = vmatprep.subr.bf16.mxu0 0
        %4124 = vmatpush2.bf16.msra.mxu0 %v3116
        %4125 = vmatprep.subr.bf16.mxu0 0
        %4126 = vmatpush2.bf16.msra.mxu0 %v3115
        %4127 = vmatprep.subr.bf16.mxu0 0
        %4128 = vmatpush2.bf16.msra.mxu0 %v3114
        %4129 = vmatprep.subr.bf16.mxu0 0
        %4130 = vmatpush2.bf16.msra.mxu0 %v3113
        %4131 = vmatprep.subr.bf16.mxu0 0
        %4132 = vmatpush2.bf16.msra.mxu0 %v3112
        %4133 = vmatprep.subr.bf16.mxu0 0
        %4134 = vmatpush2.bf16.msra.mxu0 %v3111
        %4135 = vmatprep.mubr.bf16.mxu0 %v1179
        %4136 = vmatmul.mubr.bf16.gmra.mxu0 %v1177
        %v4137 = vpop.f32.mrf.mxu0
        %v4138 = vadd.f32 %v4098, %v4137
        %v4139 = vpop.f32.mrf.mxu0
        %v4140 = vpop.f32.mrf.mxu0
        %v4141 = vpop.f32.mrf.mxu0
        %4142 = vdwg.mxu0
        %4143 = vmatprep.subr.bf16.mxu0 0
        %4144 = vmatpush1.bf16.msra.mxu0 %v3126
        %4145 = vmatprep.subr.bf16.mxu0 0
        %4146 = vmatpush1.bf16.msra.mxu0 %v3125
        %4147 = vmatprep.subr.bf16.mxu0 0
        %4148 = vmatpush1.bf16.msra.mxu0 %v3124
        %4149 = vmatprep.subr.bf16.mxu0 0
        %4150 = vmatpush1.bf16.msra.mxu0 %v3123
        %4151 = vmatprep.subr.bf16.mxu0 0
        %4152 = vmatpush1.bf16.msra.mxu0 %v3122
        %4153 = vmatprep.subr.bf16.mxu0 0
        %4154 = vmatpush1.bf16.msra.mxu0 %v3121
        %4155 = vmatprep.subr.bf16.mxu0 0
        %4156 = vmatpush1.bf16.msra.mxu0 %v3120
        %4157 = vmatprep.subr.bf16.mxu0 0
        %4158 = vmatpush1.bf16.msra.mxu0 %v3119
        %4159 = vmatprep.subr.bf16.mxu0 0
        %4160 = vmatpush2.bf16.msra.mxu0 %v3134
        %4161 = vmatprep.subr.bf16.mxu0 0
        %4162 = vmatpush2.bf16.msra.mxu0 %v3133
        %4163 = vmatprep.subr.bf16.mxu0 0
        %4164 = vmatpush2.bf16.msra.mxu0 %v3132
        %4165 = vmatprep.subr.bf16.mxu0 0
        %4166 = vmatpush2.bf16.msra.mxu0 %v3131
        %4167 = vmatprep.subr.bf16.mxu0 0
        %4168 = vmatpush2.bf16.msra.mxu0 %v3130
        %4169 = vmatprep.subr.bf16.mxu0 0
        %4170 = vmatpush2.bf16.msra.mxu0 %v3129
        %4171 = vmatprep.subr.bf16.mxu0 0
        %4172 = vmatpush2.bf16.msra.mxu0 %v3128
        %4173 = vmatprep.subr.bf16.mxu0 0
        %4174 = vmatpush2.bf16.msra.mxu0 %v3127
        %4175 = vmatprep.mubr.bf16.mxu0 %v1176
        %4176 = vmatmul.mubr.bf16.gmra.mxu0 %v1162
        %v4177 = vpop.f32.mrf.mxu0
        %v4178 = vadd.f32 %v4138, %v4177
        %v4179 = vpop.f32.mrf.mxu0
        %v4180 = vpop.f32.mrf.mxu0
        %v4181 = vpop.f32.mrf.mxu0
        %4182 = vdwg.mxu0
        %4183 = vmatprep.subr.bf16.mxu0 0
        %4184 = vmatpush1.bf16.msra.mxu0 %v3142
        %4185 = vmatprep.subr.bf16.mxu0 0
        %4186 = vmatpush1.bf16.msra.mxu0 %v3141
        %4187 = vmatprep.subr.bf16.mxu0 0
        %4188 = vmatpush1.bf16.msra.mxu0 %v3140
        %4189 = vmatprep.subr.bf16.mxu0 0
        %4190 = vmatpush1.bf16.msra.mxu0 %v3139
        %4191 = vmatprep.subr.bf16.mxu0 0
        %4192 = vmatpush1.bf16.msra.mxu0 %v3138
        %4193 = vmatprep.subr.bf16.mxu0 0
        %4194 = vmatpush1.bf16.msra.mxu0 %v3137
        %4195 = vmatprep.subr.bf16.mxu0 0
        %4196 = vmatpush1.bf16.msra.mxu0 %v3136
        %4197 = vmatprep.subr.bf16.mxu0 0
        %4198 = vmatpush1.bf16.msra.mxu0 %v3135
        %4199 = vmatprep.subr.bf16.mxu0 0
        %4200 = vmatpush2.bf16.msra.mxu0 %v3150
        %4201 = vmatprep.subr.bf16.mxu0 0
        %4202 = vmatpush2.bf16.msra.mxu0 %v3149
        %4203 = vmatprep.subr.bf16.mxu0 0
        %4204 = vmatpush2.bf16.msra.mxu0 %v3148
        %4205 = vmatprep.subr.bf16.mxu0 0
        %4206 = vmatpush2.bf16.msra.mxu0 %v3147
        %4207 = vmatprep.subr.bf16.mxu0 0
        %4208 = vmatpush2.bf16.msra.mxu0 %v3146
        %4209 = vmatprep.subr.bf16.mxu0 0
        %4210 = vmatpush2.bf16.msra.mxu0 %v3145
        %4211 = vmatprep.subr.bf16.mxu0 0
        %4212 = vmatpush2.bf16.msra.mxu0 %v3144
        %4213 = vmatprep.subr.bf16.mxu0 0
        %4214 = vmatpush2.bf16.msra.mxu0 %v3143
        %4215 = vmatprep.mubr.bf16.mxu0 %v1180
        %4216 = vmatmul.mubr.bf16.gmra.mxu0 %v1178
        %v4217 = vpop.f32.mrf.mxu0
        %v4218 = vadd.f32 %v4178, %v4217
        %v4219 = vpop.f32.mrf.mxu0
        %v4220 = vpop.f32.mrf.mxu0
        %v4221 = vpop.f32.mrf.mxu0
        %4222 = vdwg.mxu0
        %4223 = vmatprep.subr.bf16.mxu0 0
        %4224 = vmatpush1.bf16.msra.mxu0 %v3158
        %4225 = vmatprep.subr.bf16.mxu0 0
        %4226 = vmatpush1.bf16.msra.mxu0 %v3157
        %4227 = vmatprep.subr.bf16.mxu0 0
        %4228 = vmatpush1.bf16.msra.mxu0 %v3156
        %4229 = vmatprep.subr.bf16.mxu0 0
        %4230 = vmatpush1.bf16.msra.mxu0 %v3155
        %4231 = vmatprep.subr.bf16.mxu0 0
        %4232 = vmatpush1.bf16.msra.mxu0 %v3154
        %4233 = vmatprep.subr.bf16.mxu0 0
        %4234 = vmatpush1.bf16.msra.mxu0 %v3153
        %4235 = vmatprep.subr.bf16.mxu0 0
        %4236 = vmatpush1.bf16.msra.mxu0 %v3152
        %4237 = vmatprep.subr.bf16.mxu0 0
        %4238 = vmatpush1.bf16.msra.mxu0 %v3151
        %4239 = vmatprep.subr.bf16.mxu0 0
        %4240 = vmatpush2.bf16.msra.mxu0 %v3166
        %4241 = vmatprep.subr.bf16.mxu0 0
        %4242 = vmatpush2.bf16.msra.mxu0 %v3165
        %4243 = vmatprep.subr.bf16.mxu0 0
        %4244 = vmatpush2.bf16.msra.mxu0 %v3164
        %4245 = vmatprep.subr.bf16.mxu0 0
        %4246 = vmatpush2.bf16.msra.mxu0 %v3163
        %4247 = vmatprep.subr.bf16.mxu0 0
        %4248 = vmatpush2.bf16.msra.mxu0 %v3162
        %4249 = vmatprep.subr.bf16.mxu0 0
        %4250 = vmatpush2.bf16.msra.mxu0 %v3161
        %4251 = vmatprep.subr.bf16.mxu0 0
        %4252 = vmatpush2.bf16.msra.mxu0 %v3160
        %4253 = vmatprep.subr.bf16.mxu0 0
        %4254 = vmatpush2.bf16.msra.mxu0 %v3159
        %4255 = vmatprep.mubr.bf16.mxu0 %v1218
        %4256 = vmatmul.mubr.bf16.gmra.mxu0 %v1204
        %v4257 = vpop.f32.mrf.mxu0
        %v4258 = vadd.f32 %v4218, %v4257
        %v4259 = vpop.f32.mrf.mxu0
        %v4260 = vpop.f32.mrf.mxu0
        %v4261 = vpop.f32.mrf.mxu0
        %4262 = vdwg.mxu0
        %4263 = vmatprep.subr.bf16.mxu0 0
        %4264 = vmatpush1.bf16.msra.mxu0 %v3174
        %4265 = vmatprep.subr.bf16.mxu0 0
        %4266 = vmatpush1.bf16.msra.mxu0 %v3173
        %4267 = vmatprep.subr.bf16.mxu0 0
        %4268 = vmatpush1.bf16.msra.mxu0 %v3172
        %4269 = vmatprep.subr.bf16.mxu0 0
        %4270 = vmatpush1.bf16.msra.mxu0 %v3171
        %4271 = vmatprep.subr.bf16.mxu0 0
        %4272 = vmatpush1.bf16.msra.mxu0 %v3170
        %4273 = vmatprep.subr.bf16.mxu0 0
        %4274 = vmatpush1.bf16.msra.mxu0 %v3169
        %4275 = vmatprep.subr.bf16.mxu0 0
        %4276 = vmatpush1.bf16.msra.mxu0 %v3168
        %4277 = vmatprep.subr.bf16.mxu0 0
        %4278 = vmatpush1.bf16.msra.mxu0 %v3167
        %4279 = vmatprep.subr.bf16.mxu0 0
        %4280 = vmatpush2.bf16.msra.mxu0 %v3182
        %4281 = vmatprep.subr.bf16.mxu0 0
        %4282 = vmatpush2.bf16.msra.mxu0 %v3181
        %4283 = vmatprep.subr.bf16.mxu0 0
        %4284 = vmatpush2.bf16.msra.mxu0 %v3180
        %4285 = vmatprep.subr.bf16.mxu0 0
        %4286 = vmatpush2.bf16.msra.mxu0 %v3179
        %4287 = vmatprep.subr.bf16.mxu0 0
        %4288 = vmatpush2.bf16.msra.mxu0 %v3178
        %4289 = vmatprep.subr.bf16.mxu0 0
        %4290 = vmatpush2.bf16.msra.mxu0 %v3177
        %4291 = vmatprep.subr.bf16.mxu0 0
        %4292 = vmatpush2.bf16.msra.mxu0 %v3176
        %4293 = vmatprep.subr.bf16.mxu0 0
        %4294 = vmatpush2.bf16.msra.mxu0 %v3175
        %4295 = vmatprep.mubr.bf16.mxu0 %v1228
        %4296 = vmatmul.mubr.bf16.gmra.mxu0 %v1226
        %v4297 = vpop.f32.mrf.mxu0
        %v4298 = vadd.f32 %v4258, %v4297
        %v4299 = vpop.f32.mrf.mxu0
        %v4300 = vpop.f32.mrf.mxu0
        %v4301 = vpop.f32.mrf.mxu0
        %4302 = vdwg.mxu0
        %4303 = vmatprep.subr.bf16.mxu0 0
        %4304 = vmatpush1.bf16.msra.mxu0 %v3190
        %4305 = vmatprep.subr.bf16.mxu0 0
        %4306 = vmatpush1.bf16.msra.mxu0 %v3189
        %4307 = vmatprep.subr.bf16.mxu0 0
        %4308 = vmatpush1.bf16.msra.mxu0 %v3188
        %4309 = vmatprep.subr.bf16.mxu0 0
        %4310 = vmatpush1.bf16.msra.mxu0 %v3187
        %4311 = vmatprep.subr.bf16.mxu0 0
        %4312 = vmatpush1.bf16.msra.mxu0 %v3186
        %4313 = vmatprep.subr.bf16.mxu0 0
        %4314 = vmatpush1.bf16.msra.mxu0 %v3185
        %4315 = vmatprep.subr.bf16.mxu0 0
        %4316 = vmatpush1.bf16.msra.mxu0 %v3184
        %4317 = vmatprep.subr.bf16.mxu0 0
        %4318 = vmatpush1.bf16.msra.mxu0 %v3183
        %4319 = vmatprep.subr.bf16.mxu0 0
        %4320 = vmatpush2.bf16.msra.mxu0 %v3198
        %4321 = vmatprep.subr.bf16.mxu0 0
        %4322 = vmatpush2.bf16.msra.mxu0 %v3197
        %4323 = vmatprep.subr.bf16.mxu0 0
        %4324 = vmatpush2.bf16.msra.mxu0 %v3196
        %4325 = vmatprep.subr.bf16.mxu0 0
        %4326 = vmatpush2.bf16.msra.mxu0 %v3195
        %4327 = vmatprep.subr.bf16.mxu0 0
        %4328 = vmatpush2.bf16.msra.mxu0 %v3194
        %4329 = vmatprep.subr.bf16.mxu0 0
        %4330 = vmatpush2.bf16.msra.mxu0 %v3193
        %4331 = vmatprep.subr.bf16.mxu0 0
        %4332 = vmatpush2.bf16.msra.mxu0 %v3192
        %4333 = vmatprep.subr.bf16.mxu0 0
        %4334 = vmatpush2.bf16.msra.mxu0 %v3191
        %4335 = vmatprep.mubr.bf16.mxu0 %v1225
        %4336 = vmatmul.mubr.bf16.gmra.mxu0 %v1211
        %v4337 = vpop.f32.mrf.mxu0
        %v4338 = vadd.f32 %v4298, %v4337
        %v4339 = vpop.f32.mrf.mxu0
        %v4340 = vpop.f32.mrf.mxu0
        %v4341 = vpop.f32.mrf.mxu0
        %4342 = vdwg.mxu0
        %4343 = vmatprep.subr.bf16.mxu0 0
        %4344 = vmatpush1.bf16.msra.mxu0 %v3206
        %4345 = vmatprep.subr.bf16.mxu0 0
        %4346 = vmatpush1.bf16.msra.mxu0 %v3205
        %4347 = vmatprep.subr.bf16.mxu0 0
        %4348 = vmatpush1.bf16.msra.mxu0 %v3204
        %4349 = vmatprep.subr.bf16.mxu0 0
        %4350 = vmatpush1.bf16.msra.mxu0 %v3203
        %4351 = vmatprep.subr.bf16.mxu0 0
        %4352 = vmatpush1.bf16.msra.mxu0 %v3202
        %4353 = vmatprep.subr.bf16.mxu0 0
        %4354 = vmatpush1.bf16.msra.mxu0 %v3201
        %4355 = vmatprep.subr.bf16.mxu0 0
        %4356 = vmatpush1.bf16.msra.mxu0 %v3200
        %4357 = vmatprep.subr.bf16.mxu0 0
        %4358 = vmatpush1.bf16.msra.mxu0 %v3199
        %4359 = vmatprep.subr.bf16.mxu0 0
        %4360 = vmatpush2.bf16.msra.mxu0 %v3214
        %4361 = vmatprep.subr.bf16.mxu0 0
        %4362 = vmatpush2.bf16.msra.mxu0 %v3213
        %4363 = vmatprep.subr.bf16.mxu0 0
        %4364 = vmatpush2.bf16.msra.mxu0 %v3212
        %4365 = vmatprep.subr.bf16.mxu0 0
        %4366 = vmatpush2.bf16.msra.mxu0 %v3211
        %4367 = vmatprep.subr.bf16.mxu0 0
        %4368 = vmatpush2.bf16.msra.mxu0 %v3210
        %4369 = vmatprep.subr.bf16.mxu0 0
        %4370 = vmatpush2.bf16.msra.mxu0 %v3209
        %4371 = vmatprep.subr.bf16.mxu0 0
        %4372 = vmatpush2.bf16.msra.mxu0 %v3208
        %4373 = vmatprep.subr.bf16.mxu0 0
        %4374 = vmatpush2.bf16.msra.mxu0 %v3207
        %4375 = vmatprep.mubr.bf16.mxu0 %v1229
        %4376 = vmatmul.mubr.bf16.gmra.mxu0 %v1227
        %v4377 = vpop.f32.mrf.mxu0
        %v4378 = vadd.f32 %v4338, %v4377
        %v4379 = vpop.f32.mrf.mxu0
        %v4380 = vpop.f32.mrf.mxu0
        %v4381 = vpop.f32.mrf.mxu0
        %4382 = vdwg.mxu0
        %4383 = vmatprep.subr.bf16.mxu0 0
        %4384 = vmatpush1.bf16.msra.mxu0 %v3222
        %4385 = vmatprep.subr.bf16.mxu0 0
        %4386 = vmatpush1.bf16.msra.mxu0 %v3221
        %4387 = vmatprep.subr.bf16.mxu0 0
        %4388 = vmatpush1.bf16.msra.mxu0 %v3220
        %4389 = vmatprep.subr.bf16.mxu0 0
        %4390 = vmatpush1.bf16.msra.mxu0 %v3219
        %4391 = vmatprep.subr.bf16.mxu0 0
        %4392 = vmatpush1.bf16.msra.mxu0 %v3218
        %4393 = vmatprep.subr.bf16.mxu0 0
        %4394 = vmatpush1.bf16.msra.mxu0 %v3217
        %4395 = vmatprep.subr.bf16.mxu0 0
        %4396 = vmatpush1.bf16.msra.mxu0 %v3216
        %4397 = vmatprep.subr.bf16.mxu0 0
        %4398 = vmatpush1.bf16.msra.mxu0 %v3215
        %4399 = vmatprep.subr.bf16.mxu0 0
        %4400 = vmatpush2.bf16.msra.mxu0 %v3230
        %4401 = vmatprep.subr.bf16.mxu0 0
        %4402 = vmatpush2.bf16.msra.mxu0 %v3229
        %4403 = vmatprep.subr.bf16.mxu0 0
        %4404 = vmatpush2.bf16.msra.mxu0 %v3228
        %4405 = vmatprep.subr.bf16.mxu0 0
        %4406 = vmatpush2.bf16.msra.mxu0 %v3227
        %4407 = vmatprep.subr.bf16.mxu0 0
        %4408 = vmatpush2.bf16.msra.mxu0 %v3226
        %4409 = vmatprep.subr.bf16.mxu0 0
        %4410 = vmatpush2.bf16.msra.mxu0 %v3225
        %4411 = vmatprep.subr.bf16.mxu0 0
        %4412 = vmatpush2.bf16.msra.mxu0 %v3224
        %4413 = vmatprep.subr.bf16.mxu0 0
        %4414 = vmatpush2.bf16.msra.mxu0 %v3223
        %4415 = vmatprep.mubr.bf16.mxu0 %v1267
        %4416 = vmatmul.mubr.bf16.gmra.mxu0 %v1253
        %v4417 = vpop.f32.mrf.mxu0
        %v4418 = vadd.f32 %v4378, %v4417
        %v4419 = vpop.f32.mrf.mxu0
        %v4420 = vpop.f32.mrf.mxu0
        %v4421 = vpop.f32.mrf.mxu0
        %4422 = vdwg.mxu0
        %4423 = vmatprep.subr.bf16.mxu0 0
        %4424 = vmatpush1.bf16.msra.mxu0 %v3238
        %4425 = vmatprep.subr.bf16.mxu0 0
        %4426 = vmatpush1.bf16.msra.mxu0 %v3237
        %4427 = vmatprep.subr.bf16.mxu0 0
        %4428 = vmatpush1.bf16.msra.mxu0 %v3236
        %4429 = vmatprep.subr.bf16.mxu0 0
        %4430 = vmatpush1.bf16.msra.mxu0 %v3235
        %4431 = vmatprep.subr.bf16.mxu0 0
        %4432 = vmatpush1.bf16.msra.mxu0 %v3234
        %4433 = vmatprep.subr.bf16.mxu0 0
        %4434 = vmatpush1.bf16.msra.mxu0 %v3233
        %4435 = vmatprep.subr.bf16.mxu0 0
        %4436 = vmatpush1.bf16.msra.mxu0 %v3232
        %4437 = vmatprep.subr.bf16.mxu0 0
        %4438 = vmatpush1.bf16.msra.mxu0 %v3231
        %4439 = vmatprep.subr.bf16.mxu0 0
        %4440 = vmatpush2.bf16.msra.mxu0 %v3246
        %4441 = vmatprep.subr.bf16.mxu0 0
        %4442 = vmatpush2.bf16.msra.mxu0 %v3245
        %4443 = vmatprep.subr.bf16.mxu0 0
        %4444 = vmatpush2.bf16.msra.mxu0 %v3244
        %4445 = vmatprep.subr.bf16.mxu0 0
        %4446 = vmatpush2.bf16.msra.mxu0 %v3243
        %4447 = vmatprep.subr.bf16.mxu0 0
        %4448 = vmatpush2.bf16.msra.mxu0 %v3242
        %4449 = vmatprep.subr.bf16.mxu0 0
        %4450 = vmatpush2.bf16.msra.mxu0 %v3241
        %4451 = vmatprep.subr.bf16.mxu0 0
        %4452 = vmatpush2.bf16.msra.mxu0 %v3240
        %4453 = vmatprep.subr.bf16.mxu0 0
        %4454 = vmatpush2.bf16.msra.mxu0 %v3239
        %4455 = vmatprep.mubr.bf16.mxu0 %v1277
        %4456 = vmatmul.mubr.bf16.gmra.mxu0 %v1275
        %v4457 = vpop.f32.mrf.mxu0
        %v4458 = vadd.f32 %v4418, %v4457
        %v4459 = vpop.f32.mrf.mxu0
        %v4460 = vpop.f32.mrf.mxu0
        %v4461 = vpop.f32.mrf.mxu0
        %4462 = vdwg.mxu0
        %4463 = vmatprep.subr.bf16.mxu0 0
        %4464 = vmatpush1.bf16.msra.mxu0 %v3254
        %4465 = vmatprep.subr.bf16.mxu0 0
        %4466 = vmatpush1.bf16.msra.mxu0 %v3253
        %4467 = vmatprep.subr.bf16.mxu0 0
        %4468 = vmatpush1.bf16.msra.mxu0 %v3252
        %4469 = vmatprep.subr.bf16.mxu0 0
        %4470 = vmatpush1.bf16.msra.mxu0 %v3251
        %4471 = vmatprep.subr.bf16.mxu0 0
        %4472 = vmatpush1.bf16.msra.mxu0 %v3250
        %4473 = vmatprep.subr.bf16.mxu0 0
        %4474 = vmatpush1.bf16.msra.mxu0 %v3249
        %4475 = vmatprep.subr.bf16.mxu0 0
        %4476 = vmatpush1.bf16.msra.mxu0 %v3248
        %4477 = vmatprep.subr.bf16.mxu0 0
        %4478 = vmatpush1.bf16.msra.mxu0 %v3247
        %4479 = vmatprep.subr.bf16.mxu0 0
        %4480 = vmatpush2.bf16.msra.mxu0 %v3262
        %4481 = vmatprep.subr.bf16.mxu0 0
        %4482 = vmatpush2.bf16.msra.mxu0 %v3261
        %4483 = vmatprep.subr.bf16.mxu0 0
        %4484 = vmatpush2.bf16.msra.mxu0 %v3260
        %4485 = vmatprep.subr.bf16.mxu0 0
        %4486 = vmatpush2.bf16.msra.mxu0 %v3259
        %4487 = vmatprep.subr.bf16.mxu0 0
        %4488 = vmatpush2.bf16.msra.mxu0 %v3258
        %4489 = vmatprep.subr.bf16.mxu0 0
        %4490 = vmatpush2.bf16.msra.mxu0 %v3257
        %4491 = vmatprep.subr.bf16.mxu0 0
        %4492 = vmatpush2.bf16.msra.mxu0 %v3256
        %4493 = vmatprep.subr.bf16.mxu0 0
        %4494 = vmatpush2.bf16.msra.mxu0 %v3255
        %4495 = vmatprep.mubr.bf16.mxu0 %v1274
        %4496 = vmatmul.mubr.bf16.gmra.mxu0 %v1260
        %v4497 = vpop.f32.mrf.mxu0
        %v4498 = vadd.f32 %v4458, %v4497
        %v4499 = vpop.f32.mrf.mxu0
        %v4500 = vpop.f32.mrf.mxu0
        %v4501 = vpop.f32.mrf.mxu0
        %4502 = vdwg.mxu0
        %4503 = vmatprep.subr.bf16.mxu0 0
        %4504 = vmatpush1.bf16.msra.mxu0 %v3270
        %4505 = vmatprep.subr.bf16.mxu0 0
        %4506 = vmatpush1.bf16.msra.mxu0 %v3269
        %4507 = vmatprep.subr.bf16.mxu0 0
        %4508 = vmatpush1.bf16.msra.mxu0 %v3268
        %4509 = vmatprep.subr.bf16.mxu0 0
        %4510 = vmatpush1.bf16.msra.mxu0 %v3267
        %4511 = vmatprep.subr.bf16.mxu0 0
        %4512 = vmatpush1.bf16.msra.mxu0 %v3266
        %4513 = vmatprep.subr.bf16.mxu0 0
        %4514 = vmatpush1.bf16.msra.mxu0 %v3265
        %4515 = vmatprep.subr.bf16.mxu0 0
        %4516 = vmatpush1.bf16.msra.mxu0 %v3264
        %4517 = vmatprep.subr.bf16.mxu0 0
        %4518 = vmatpush1.bf16.msra.mxu0 %v3263
        %4519 = vmatprep.subr.bf16.mxu0 0
        %4520 = vmatpush2.bf16.msra.mxu0 %v3278
        %4521 = vmatprep.subr.bf16.mxu0 0
        %4522 = vmatpush2.bf16.msra.mxu0 %v3277
        %4523 = vmatprep.subr.bf16.mxu0 0
        %4524 = vmatpush2.bf16.msra.mxu0 %v3276
        %4525 = vmatprep.subr.bf16.mxu0 0
        %4526 = vmatpush2.bf16.msra.mxu0 %v3275
        %4527 = vmatprep.subr.bf16.mxu0 0
        %4528 = vmatpush2.bf16.msra.mxu0 %v3274
        %4529 = vmatprep.subr.bf16.mxu0 0
        %4530 = vmatpush2.bf16.msra.mxu0 %v3273
        %4531 = vmatprep.subr.bf16.mxu0 0
        %4532 = vmatpush2.bf16.msra.mxu0 %v3272
        %4533 = vmatprep.subr.bf16.mxu0 0
        %4534 = vmatpush2.bf16.msra.mxu0 %v3271
        %4535 = vmatprep.mubr.bf16.mxu0 %v1278
        %4536 = vmatmul.mubr.bf16.gmra.mxu0 %v1276
        %v4537 = vpop.f32.mrf.mxu0
        %v4538 = vadd.f32 %v4498, %v4537
        %v4539 = vpop.f32.mrf.mxu0
        %v4540 = vpop.f32.mrf.mxu0
        %v4541 = vpop.f32.mrf.mxu0
        %4542 = vdwg.mxu0
        %4543 = vmatprep.subr.bf16.mxu0 0
        %4544 = vmatpush1.bf16.msra.mxu0 %v3286
        %4545 = vmatprep.subr.bf16.mxu0 0
        %4546 = vmatpush1.bf16.msra.mxu0 %v3285
        %4547 = vmatprep.subr.bf16.mxu0 0
        %4548 = vmatpush1.bf16.msra.mxu0 %v3284
        %4549 = vmatprep.subr.bf16.mxu0 0
        %4550 = vmatpush1.bf16.msra.mxu0 %v3283
        %4551 = vmatprep.subr.bf16.mxu0 0
        %4552 = vmatpush1.bf16.msra.mxu0 %v3282
        %4553 = vmatprep.subr.bf16.mxu0 0
        %4554 = vmatpush1.bf16.msra.mxu0 %v3281
        %4555 = vmatprep.subr.bf16.mxu0 0
        %4556 = vmatpush1.bf16.msra.mxu0 %v3280
        %4557 = vmatprep.subr.bf16.mxu0 0
        %4558 = vmatpush1.bf16.msra.mxu0 %v3279
        %4559 = vmatprep.subr.bf16.mxu0 0
        %4560 = vmatpush2.bf16.msra.mxu0 %v3294
        %4561 = vmatprep.subr.bf16.mxu0 0
        %4562 = vmatpush2.bf16.msra.mxu0 %v3293
        %4563 = vmatprep.subr.bf16.mxu0 0
        %4564 = vmatpush2.bf16.msra.mxu0 %v3292
        %4565 = vmatprep.subr.bf16.mxu0 0
        %4566 = vmatpush2.bf16.msra.mxu0 %v3291
        %4567 = vmatprep.subr.bf16.mxu0 0
        %4568 = vmatpush2.bf16.msra.mxu0 %v3290
        %4569 = vmatprep.subr.bf16.mxu0 0
        %4570 = vmatpush2.bf16.msra.mxu0 %v3289
        %4571 = vmatprep.subr.bf16.mxu0 0
        %4572 = vmatpush2.bf16.msra.mxu0 %v3288
        %4573 = vmatprep.subr.bf16.mxu0 0
        %4574 = vmatpush2.bf16.msra.mxu0 %v3287
        %4575 = vmatprep.mubr.bf16.mxu0 %v1316
        %4576 = vmatmul.mubr.bf16.gmra.mxu0 %v1302
        %v4577 = vpop.f32.mrf.mxu0
        %v4578 = vadd.f32 %v4538, %v4577
        %v4579 = vpop.f32.mrf.mxu0
        %v4580 = vpop.f32.mrf.mxu0
        %v4581 = vpop.f32.mrf.mxu0
        %4582 = vdwg.mxu0
        %4583 = vmatprep.subr.bf16.mxu0 0
        %4584 = vmatpush1.bf16.msra.mxu0 %v3302
        %4585 = vmatprep.subr.bf16.mxu0 0
        %4586 = vmatpush1.bf16.msra.mxu0 %v3301
        %4587 = vmatprep.subr.bf16.mxu0 0
        %4588 = vmatpush1.bf16.msra.mxu0 %v3300
        %4589 = vmatprep.subr.bf16.mxu0 0
        %4590 = vmatpush1.bf16.msra.mxu0 %v3299
        %4591 = vmatprep.subr.bf16.mxu0 0
        %4592 = vmatpush1.bf16.msra.mxu0 %v3298
        %4593 = vmatprep.subr.bf16.mxu0 0
        %4594 = vmatpush1.bf16.msra.mxu0 %v3297
        %4595 = vmatprep.subr.bf16.mxu0 0
        %4596 = vmatpush1.bf16.msra.mxu0 %v3296
        %4597 = vmatprep.subr.bf16.mxu0 0
        %4598 = vmatpush1.bf16.msra.mxu0 %v3295
        %4599 = vmatprep.subr.bf16.mxu0 0
        %4600 = vmatpush2.bf16.msra.mxu0 %v3310
        %4601 = vmatprep.subr.bf16.mxu0 0
        %4602 = vmatpush2.bf16.msra.mxu0 %v3309
        %4603 = vmatprep.subr.bf16.mxu0 0
        %4604 = vmatpush2.bf16.msra.mxu0 %v3308
        %4605 = vmatprep.subr.bf16.mxu0 0
        %4606 = vmatpush2.bf16.msra.mxu0 %v3307
        %4607 = vmatprep.subr.bf16.mxu0 0
        %4608 = vmatpush2.bf16.msra.mxu0 %v3306
        %4609 = vmatprep.subr.bf16.mxu0 0
        %4610 = vmatpush2.bf16.msra.mxu0 %v3305
        %4611 = vmatprep.subr.bf16.mxu0 0
        %4612 = vmatpush2.bf16.msra.mxu0 %v3304
        %4613 = vmatprep.subr.bf16.mxu0 0
        %4614 = vmatpush2.bf16.msra.mxu0 %v3303
        %4615 = vmatprep.mubr.bf16.mxu0 %v1326
        %4616 = vmatmul.mubr.bf16.gmra.mxu0 %v1324
        %v4617 = vpop.f32.mrf.mxu0
        %v4618 = vadd.f32 %v4578, %v4617
        %v4619 = vpop.f32.mrf.mxu0
        %v4620 = vpop.f32.mrf.mxu0
        %v4621 = vpop.f32.mrf.mxu0
        %4622 = vdwg.mxu0
        %4623 = vmatprep.subr.bf16.mxu0 0
        %4624 = vmatpush1.bf16.msra.mxu0 %v3318
        %4625 = vmatprep.subr.bf16.mxu0 0
        %4626 = vmatpush1.bf16.msra.mxu0 %v3317
        %4627 = vmatprep.subr.bf16.mxu0 0
        %4628 = vmatpush1.bf16.msra.mxu0 %v3316
        %4629 = vmatprep.subr.bf16.mxu0 0
        %4630 = vmatpush1.bf16.msra.mxu0 %v3315
        %4631 = vmatprep.subr.bf16.mxu0 0
        %4632 = vmatpush1.bf16.msra.mxu0 %v3314
        %4633 = vmatprep.subr.bf16.mxu0 0
        %4634 = vmatpush1.bf16.msra.mxu0 %v3313
        %4635 = vmatprep.subr.bf16.mxu0 0
        %4636 = vmatpush1.bf16.msra.mxu0 %v3312
        %4637 = vmatprep.subr.bf16.mxu0 0
        %4638 = vmatpush1.bf16.msra.mxu0 %v3311
        %4639 = vmatprep.subr.bf16.mxu0 0
        %4640 = vmatpush2.bf16.msra.mxu0 %v3326
        %4641 = vmatprep.subr.bf16.mxu0 0
        %4642 = vmatpush2.bf16.msra.mxu0 %v3325
        %4643 = vmatprep.subr.bf16.mxu0 0
        %4644 = vmatpush2.bf16.msra.mxu0 %v3324
        %4645 = vmatprep.subr.bf16.mxu0 0
        %4646 = vmatpush2.bf16.msra.mxu0 %v3323
        %4647 = vmatprep.subr.bf16.mxu0 0
        %4648 = vmatpush2.bf16.msra.mxu0 %v3322
        %4649 = vmatprep.subr.bf16.mxu0 0
        %4650 = vmatpush2.bf16.msra.mxu0 %v3321
        %4651 = vmatprep.subr.bf16.mxu0 0
        %4652 = vmatpush2.bf16.msra.mxu0 %v3320
        %4653 = vmatprep.subr.bf16.mxu0 0
        %4654 = vmatpush2.bf16.msra.mxu0 %v3319
        %4655 = vmatprep.mubr.bf16.mxu0 %v1323
        %4656 = vmatmul.mubr.bf16.gmra.mxu0 %v1309
        %v4657 = vpop.f32.mrf.mxu0
        %v4658 = vadd.f32 %v4618, %v4657
        %v4659 = vpop.f32.mrf.mxu0
        %v4660 = vpop.f32.mrf.mxu0
        %v4661 = vpop.f32.mrf.mxu0
        %4662 = vdwg.mxu0
        %4663 = vmatprep.subr.bf16.mxu0 0
        %4664 = vmatpush1.bf16.msra.mxu0 %v3334
        %4665 = vmatprep.subr.bf16.mxu0 0
        %4666 = vmatpush1.bf16.msra.mxu0 %v3333
        %4667 = vmatprep.subr.bf16.mxu0 0
        %4668 = vmatpush1.bf16.msra.mxu0 %v3332
        %4669 = vmatprep.subr.bf16.mxu0 0
        %4670 = vmatpush1.bf16.msra.mxu0 %v3331
        %4671 = vmatprep.subr.bf16.mxu0 0
        %4672 = vmatpush1.bf16.msra.mxu0 %v3330
        %4673 = vmatprep.subr.bf16.mxu0 0
        %4674 = vmatpush1.bf16.msra.mxu0 %v3329
        %4675 = vmatprep.subr.bf16.mxu0 0
        %4676 = vmatpush1.bf16.msra.mxu0 %v3328
        %4677 = vmatprep.subr.bf16.mxu0 0
        %4678 = vmatpush1.bf16.msra.mxu0 %v3327
        %4679 = vmatprep.subr.bf16.mxu0 0
        %4680 = vmatpush2.bf16.msra.mxu0 %v3342
        %4681 = vmatprep.subr.bf16.mxu0 0
        %4682 = vmatpush2.bf16.msra.mxu0 %v3341
        %4683 = vmatprep.subr.bf16.mxu0 0
        %4684 = vmatpush2.bf16.msra.mxu0 %v3340
        %4685 = vmatprep.subr.bf16.mxu0 0
        %4686 = vmatpush2.bf16.msra.mxu0 %v3339
        %4687 = vmatprep.subr.bf16.mxu0 0
        %4688 = vmatpush2.bf16.msra.mxu0 %v3338
        %4689 = vmatprep.subr.bf16.mxu0 0
        %4690 = vmatpush2.bf16.msra.mxu0 %v3337
        %4691 = vmatprep.subr.bf16.mxu0 0
        %4692 = vmatpush2.bf16.msra.mxu0 %v3336
        %4693 = vmatprep.subr.bf16.mxu0 0
        %4694 = vmatpush2.bf16.msra.mxu0 %v3335
        %4695 = vmatprep.mubr.bf16.mxu0 %v1327
        %4696 = vmatmul.mubr.bf16.gmra.mxu0 %v1325
        %v4697 = vpop.f32.mrf.mxu0
        %v4698 = vadd.f32 %v4658, %v4697
        %v4699 = vpop.f32.mrf.mxu0
        %v4700 = vpop.f32.mrf.mxu0
        %v4701 = vpop.f32.mrf.mxu0
        %4702 = vdwg.mxu0
        %4703 = vmatprep.subr.bf16.mxu0 0
        %4704 = vmatpush1.bf16.msra.mxu0 %v3350
        %4705 = vmatprep.subr.bf16.mxu0 0
        %4706 = vmatpush1.bf16.msra.mxu0 %v3349
        %4707 = vmatprep.subr.bf16.mxu0 0
        %4708 = vmatpush1.bf16.msra.mxu0 %v3348
        %4709 = vmatprep.subr.bf16.mxu0 0
        %4710 = vmatpush1.bf16.msra.mxu0 %v3347
        %4711 = vmatprep.subr.bf16.mxu0 0
        %4712 = vmatpush1.bf16.msra.mxu0 %v3346
        %4713 = vmatprep.subr.bf16.mxu0 0
        %4714 = vmatpush1.bf16.msra.mxu0 %v3345
        %4715 = vmatprep.subr.bf16.mxu0 0
        %4716 = vmatpush1.bf16.msra.mxu0 %v3344
        %4717 = vmatprep.subr.bf16.mxu0 0
        %4718 = vmatpush1.bf16.msra.mxu0 %v3343
        %4719 = vmatprep.subr.bf16.mxu0 0
        %4720 = vmatpush2.bf16.msra.mxu0 0
        %4721 = vmatprep.subr.bf16.mxu0 0
        %4722 = vmatpush2.bf16.msra.mxu0 0
        %4723 = vmatprep.subr.bf16.mxu0 0
        %4724 = vmatpush2.bf16.msra.mxu0 0
        %4725 = vmatprep.subr.bf16.mxu0 0
        %4726 = vmatpush2.bf16.msra.mxu0 0
        %4727 = vmatprep.subr.bf16.mxu0 0
        %4728 = vmatpush2.bf16.msra.mxu0 0
        %4729 = vmatprep.subr.bf16.mxu0 0
        %4730 = vmatpush2.bf16.msra.mxu0 0
        %4731 = vmatprep.subr.bf16.mxu0 0
        %4732 = vmatpush2.bf16.msra.mxu0 0
        %4733 = vmatprep.subr.bf16.mxu0 0
        %4734 = vmatpush2.bf16.msra.mxu0 0
        %4735 = vmatprep.mubr.bf16.mxu0 0
        %4736 = vmatmul.mubr.bf16.gmra.mxu0 %v1341
        %v4737 = vpop.f32.mrf.mxu0
        %v4738 = vadd.f32 %v4698, %v4737
        %v4739 = vpop.f32.mrf.mxu0
        %v4740 = vpop.f32.mrf.mxu0
        %v4741 = vpop.f32.mrf.mxu0
        %4742 = vdwg.mxu0
        %v4743 = vadd.f32 %v1019, %v4738
        %4744 = vst [vmem:[#allocation2] sm:$0x3] %v4743
        %p4745 = scmp.eq.s32.totalorder %s24, 1
        // Predicated region
        $region49: #{tpu_custom_call.1} parent=31 // pred_check
          %p4746 = pneg %p4745
        $region50: #{tpu_custom_call.1} parent=31 // pred_check_branch
          %4748 = sbr.rel (%p4746) target = $region52
        $region51: #{tpu_custom_call.1} parent=31 // pred_region
          %v4749 = vld [vmem:[#allocation2] sm:$0x3]
          %v4750 = vmul.f32 %v4749, 0.020408163
          %v4751 = vld [vmem:[#allocation8] sm:$0x1]
          %v4753 = vlaneseq
          %v4754 = vshrl.u32 %v4753, 7
          %v4755 = vsub.s32 0, %v4754
          %v4756 = vrot.slane %v4751, %v4755
          %v4758 = vadd.f32 %v4750, %v4756
          %v4759 = vmul.f32 %v4758, %v4758
          %vm4760 = vcmask 1041408
          %v4761 = vsel %vm4760, %v4759, 0.0
          %4762 = vadd.xlane.f32.xlu0 %v4761
          %v4763 = vpop.xlane.xlu0 %4762
          %v4764 = vmax.f32 %v4763, 1e-24
          %v4765 = vrsqrt.pop %v4764
          %v4766 = vmul.f32 %v4758, %v4765
          %4767 = vst [vmem:[#allocation9] sm:$0x3] %v4766
        $region52: #{tpu_custom_call.1} parent=31 // pred_fallthru
          _
        // Predicated region
        $region53: #{tpu_custom_call.1} parent=31 // pred_check
          %p4768 = pneg %p119
        $region54: #{tpu_custom_call.1} parent=31 // pred_check_branch
          %4770 = sbr.rel (%p4768) target = $region56
        $region55: #{tpu_custom_call.1} parent=31 // pred_region
          %s4772 = ssub.s32 32, 32
          %4773 = vsyncadd [#allocation5], %s4772
          %s4774 = smul.addr %s23, 32
          %s4775 = scalar_lea.hbm %s3, %s4774
          %s4777 = sshll.u32 [#allocation9], 4
          %s4778 = int_to_ptr.vmem [resolvable:$true] %s4777
          %4780 = dma.vmem_to_hbm [thread:$0]  %s4778, 32, %s4775, [#allocation5]
        $region56: #{tpu_custom_call.1} parent=31 // pred_fallthru
          _
        // Predicated region
        $region57: #{tpu_custom_call.1} parent=31 // pred_check
          %p4781 = pneg %p119
        $region58: #{tpu_custom_call.1} parent=31 // pred_check_branch
          %4783 = sbr.rel (%p4781) target = $region60
        $region59: #{tpu_custom_call.1} parent=31 // pred_region
          %4784 = dma.done [#allocation5], 32
        $region60: #{tpu_custom_call.1} parent=31 // pred_fallthru
          _
      $region32: #{tpu_custom_call.1} parent=5 // pred_fallthru
        _
      %p4785 = scmp.le.s32.totalorder 2, %s14
      // Predicated region
      $region61: #{tpu_custom_call.1} parent=5 // pred_check
        %p4786 = pneg %p4785
      $region62: #{tpu_custom_call.1} parent=5 // pred_check_branch
        %4788 = sbr.rel (%p4786) target = $region64
      $region63: #{tpu_custom_call.1} parent=5 // pred_region
        %s4789 = ssub.s32 %s14, 2
      $region64: #{tpu_custom_call.1} parent=5 // pred_fallthru
        _
    $region6: #{tpu_custom_call.1} parent=1 // loop_footer
      %s18 = sadd.s32 1, %s14
    $region7: #{tpu_custom_call.1} parent=1 // loop_footer_branch
      %13 = sbr.rel target = $region3
    $region8: #{tpu_custom_call.1} parent=1 // loop_exit
      _
    %4790 = vsyncpa [#allocation4], 1
    %s4791 = scalar_lea.sflag [#allocation4], 1
    %4792 = vsyncpa %s4791, 1
    %4793 = vsyncpa [#allocation7], 1
    %4794 = vsyncpa [#allocation5], 1
    %s4795 = scalar_lea.sflag [#allocation5], 1
    %4796 = vsyncpa %s4795, 1

</llo_original>
